<compile_context>
chip_gen: v7x
topology: tpu7x:2x2x1
jax: 0.10.0
libtpu: 0.0.40
codegen_flags: <defaults>
</compile_context>

<pallas_src>
import jax
import jax.numpy as jnp
from jax import lax
from jax.experimental import pallas as pl
from jax.experimental.pallas import tpu as pltpu


def _seq_tile(seq_len, target):
    """Largest tile <= target that divides seq_len and is sublane-aligned."""
    if seq_len <= target:
        return seq_len
    for t in range(target, 7, -1):
        if seq_len % t == 0 and t % 8 == 0:
            return t
    return seq_len


def gau_forward(x, params, *, seq_tile=256, vmem_limit_bytes=48 * 1024 * 1024):
    """x: (B, S, D) float32. params: tuple of weights (see init_params)."""
    B, S, D = x.shape
    ln_w, ln_b, w_hid, b_hid, w_qk, b_qk, gamma, beta, w_out, b_out = params
    H2 = w_hid.shape[1]
    H = H2 // 2
    Dq = w_qk.shape[1]

    # Cast matmul weights to bf16 ONCE, outside the kernels (MXU operands).
    w_hid_bf = w_hid.astype(jnp.bfloat16)
    w_qk_bf = w_qk.astype(jnp.bfloat16)
    w_out_bf = w_out.astype(jnp.bfloat16)

    TS = _seq_tile(S, seq_tile)
    n_s = S // TS
    inv_s = 1.0 / float(S)

    # ---------------- kernel 1: LayerNorm + projections (per query/kv tile) ----
    def proj_kernel(x_ref, ln_w_ref, ln_b_ref, w_hid_ref, b_hid_ref,
                    w_qk_ref, b_qk_ref, gamma_ref, beta_ref,
                    q_ref, k_ref, v_ref, gate_ref):
        xt = x_ref[0].astype(jnp.float32)                     # (TS, D)

        # LayerNorm(dim), eps = 1e-5 (PyTorch default), biased variance.
        mean = jnp.mean(xt, axis=-1, keepdims=True)
        xc = xt - mean
        var = jnp.mean(xc * xc, axis=-1, keepdims=True)
        xn = xc * lax.rsqrt(var + 1e-5)
        xn = xn * ln_w_ref[0] + ln_b_ref[0]
        xn_bf = xn.astype(jnp.bfloat16)                       # bf16 MXU operand

        # to_hidden: Linear(D -> 2H) + SiLU, chunk into v, gate.
        h = jnp.dot(xn_bf, w_hid_ref[...],
                    preferred_element_type=jnp.float32) + b_hid_ref[0]
        h = h * jax.nn.sigmoid(h)                             # SiLU (f32 VPU/EUP)
        v = h[:, :H]
        gate = h[:, H:]

        # to_qk: Linear(D -> Dq) + SiLU, then OffsetScale (heads=2).
        qk = jnp.dot(xn_bf, w_qk_ref[...],
                     preferred_element_type=jnp.float32) + b_qk_ref[0]
        qk = qk * jax.nn.sigmoid(qk)

        q = (qk * gamma_ref[0] + beta_ref[0]) * inv_s         # fold 1/seq_len into q
        k = qk * gamma_ref[1] + beta_ref[1]

        q_ref[0] = q.astype(q_ref.dtype)
        k_ref[0] = k.astype(k_ref.dtype)
        v_ref[0] = v.astype(v_ref.dtype)
        gate_ref[0] = gate.astype(gate_ref.dtype)

    proj_in_specs = [
        pl.BlockSpec((1, TS, D), lambda b, s: (b, s, 0)),     # x
        pl.BlockSpec((1, D), lambda b, s: (0, 0)),            # LN weight
        pl.BlockSpec((1, D), lambda b, s: (0, 0)),            # LN bias
        pl.BlockSpec((D, H2), lambda b, s: (0, 0)),           # to_hidden W (bf16)
        pl.BlockSpec((1, H2), lambda b, s: (0, 0)),           # to_hidden b
        pl.BlockSpec((D, Dq), lambda b, s: (0, 0)),           # to_qk W (bf16)
        pl.BlockSpec((1, Dq), lambda b, s: (0, 0)),           # to_qk b
        pl.BlockSpec((2, Dq), lambda b, s: (0, 0)),           # gamma
        pl.BlockSpec((2, Dq), lambda b, s: (0, 0)),           # beta
    ]
    proj_out_specs = [
        pl.BlockSpec((1, TS, Dq), lambda b, s: (b, s, 0)),    # q
        pl.BlockSpec((1, TS, Dq), lambda b, s: (b, s, 0)),    # k
        pl.BlockSpec((1, TS, H), lambda b, s: (b, s, 0)),     # v
        pl.BlockSpec((1, TS, H), lambda b, s: (b, s, 0)),     # gate
    ]
    proj_out_shapes = (
        jax.ShapeDtypeStruct((B, S, Dq), jnp.bfloat16),
        jax.ShapeDtypeStruct((B, S, Dq), jnp.bfloat16),
        jax.ShapeDtypeStruct((B, S, H), jnp.bfloat16),
        jax.ShapeDtypeStruct((B, S, H), jnp.float32),
    )

    q, k, v, gate = pl.pallas_call(
        proj_kernel,
        out_shape=proj_out_shapes,
        grid_spec=pltpu.PrefetchScalarGridSpec(
            num_scalar_prefetch=0,
            grid=(B, n_s),
            in_specs=proj_in_specs,
            out_specs=proj_out_specs,
        ),
        compiler_params=pltpu.CompilerParams(
            dimension_semantics=("parallel", "parallel"),
            vmem_limit_bytes=vmem_limit_bytes,
        ),
    )(x, ln_w, ln_b, w_hid_bf, b_hid, w_qk_bf, b_qk, gamma, beta)

    # ------- kernel 2: tiled attention + gating + to_out + residual -----------
    def attn_kernel(q_ref, k_ref, v_ref, gate_ref, x_ref, w_out_ref, b_out_ref,
                    o_ref, acc_ref):
        ki = pl.program_id(2)

        @pl.when(ki == 0)
        def _():
            acc_ref[...] = jnp.zeros_like(acc_ref)

        # sim tile: contract over the last dim of q and k (no explicit k.T).
        sim = lax.dot_general(
            q_ref[0], k_ref[0],
            dimension_numbers=(((1,), (1,)), ((), ())),
            preferred_element_type=jnp.float32)               # (TS, TS) f32
        attn = jnp.square(jnp.maximum(sim, 0.0))              # relu(sim)^2; dropout p=0
        acc_ref[...] += jnp.dot(attn.astype(jnp.bfloat16), v_ref[0],
                                preferred_element_type=jnp.float32)

        @pl.when(ki == pl.num_programs(2) - 1)
        def _():
            gated = (acc_ref[...] * gate_ref[0]).astype(jnp.bfloat16)
            out = jnp.dot(gated, w_out_ref[...],
                          preferred_element_type=jnp.float32)  # to_out
            out = out + b_out_ref[0] + x_ref[0]                # bias + residual
            o_ref[0] = out.astype(o_ref.dtype)

    attn_in_specs = [
        pl.BlockSpec((1, TS, Dq), lambda b, qi, ki: (b, qi, 0)),  # q tile
        pl.BlockSpec((1, TS, Dq), lambda b, qi, ki: (b, ki, 0)),  # k tile
        pl.BlockSpec((1, TS, H), lambda b, qi, ki: (b, ki, 0)),   # v tile
        pl.BlockSpec((1, TS, H), lambda b, qi, ki: (b, qi, 0)),   # gate tile
        pl.BlockSpec((1, TS, D), lambda b, qi, ki: (b, qi, 0)),   # x (residual)
        pl.BlockSpec((H, D), lambda b, qi, ki: (0, 0)),           # to_out W (bf16)
        pl.BlockSpec((1, D), lambda b, qi, ki: (0, 0)),           # to_out b
    ]

    out = pl.pallas_call(
        attn_kernel,
        out_shape=jax.ShapeDtypeStruct((B, S, D), x.dtype),
        grid_spec=pltpu.PrefetchScalarGridSpec(
            num_scalar_prefetch=0,
            grid=(B, n_s, n_s),
            in_specs=attn_in_specs,
            out_specs=pl.BlockSpec((1, TS, D), lambda b, qi, ki: (b, qi, 0)),
            scratch_shapes=[pltpu.VMEM((TS, H), jnp.float32)],
        ),
        compiler_params=pltpu.CompilerParams(
            dimension_semantics=("parallel", "parallel", "arbitrary"),
            vmem_limit_bytes=vmem_limit_bytes,
        ),
    )(q, k, v, gate, x, w_out_bf, b_out)

    return out


def init_params(key, dim, qk_dim, hidden_dim):
    """Deterministic synthetic parameters (module __init__ shapes).
    Linear weights are stored transposed as (in, out) so the kernel computes
    y = x @ W + b (== PyTorch x @ W.T + b).  Scales are chosen so the attention
    branch has O(1) magnitude (better numerical test signal than torch's tiny
    default init); forward semantics are unchanged."""
    k1, k2, k3, k4, k5 = jax.random.split(key, 5)
    s_in = 1.0 / (dim ** 0.5)
    s_out = 1.0 / (hidden_dim ** 0.5)
    ln_w = jnp.ones((1, dim), jnp.float32)
    ln_b = jnp.zeros((1, dim), jnp.float32)
    w_hid = s_in * jax.random.normal(k1, (dim, 2 * hidden_dim), jnp.float32)
    b_hid = jnp.zeros((1, 2 * hidden_dim), jnp.float32)
    w_qk = s_in * jax.random.normal(k2, (dim, qk_dim), jnp.float32)
    b_qk = jnp.zeros((1, qk_dim), jnp.float32)
    gamma = 1.0 + 0.02 * jax.random.normal(k3, (2, qk_dim), jnp.float32)
    beta = 0.02 * jax.random.normal(k4, (2, qk_dim), jnp.float32)
    w_out = s_out * jax.random.normal(k5, (hidden_dim, dim), jnp.float32)
    b_out = jnp.zeros((1, dim), jnp.float32)
    return (ln_w, ln_b, w_hid, b_hid, w_qk, b_qk, gamma, beta, w_out, b_out)


def gau_reference(x, params):
    """Pure-JAX f32 reference of the PyTorch forward (for correctness check)."""
    ln_w, ln_b, w_hid, b_hid, w_qk, b_qk, gamma, beta, w_out, b_out = params
    S = x.shape[-2]
    mean = jnp.mean(x, axis=-1, keepdims=True)
    var = jnp.mean((x - mean) ** 2, axis=-1, keepdims=True)
    xn = (x - mean) / jnp.sqrt(var + 1e-5) * ln_w[0] + ln_b[0]
    h = jax.nn.silu(xn @ w_hid + b_hid[0])
    v, gate = jnp.split(h, 2, axis=-1)
    qk = jax.nn.silu(xn @ w_qk + b_qk[0])
    q = qk * gamma[0] + beta[0]
    k = qk * gamma[1] + beta[1]
    sim = jnp.einsum('bid,bjd->bij', q, k) / S
    attn = jnp.maximum(sim, 0.0) ** 2
    out = jnp.einsum('bij,bjd->bid', attn, v) * gate
    out = out @ w_out + b_out[0]
    return out + x


if __name__ == "__main__":
    # Small but lane-aligned shapes (feature dims are multiples of 128; the
    # sequence is tiled 2x2 so the blockwise-accumulation path is exercised).
    B, S, D = 2, 256, 256
    QK = 128                      # query_key_dim
    HID = int(2.0 * D)            # expansion_factor * dim = 512

    key = jax.random.PRNGKey(0)
    kx, kp = jax.random.split(key)
    x = jax.random.normal(kx, (B, S, D), jnp.float32)
    params = init_params(kp, D, QK, HID)

    out = gau_forward(x, params, seq_tile=128)    # 128-tiles -> grid (2, 2, 2)
    out = jax.block_until_ready(out)

    ref = gau_reference(x, params)
    assert out.shape == (B, S, D)
    max_err = float(jnp.max(jnp.abs(out - ref)))
    ref_scale = float(jnp.max(jnp.abs(ref)))
    # bf16 MXU operands with f32 accumulation: tolerance loosened vs pure-f32.
    assert max_err <= 3e-2 * ref_scale + 1e-3, (
        f"mismatch vs reference: max_err={max_err:.3e}, ref_scale={ref_scale:.3e}")

    print("KERNEL_OK")
</pallas_src>

<mosaic_0001>
module attributes {stable_mosaic.version = 11 : i64} {
  func.func @proj_kernel(%arg0: i32, %arg1: i32, %arg2: memref<1x128x256xf32, #tpu.memory_space<vmem>>, %arg3: memref<1x256xf32, #tpu.memory_space<vmem>>, %arg4: memref<1x256xf32, #tpu.memory_space<vmem>>, %arg5: memref<256x1024xbf16, #tpu.memory_space<vmem>>, %arg6: memref<1x1024xf32, #tpu.memory_space<vmem>>, %arg7: memref<256x128xbf16, #tpu.memory_space<vmem>>, %arg8: memref<1x128xf32, #tpu.memory_space<vmem>>, %arg9: memref<2x128xf32, #tpu.memory_space<vmem>>, %arg10: memref<2x128xf32, #tpu.memory_space<vmem>>, %arg11: memref<1x128x128xbf16, #tpu.memory_space<vmem>>, %arg12: memref<1x128x128xbf16, #tpu.memory_space<vmem>>, %arg13: memref<1x128x512xbf16, #tpu.memory_space<vmem>>, %arg14: memref<1x128x512xf32, #tpu.memory_space<vmem>>) attributes {dimension_semantics = [#tpu.dimension_semantics<parallel>, #tpu.dimension_semantics<parallel>], iteration_bounds = array<i64: 2, 2>, scalar_prefetch = 0 : i64, scratch_operands = 0 : i64, tpu.core_type = #tpu.core_type<tc>, window_params = [{transform_indices = @transform_0, window_bounds = array<i64: 1, 128, 256>}, {pipeline_mode = #tpu.pipeline_mode<synchronous>, transform_indices = @transform_1, window_bounds = array<i64: 1, 256>}, {pipeline_mode = #tpu.pipeline_mode<synchronous>, transform_indices = @transform_2, window_bounds = array<i64: 1, 256>}, {pipeline_mode = #tpu.pipeline_mode<synchronous>, transform_indices = @transform_3, window_bounds = array<i64: 256, 1024>}, {pipeline_mode = #tpu.pipeline_mode<synchronous>, transform_indices = @transform_4, window_bounds = array<i64: 1, 1024>}, {pipeline_mode = #tpu.pipeline_mode<synchronous>, transform_indices = @transform_5, window_bounds = array<i64: 256, 128>}, {pipeline_mode = #tpu.pipeline_mode<synchronous>, transform_indices = @transform_6, window_bounds = array<i64: 1, 128>}, {pipeline_mode = #tpu.pipeline_mode<synchronous>, transform_indices = @transform_7, window_bounds = array<i64: 2, 128>}, {pipeline_mode = #tpu.pipeline_mode<synchronous>, transform_indices = @transform_8, window_bounds = array<i64: 2, 128>}, {transform_indices = @transform_9, window_bounds = array<i64: 1, 128, 128>}, {transform_indices = @transform_10, window_bounds = array<i64: 1, 128, 128>}, {transform_indices = @transform_11, window_bounds = array<i64: 1, 128, 512>}, {transform_indices = @transform_12, window_bounds = array<i64: 1, 128, 512>}]} {
    %c0 = arith.constant 0 : index
    %c0_0 = arith.constant 0 : index
    %c0_1 = arith.constant 0 : index
    %0 = vector.load %arg2[%c0, %c0_0, %c0_1] : memref<1x128x256xf32, #tpu.memory_space<vmem>>, vector<1x128x256xf32>
    %1 = vector.shape_cast %0 : vector<1x128x256xf32> to vector<128x256xf32>
    %cst = arith.constant dense<0.000000e+00> : vector<128xf32>
    %2 = vector.multi_reduction <add>, %1, %cst [1] : vector<128x256xf32> to vector<128xf32>
    %3 = vector.shape_cast %2 : vector<128xf32> to vector<128x1xf32>
    %cst_2 = arith.constant 2.560000e+02 : f32
    %4 = vector.broadcast %cst_2 : f32 to vector<128x1xf32>
    %5 = arith.divf %3, %4 : vector<128x1xf32>
    %6 = vector.broadcast %5 : vector<128x1xf32> to vector<128x256xf32>
    %7 = arith.subf %1, %6 : vector<128x256xf32>
    %8 = arith.mulf %7, %7 : vector<128x256xf32>
    %cst_3 = arith.constant dense<0.000000e+00> : vector<128xf32>
    %9 = vector.multi_reduction <add>, %8, %cst_3 [1] : vector<128x256xf32> to vector<128xf32>
    %10 = vector.shape_cast %9 : vector<128xf32> to vector<128x1xf32>
    %cst_4 = arith.constant 2.560000e+02 : f32
    %11 = vector.broadcast %cst_4 : f32 to vector<128x1xf32>
    %12 = arith.divf %10, %11 : vector<128x1xf32>
    %cst_5 = arith.constant 9.99999974E-6 : f32
    %13 = vector.broadcast %cst_5 : f32 to vector<128x1xf32>
    %14 = arith.addf %12, %13 : vector<128x1xf32>
    %15 = math.rsqrt %14 : vector<128x1xf32>
    %16 = vector.broadcast %15 : vector<128x1xf32> to vector<128x256xf32>
    %17 = arith.mulf %7, %16 : vector<128x256xf32>
    %c0_6 = arith.constant 0 : index
    %c0_7 = arith.constant 0 : index
    %18 = vector.load %arg3[%c0_6, %c0_7] : memref<1x256xf32, #tpu.memory_space<vmem>>, vector<1x256xf32>
    %19 = vector.shape_cast %18 : vector<1x256xf32> to vector<256xf32>
    %20 = vector.shape_cast %19 : vector<256xf32> to vector<1x256xf32>
    %21 = vector.broadcast %20 : vector<1x256xf32> to vector<128x256xf32>
    %22 = arith.mulf %17, %21 : vector<128x256xf32>
    %c0_8 = arith.constant 0 : index
    %c0_9 = arith.constant 0 : index
    %23 = vector.load %arg4[%c0_8, %c0_9] : memref<1x256xf32, #tpu.memory_space<vmem>>, vector<1x256xf32>
    %24 = vector.shape_cast %23 : vector<1x256xf32> to vector<256xf32>
    %25 = vector.shape_cast %24 : vector<256xf32> to vector<1x256xf32>
    %26 = vector.broadcast %25 : vector<1x256xf32> to vector<128x256xf32>
    %27 = arith.addf %22, %26 : vector<128x256xf32>
    %28 = arith.truncf %27 : vector<128x256xf32> to vector<128x256xbf16>
    %c0_10 = arith.constant 0 : index
    %c0_11 = arith.constant 0 : index
    %29 = vector.load %arg5[%c0_10, %c0_11] : memref<256x1024xbf16, #tpu.memory_space<vmem>>, vector<256x1024xbf16>
    %cst_12 = arith.constant dense<0.000000e+00> : vector<128x1024xf32>
    %30 = tpu.matmul %28, %29, %cst_12 {dimension_numbers = #tpu.dot_dimension_numbers<[1], [0], [0], [1], [0, 0, 1, 1], [], []>} : vector<128x256xbf16>, vector<256x1024xbf16>, vector<128x1024xf32> -> vector<128x1024xf32>
    %c0_13 = arith.constant 0 : index
    %c0_14 = arith.constant 0 : index
    %31 = vector.load %arg6[%c0_13, %c0_14] : memref<1x1024xf32, #tpu.memory_space<vmem>>, vector<1x1024xf32>
    %32 = vector.shape_cast %31 : vector<1x1024xf32> to vector<1024xf32>
    %33 = vector.shape_cast %32 : vector<1024xf32> to vector<1x1024xf32>
    %34 = vector.broadcast %33 : vector<1x1024xf32> to vector<128x1024xf32>
    %35 = arith.addf %30, %34 : vector<128x1024xf32>
    %36 = arith.negf %35 : vector<128x1024xf32>
    %37 = math.exp %36 : vector<128x1024xf32>
    %cst_15 = arith.constant 1.000000e+00 : f32
    %38 = vector.broadcast %cst_15 : f32 to vector<128x1024xf32>
    %39 = arith.addf %38, %37 : vector<128x1024xf32>
    %40 = arith.divf %38, %39 : vector<128x1024xf32>
    %41 = arith.mulf %35, %40 : vector<128x1024xf32>
    %42 = vector.extract_strided_slice %41 {offsets = [0, 0], sizes = [128, 512], strides = [1, 1]} : vector<128x1024xf32> to vector<128x512xf32>
    %43 = vector.extract_strided_slice %41 {offsets = [0, 512], sizes = [128, 512], strides = [1, 1]} : vector<128x1024xf32> to vector<128x512xf32>
    %c0_16 = arith.constant 0 : index
    %c0_17 = arith.constant 0 : index
    %44 = vector.load %arg7[%c0_16, %c0_17] : memref<256x128xbf16, #tpu.memory_space<vmem>>, vector<256x128xbf16>
    %cst_18 = arith.constant dense<0.000000e+00> : vector<128x128xf32>
    %45 = tpu.matmul %28, %44, %cst_18 {dimension_numbers = #tpu.dot_dimension_numbers<[1], [0], [0], [1], [0, 0, 1, 1], [], []>} : vector<128x256xbf16>, vector<256x128xbf16>, vector<128x128xf32> -> vector<128x128xf32>
    %c0_19 = arith.constant 0 : index
    %c0_20 = arith.constant 0 : index
    %46 = vector.load %arg8[%c0_19, %c0_20] : memref<1x128xf32, #tpu.memory_space<vmem>>, vector<1x128xf32>
    %47 = vector.shape_cast %46 : vector<1x128xf32> to vector<128xf32>
    %48 = vector.shape_cast %47 : vector<128xf32> to vector<1x128xf32>
    %49 = vector.broadcast %48 : vector<1x128xf32> to vector<128x128xf32>
    %50 = arith.addf %45, %49 : vector<128x128xf32>
    %51 = arith.negf %50 : vector<128x128xf32>
    %52 = math.exp %51 : vector<128x128xf32>
    %cst_21 = arith.constant 1.000000e+00 : f32
    %53 = vector.broadcast %cst_21 : f32 to vector<128x128xf32>
    %54 = arith.addf %53, %52 : vector<128x128xf32>
    %55 = arith.divf %53, %54 : vector<128x128xf32>
    %56 = arith.mulf %50, %55 : vector<128x128xf32>
    %c0_22 = arith.constant 0 : index
    %c0_23 = arith.constant 0 : index
    %57 = vector.load %arg9[%c0_22, %c0_23] : memref<2x128xf32, #tpu.memory_space<vmem>>, vector<1x128xf32>
    %58 = vector.shape_cast %57 : vector<1x128xf32> to vector<128xf32>
    %59 = vector.shape_cast %58 : vector<128xf32> to vector<1x128xf32>
    %60 = vector.broadcast %59 : vector<1x128xf32> to vector<128x128xf32>
    %61 = arith.mulf %56, %60 : vector<128x128xf32>
    %c0_24 = arith.constant 0 : index
    %c0_25 = arith.constant 0 : index
    %62 = vector.load %arg10[%c0_24, %c0_25] : memref<2x128xf32, #tpu.memory_space<vmem>>, vector<1x128xf32>
    %63 = vector.shape_cast %62 : vector<1x128xf32> to vector<128xf32>
    %64 = vector.shape_cast %63 : vector<128xf32> to vector<1x128xf32>
    %65 = vector.broadcast %64 : vector<1x128xf32> to vector<128x128xf32>
    %66 = arith.addf %61, %65 : vector<128x128xf32>
    %cst_26 = arith.constant 3.906250e-03 : f32
    %67 = vector.broadcast %cst_26 : f32 to vector<128x128xf32>
    %68 = arith.mulf %66, %67 : vector<128x128xf32>
    %c1 = arith.constant 1 : index
    %c0_27 = arith.constant 0 : index
    %69 = vector.load %arg9[%c1, %c0_27] : memref<2x128xf32, #tpu.memory_space<vmem>>, vector<1x128xf32>
    %70 = vector.shape_cast %69 : vector<1x128xf32> to vector<128xf32>
    %71 = vector.shape_cast %70 : vector<128xf32> to vector<1x128xf32>
    %72 = vector.broadcast %71 : vector<1x128xf32> to vector<128x128xf32>
    %73 = arith.mulf %56, %72 : vector<128x128xf32>
    %c1_28 = arith.constant 1 : index
    %c0_29 = arith.constant 0 : index
    %74 = vector.load %arg10[%c1_28, %c0_29] : memref<2x128xf32, #tpu.memory_space<vmem>>, vector<1x128xf32>
    %75 = vector.shape_cast %74 : vector<1x128xf32> to vector<128xf32>
    %76 = vector.shape_cast %75 : vector<128xf32> to vector<1x128xf32>
    %77 = vector.broadcast %76 : vector<1x128xf32> to vector<128x128xf32>
    %78 = arith.addf %73, %77 : vector<128x128xf32>
    %79 = arith.truncf %68 : vector<128x128xf32> to vector<128x128xbf16>
    %c0_30 = arith.constant 0 : index
    %c0_31 = arith.constant 0 : index
    %c0_32 = arith.constant 0 : index
    %80 = vector.load %arg11[%c0_30, %c0_31, %c0_32] : memref<1x128x128xbf16, #tpu.memory_space<vmem>>, vector<1x128x128xbf16>
    %81 = vector.shape_cast %80 : vector<1x128x128xbf16> to vector<128x128xbf16>
    %82 = vector.shape_cast %79 : vector<128x128xbf16> to vector<1x128x128xbf16>
    tpu.vector_store %arg11[%c0_30, %c0_31, %c0_32], %82 {strides = array<i32>} : memref<1x128x128xbf16, #tpu.memory_space<vmem>>, vector<1x128x128xbf16>,
    %83 = arith.truncf %78 : vector<128x128xf32> to vector<128x128xbf16>
    %c0_33 = arith.constant 0 : index
    %c0_34 = arith.constant 0 : index
    %c0_35 = arith.constant 0 : index
    %84 = vector.load %arg12[%c0_33, %c0_34, %c0_35] : memref<1x128x128xbf16, #tpu.memory_space<vmem>>, vector<1x128x128xbf16>
    %85 = vector.shape_cast %84 : vector<1x128x128xbf16> to vector<128x128xbf16>
    %86 = vector.shape_cast %83 : vector<128x128xbf16> to vector<1x128x128xbf16>
    tpu.vector_store %arg12[%c0_33, %c0_34, %c0_35], %86 {strides = array<i32>} : memref<1x128x128xbf16, #tpu.memory_space<vmem>>, vector<1x128x128xbf16>,
    %87 = arith.truncf %42 : vector<128x512xf32> to vector<128x512xbf16>
    %c0_36 = arith.constant 0 : index
    %c0_37 = arith.constant 0 : index
    %c0_38 = arith.constant 0 : index
    %88 = vector.load %arg13[%c0_36, %c0_37, %c0_38] : memref<1x128x512xbf16, #tpu.memory_space<vmem>>, vector<1x128x512xbf16>
    %89 = vector.shape_cast %88 : vector<1x128x512xbf16> to vector<128x512xbf16>
    %90 = vector.shape_cast %87 : vector<128x512xbf16> to vector<1x128x512xbf16>
    tpu.vector_store %arg13[%c0_36, %c0_37, %c0_38], %90 {strides = array<i32>} : memref<1x128x512xbf16, #tpu.memory_space<vmem>>, vector<1x128x512xbf16>,
    %c0_39 = arith.constant 0 : index
    %c0_40 = arith.constant 0 : index
    %c0_41 = arith.constant 0 : index
    %91 = vector.load %arg14[%c0_39, %c0_40, %c0_41] : memref<1x128x512xf32, #tpu.memory_space<vmem>>, vector<1x128x512xf32>
    %92 = vector.shape_cast %91 : vector<1x128x512xf32> to vector<128x512xf32>
    %93 = vector.shape_cast %43 : vector<128x512xf32> to vector<1x128x512xf32>
    tpu.vector_store %arg14[%c0_39, %c0_40, %c0_41], %93 {strides = array<i32>} : memref<1x128x512xf32, #tpu.memory_space<vmem>>, vector<1x128x512xf32>,
    return
  }
  func.func @transform_0(%arg0: i32, %arg1: i32) -> (i32, i32, i32) {
    %c0_i32 = arith.constant 0 : i32
    %c0_i32_0 = arith.constant 0 : i32
    return %arg0, %arg1, %c0_i32 : i32, i32, i32
  }
  func.func @transform_1(%arg0: i32, %arg1: i32) -> (i32, i32) {
    %c0_i32 = arith.constant 0 : i32
    %c0_i32_0 = arith.constant 0 : i32
    %c0_i32_1 = arith.constant 0 : i32
    return %c0_i32, %c0_i32_0 : i32, i32
  }
  func.func @transform_2(%arg0: i32, %arg1: i32) -> (i32, i32) {
    %c0_i32 = arith.constant 0 : i32
    %c0_i32_0 = arith.constant 0 : i32
    %c0_i32_1 = arith.constant 0 : i32
    return %c0_i32, %c0_i32_0 : i32, i32
  }
  func.func @transform_3(%arg0: i32, %arg1: i32) -> (i32, i32) {
    %c0_i32 = arith.constant 0 : i32
    %c0_i32_0 = arith.constant 0 : i32
    %c0_i32_1 = arith.constant 0 : i32
    return %c0_i32, %c0_i32_0 : i32, i32
  }
  func.func @transform_4(%arg0: i32, %arg1: i32) -> (i32, i32) {
    %c0_i32 = arith.constant 0 : i32
    %c0_i32_0 = arith.constant 0 : i32
    %c0_i32_1 = arith.constant 0 : i32
    return %c0_i32, %c0_i32_0 : i32, i32
  }
  func.func @transform_5(%arg0: i32, %arg1: i32) -> (i32, i32) {
    %c0_i32 = arith.constant 0 : i32
    %c0_i32_0 = arith.constant 0 : i32
    %c0_i32_1 = arith.constant 0 : i32
    return %c0_i32, %c0_i32_0 : i32, i32
  }
  func.func @transform_6(%arg0: i32, %arg1: i32) -> (i32, i32) {
    %c0_i32 = arith.constant 0 : i32
    %c0_i32_0 = arith.constant 0 : i32
    %c0_i32_1 = arith.constant 0 : i32
    return %c0_i32, %c0_i32_0 : i32, i32
  }
  func.func @transform_7(%arg0: i32, %arg1: i32) -> (i32, i32) {
    %c0_i32 = arith.constant 0 : i32
    %c0_i32_0 = arith.constant 0 : i32
    %c0_i32_1 = arith.constant 0 : i32
    return %c0_i32, %c0_i32_0 : i32, i32
  }
  func.func @transform_8(%arg0: i32, %arg1: i32) -> (i32, i32) {
    %c0_i32 = arith.constant 0 : i32
    %c0_i32_0 = arith.constant 0 : i32
    %c0_i32_1 = arith.constant 0 : i32
    return %c0_i32, %c0_i32_0 : i32, i32
  }
  func.func @transform_9(%arg0: i32, %arg1: i32) -> (i32, i32, i32) {
    %c0_i32 = arith.constant 0 : i32
    %c0_i32_0 = arith.constant 0 : i32
    return %arg0, %arg1, %c0_i32 : i32, i32, i32
  }
  func.func @transform_10(%arg0: i32, %arg1: i32) -> (i32, i32, i32) {
    %c0_i32 = arith.constant 0 : i32
    %c0_i32_0 = arith.constant 0 : i32
    return %arg0, %arg1, %c0_i32 : i32, i32, i32
  }
  func.func @transform_11(%arg0: i32, %arg1: i32) -> (i32, i32, i32) {
    %c0_i32 = arith.constant 0 : i32
    %c0_i32_0 = arith.constant 0 : i32
    return %arg0, %arg1, %c0_i32 : i32, i32, i32
  }
  func.func @transform_12(%arg0: i32, %arg1: i32) -> (i32, i32, i32) {
    %c0_i32 = arith.constant 0 : i32
    %c0_i32_0 = arith.constant 0 : i32
    return %arg0, %arg1, %c0_i32 : i32, i32, i32
  }
}

</mosaic_0001>

<llo_original>
// kernel: tpu_custom_call.1
$region0: #{tpu_custom_call.1}
  #allocation0 [shape = 'u32[]', space=smem, size = 0x4, offset = 0x4, fixed_abs, tag = 'smem constant byte address 0x4 - core index']
  #allocation1 [shape = 'u32[144,128]{1,0:T(1,128)}', space=vmem, size = 0x12000, scoped, tag = 'internal scratch']
  %s0 = inlined_call_operand.hbm [shape: f32[2,256,256], index: 0, kind: input, shape index: {}]
  %s1 = inlined_call_operand.vmem [shape: f32[1,256], index: 1, kind: input, shape index: {}]
  %s2 = inlined_call_operand.vmem [shape: f32[1,256], index: 2, kind: input, shape index: {}]
  %s3 = inlined_call_operand.hbm [shape: bf16[256,1024], index: 3, kind: input, shape index: {}]
  %s4 = inlined_call_operand.vmem [shape: f32[1,1024], index: 4, kind: input, shape index: {}]
  %s5 = inlined_call_operand.hbm [shape: bf16[256,128], index: 5, kind: input, shape index: {}]
  %s6 = inlined_call_operand.vmem [shape: f32[1,128], index: 6, kind: input, shape index: {}]
  %s7 = inlined_call_operand.vmem [shape: f32[2,128], index: 7, kind: input, shape index: {}]
  %s8 = inlined_call_operand.vmem [shape: f32[2,128], index: 8, kind: input, shape index: {}]
  %s9 = inlined_call_operand.hbm [shape: bf16[2,256,128], index: 9, kind: output, shape index: {0}]
  %s10 = inlined_call_operand.hbm [shape: bf16[2,256,128], index: 10, kind: output, shape index: {1}]
  %s11 = inlined_call_operand.hbm [shape: bf16[2,256,512], index: 11, kind: output, shape index: {2}]
  %s12 = inlined_call_operand.hbm [shape: f32[2,256,512], index: 12, kind: output, shape index: {3}]
  %13 = xla_tuple %s9, %s10, %s11, %s12
  %s14 = sld [smem:[#allocation0]]
  $region105: #{tpu_custom_call.1} parent=0
    _
  %s16 = ssub.s32 1, %s14
  %s17 = scalar_select 0, %s16, %s14
  $region1: #{tpu_custom_call.1} parent=0
    #allocation2 [shape = 'u8[262144]{0}', space=vmem, size = 0x40000, scoped, tag = 'input window, operand 0']
    #allocation3 [shape = 's32[2]{0}', space=sflag, size = 0x8, scoped, tag = 'scoped memory for tpu_custom_call.1']
    #allocation4 [shape = 's32[2]{0}', space=sflag, size = 0x8, scoped, tag = 'scoped memory for tpu_custom_call.1']
    #allocation5 [shape = 'u8[524288]{0}', space=vmem, size = 0x80000, scoped, tag = 'input window, operand 3, single buffered']
    #allocation6 [shape = 's32[1]{0}', space=sflag, size = 0x4, scoped, tag = 'scoped memory for tpu_custom_call.1']
    #allocation7 [shape = 'u8[65536]{0}', space=vmem, size = 0x10000, scoped, tag = 'input window, operand 5, single buffered']
    #allocation8 [shape = 'u8[65536]{0}', space=vmem, size = 0x10000, scoped, tag = 'output window, operand 0']
    #allocation9 [shape = 'u8[65536]{0}', space=vmem, size = 0x10000, scoped, tag = 'output window, operand 1']
    #allocation10 [shape = 's32[2]{0}', space=sflag, size = 0x8, scoped, tag = 'scoped memory for tpu_custom_call.1']
    #allocation11 [shape = 'u8[262144]{0}', space=vmem, size = 0x40000, scoped, tag = 'output window, operand 2']
    #allocation12 [shape = 'u8[524288]{0}', space=vmem, size = 0x80000, scoped, tag = 'output window, operand 3']
    #allocation13 [shape = 's32[2]{0}', space=sflag, size = 0x8, scoped, tag = 'scoped memory for tpu_custom_call.1']
    %18 = vsyncpa [#allocation3], 0
    %s19 = scalar_lea.sflag [#allocation3], 1
    %20 = vsyncpa %s19, 0
    %21 = vsyncpa [#allocation6], 0
    %22 = vsyncpa [#allocation4], 0
    %s23 = scalar_lea.sflag [#allocation4], 1
    %24 = vsyncpa %s23, 0
    %25 = vsyncpa [#allocation10], 0
    %s26 = scalar_lea.sflag [#allocation10], 1
    %27 = vsyncpa %s26, 0
    %28 = vsyncpa [#allocation13], 0
    %s29 = scalar_lea.sflag [#allocation13], 1
    %30 = vsyncpa %s29, 0
    loop: start=0, step=1, limit=6
    $region2: #{tpu_custom_call.1} parent=1 // loop_pre_header
      _
    $region3: #{tpu_custom_call.1} parent=1 // loop_header
      %s32 = sphi 0, %s36
      %p33 = scmp.ge.s32.totalorder %s32, 6
      %s39 = sphi 0, %s51
      %s40 = sphi 0, %s47
      %s41 = sphi 0, %s39
      %s42 = sphi 0, %s40
      %s43 = sphi 0, %s41
      %s44 = sphi 0, %s42
      %s56 = sphi 0, %s58
      %s59 = sphi 0, %s56
      %s60 = sphi 0, %s59
      %s76 = sphi 0, %s60
      %s80 = sphi 0, %s80
      %s82 = sphi 0, %s80
      %s83 = sphi 0, %s82
      %s97 = sphi 0, %s83
      %s101 = sphi 0, %s101
      %s103 = sphi 0, %s101
      %s104 = sphi 0, %s103
      %s118 = sphi 0, %s104
      %s122 = sphi 0, %s122
      %s124 = sphi 0, %s122
      %s125 = sphi 0, %s124
      %s139 = sphi 0, %s125
      %s143 = sphi 0, %s143
      %s145 = sphi 0, %s143
      %s146 = sphi 0, %s145
      %s160 = sphi 0, %s146
      %s164 = sphi 0, %s164
      %s166 = sphi 0, %s164
      %s167 = sphi 0, %s166
      %s181 = sphi 0, %s167
      %s185 = sphi 0, %s185
      %s187 = sphi 0, %s185
      %s188 = sphi 0, %s187
      %s202 = sphi 0, %s188
      %s206 = sphi 0, %s206
      %s208 = sphi 0, %s206
      %s209 = sphi 0, %s208
      %s223 = sphi 0, %s209
      %s227 = sphi 0, %s227
      %s229 = sphi 0, %s227
      %s230 = sphi 0, %s229
      %s244 = sphi 0, %s230
      %s252 = sphi 0, %s254
      %s255 = sphi 0, %s252
      %s256 = sphi 0, %s255
      %s272 = sphi 0, %s256
      %s280 = sphi 0, %s282
      %s283 = sphi 0, %s280
      %s284 = sphi 0, %s283
      %s300 = sphi 0, %s284
      %s308 = sphi 0, %s310
      %s311 = sphi 0, %s308
      %s312 = sphi 0, %s311
      %s328 = sphi 0, %s312
      %s336 = sphi 0, %s338
      %s339 = sphi 0, %s336
      %s340 = sphi 0, %s339
      %s356 = sphi 0, %s340
    $region4: #{tpu_custom_call.1} parent=1 // loop_header_branch
      %35 = sbr.rel (%p33) target = $region8
    $region5: #{tpu_custom_call.1} parent=1 // loop_body
      %s37 = ssub.s32 %s32, 1
      %s38 = ssub.s32 %s32, 2
      %s45 = sadd.s32 1, %s40
      %p46 = scmp.ge.s32.totalorder %s45, 2
      %s47 = scalar_select %p46, 0, %s45
      %s48 = sadd.s32 1, %s39
      %s49 = scalar_select %p46, %s48, %s39
      %p50 = scmp.ge.s32.totalorder %s49, 2
      %s51 = scalar_select %p50, 0, %s49
      %s52 = ssub.s32 %s39, %s51
      %s53 = ssub.s32 %s40, %s47
      %s54 = sor.u32 %s52, %s53
      %p55 = scmp.eq.s32.totalorder %s54, 0
      %s57 = sadd.s32 %s56, 1
      %s58 = scalar_select %p55, %s56, %s57
      %p61 = pneg %p55
      %p62 = scmp.eq.s32.totalorder %s32, 3
      %p63 = por %p61, %p62
      %p64 = scmp.ne.s32.totalorder %s56, %s59
      %p65 = scmp.eq.s32.totalorder %s32, 0
      %p66 = por %p64, %p65
      %p67 = scmp.ne.s32.totalorder %s56, %s59
      %p68 = scmp.eq.s32.totalorder %s37, 3
      %p69 = por %p67, %p68
      %p70 = scmp.ne.s32.totalorder %s59, %s60
      %p71 = scmp.eq.s32.totalorder %s37, 0
      %p72 = por %p70, %p71
      %p73 = scmp.ne.s32.totalorder %s59, %s60
      %p74 = scmp.eq.s32.totalorder %s38, 3
      %p75 = por %p73, %p74
      %p77 = scmp.ne.s32.totalorder %s60, %s76
      %p78 = scmp.eq.s32.totalorder %s38, 0
      %p79 = por %p77, %p78
      %s81 = sadd.s32 %s80, 1
      %p84 = scmp.eq.s32.totalorder %s32, 3
      %p85 = scmp.ne.s32.totalorder %s80, %s82
      %p86 = scmp.eq.s32.totalorder %s32, 0
      %p87 = por %p85, %p86
      %p88 = scmp.ne.s32.totalorder %s80, %s82
      %p89 = scmp.eq.s32.totalorder %s37, 3
      %p90 = por %p88, %p89
      %p91 = scmp.ne.s32.totalorder %s82, %s83
      %p92 = scmp.eq.s32.totalorder %s37, 0
      %p93 = por %p91, %p92
      %p94 = scmp.ne.s32.totalorder %s82, %s83
      %p95 = scmp.eq.s32.totalorder %s38, 3
      %p96 = por %p94, %p95
      %p98 = scmp.ne.s32.totalorder %s83, %s97
      %p99 = scmp.eq.s32.totalorder %s38, 0
      %p100 = por %p98, %p99
      %s102 = sadd.s32 %s101, 1
      %p105 = scmp.eq.s32.totalorder %s32, 3
      %p106 = scmp.ne.s32.totalorder %s101, %s103
      %p107 = scmp.eq.s32.totalorder %s32, 0
      %p108 = por %p106, %p107
      %p109 = scmp.ne.s32.totalorder %s101, %s103
      %p110 = scmp.eq.s32.totalorder %s37, 3
      %p111 = por %p109, %p110
      %p112 = scmp.ne.s32.totalorder %s103, %s104
      %p113 = scmp.eq.s32.totalorder %s37, 0
      %p114 = por %p112, %p113
      %p115 = scmp.ne.s32.totalorder %s103, %s104
      %p116 = scmp.eq.s32.totalorder %s38, 3
      %p117 = por %p115, %p116
      %p119 = scmp.ne.s32.totalorder %s104, %s118
      %p120 = scmp.eq.s32.totalorder %s38, 0
      %p121 = por %p119, %p120
      %s123 = sadd.s32 %s122, 1
      %p126 = scmp.eq.s32.totalorder %s32, 3
      %p127 = scmp.ne.s32.totalorder %s122, %s124
      %p128 = scmp.eq.s32.totalorder %s32, 0
      %p129 = por %p127, %p128
      %p130 = scmp.ne.s32.totalorder %s122, %s124
      %p131 = scmp.eq.s32.totalorder %s37, 3
      %p132 = por %p130, %p131
      %p133 = scmp.ne.s32.totalorder %s124, %s125
      %p134 = scmp.eq.s32.totalorder %s37, 0
      %p135 = por %p133, %p134
      %p136 = scmp.ne.s32.totalorder %s124, %s125
      %p137 = scmp.eq.s32.totalorder %s38, 3
      %p138 = por %p136, %p137
      %p140 = scmp.ne.s32.totalorder %s125, %s139
      %p141 = scmp.eq.s32.totalorder %s38, 0
      %p142 = por %p140, %p141
      %s144 = sadd.s32 %s143, 1
      %p147 = scmp.eq.s32.totalorder %s32, 3
      %p148 = scmp.ne.s32.totalorder %s143, %s145
      %p149 = scmp.eq.s32.totalorder %s32, 0
      %p150 = por %p148, %p149
      %p151 = scmp.ne.s32.totalorder %s143, %s145
      %p152 = scmp.eq.s32.totalorder %s37, 3
      %p153 = por %p151, %p152
      %p154 = scmp.ne.s32.totalorder %s145, %s146
      %p155 = scmp.eq.s32.totalorder %s37, 0
      %p156 = por %p154, %p155
      %p157 = scmp.ne.s32.totalorder %s145, %s146
      %p158 = scmp.eq.s32.totalorder %s38, 3
      %p159 = por %p157, %p158
      %p161 = scmp.ne.s32.totalorder %s146, %s160
      %p162 = scmp.eq.s32.totalorder %s38, 0
      %p163 = por %p161, %p162
      %s165 = sadd.s32 %s164, 1
      %p168 = scmp.eq.s32.totalorder %s32, 3
      %p169 = scmp.ne.s32.totalorder %s164, %s166
      %p170 = scmp.eq.s32.totalorder %s32, 0
      %p171 = por %p169, %p170
      %p172 = scmp.ne.s32.totalorder %s164, %s166
      %p173 = scmp.eq.s32.totalorder %s37, 3
      %p174 = por %p172, %p173
      %p175 = scmp.ne.s32.totalorder %s166, %s167
      %p176 = scmp.eq.s32.totalorder %s37, 0
      %p177 = por %p175, %p176
      %p178 = scmp.ne.s32.totalorder %s166, %s167
      %p179 = scmp.eq.s32.totalorder %s38, 3
      %p180 = por %p178, %p179
      %p182 = scmp.ne.s32.totalorder %s167, %s181
      %p183 = scmp.eq.s32.totalorder %s38, 0
      %p184 = por %p182, %p183
      %s186 = sadd.s32 %s185, 1
      %p189 = scmp.eq.s32.totalorder %s32, 3
      %p190 = scmp.ne.s32.totalorder %s185, %s187
      %p191 = scmp.eq.s32.totalorder %s32, 0
      %p192 = por %p190, %p191
      %p193 = scmp.ne.s32.totalorder %s185, %s187
      %p194 = scmp.eq.s32.totalorder %s37, 3
      %p195 = por %p193, %p194
      %p196 = scmp.ne.s32.totalorder %s187, %s188
      %p197 = scmp.eq.s32.totalorder %s37, 0
      %p198 = por %p196, %p197
      %p199 = scmp.ne.s32.totalorder %s187, %s188
      %p200 = scmp.eq.s32.totalorder %s38, 3
      %p201 = por %p199, %p200
      %p203 = scmp.ne.s32.totalorder %s188, %s202
      %p204 = scmp.eq.s32.totalorder %s38, 0
      %p205 = por %p203, %p204
      %s207 = sadd.s32 %s206, 1
      %p210 = scmp.eq.s32.totalorder %s32, 3
      %p211 = scmp.ne.s32.totalorder %s206, %s208
      %p212 = scmp.eq.s32.totalorder %s32, 0
      %p213 = por %p211, %p212
      %p214 = scmp.ne.s32.totalorder %s206, %s208
      %p215 = scmp.eq.s32.totalorder %s37, 3
      %p216 = por %p214, %p215
      %p217 = scmp.ne.s32.totalorder %s208, %s209
      %p218 = scmp.eq.s32.totalorder %s37, 0
      %p219 = por %p217, %p218
      %p220 = scmp.ne.s32.totalorder %s208, %s209
      %p221 = scmp.eq.s32.totalorder %s38, 3
      %p222 = por %p220, %p221
      %p224 = scmp.ne.s32.totalorder %s209, %s223
      %p225 = scmp.eq.s32.totalorder %s38, 0
      %p226 = por %p224, %p225
      %s228 = sadd.s32 %s227, 1
      %p231 = scmp.eq.s32.totalorder %s32, 3
      %p232 = scmp.ne.s32.totalorder %s227, %s229
      %p233 = scmp.eq.s32.totalorder %s32, 0
      %p234 = por %p232, %p233
      %p235 = scmp.ne.s32.totalorder %s227, %s229
      %p236 = scmp.eq.s32.totalorder %s37, 3
      %p237 = por %p235, %p236
      %p238 = scmp.ne.s32.totalorder %s229, %s230
      %p239 = scmp.eq.s32.totalorder %s37, 0
      %p240 = por %p238, %p239
      %p241 = scmp.ne.s32.totalorder %s229, %s230
      %p242 = scmp.eq.s32.totalorder %s38, 3
      %p243 = por %p241, %p242
      %p245 = scmp.ne.s32.totalorder %s230, %s244
      %p246 = scmp.eq.s32.totalorder %s38, 0
      %p247 = por %p245, %p246
      %s248 = ssub.s32 %s39, %s51
      %s249 = ssub.s32 %s40, %s47
      %s250 = sor.u32 %s248, %s249
      %p251 = scmp.eq.s32.totalorder %s250, 0
      %s253 = sadd.s32 %s252, 1
      %s254 = scalar_select %p251, %s252, %s253
      %p257 = pneg %p251
      %p258 = scmp.eq.s32.totalorder %s32, 3
      %p259 = por %p257, %p258
      %p260 = scmp.ne.s32.totalorder %s252, %s255
      %p261 = scmp.eq.s32.totalorder %s32, 0
      %p262 = por %p260, %p261
      %p263 = scmp.ne.s32.totalorder %s252, %s255
      %p264 = scmp.eq.s32.totalorder %s37, 3
      %p265 = por %p263, %p264
      %p266 = scmp.ne.s32.totalorder %s255, %s256
      %p267 = scmp.eq.s32.totalorder %s37, 0
      %p268 = por %p266, %p267
      %p269 = scmp.ne.s32.totalorder %s255, %s256
      %p270 = scmp.eq.s32.totalorder %s38, 3
      %p271 = por %p269, %p270
      %p273 = scmp.ne.s32.totalorder %s256, %s272
      %p274 = scmp.eq.s32.totalorder %s38, 0
      %p275 = por %p273, %p274
      %s276 = ssub.s32 %s39, %s51
      %s277 = ssub.s32 %s40, %s47
      %s278 = sor.u32 %s276, %s277
      %p279 = scmp.eq.s32.totalorder %s278, 0
      %s281 = sadd.s32 %s280, 1
      %s282 = scalar_select %p279, %s280, %s281
      %p285 = pneg %p279
      %p286 = scmp.eq.s32.totalorder %s32, 3
      %p287 = por %p285, %p286
      %p288 = scmp.ne.s32.totalorder %s280, %s283
      %p289 = scmp.eq.s32.totalorder %s32, 0
      %p290 = por %p288, %p289
      %p291 = scmp.ne.s32.totalorder %s280, %s283
      %p292 = scmp.eq.s32.totalorder %s37, 3
      %p293 = por %p291, %p292
      %p294 = scmp.ne.s32.totalorder %s283, %s284
      %p295 = scmp.eq.s32.totalorder %s37, 0
      %p296 = por %p294, %p295
      %p297 = scmp.ne.s32.totalorder %s283, %s284
      %p298 = scmp.eq.s32.totalorder %s38, 3
      %p299 = por %p297, %p298
      %p301 = scmp.ne.s32.totalorder %s284, %s300
      %p302 = scmp.eq.s32.totalorder %s38, 0
      %p303 = por %p301, %p302
      %s304 = ssub.s32 %s39, %s51
      %s305 = ssub.s32 %s40, %s47
      %s306 = sor.u32 %s304, %s305
      %p307 = scmp.eq.s32.totalorder %s306, 0
      %s309 = sadd.s32 %s308, 1
      %s310 = scalar_select %p307, %s308, %s309
      %p313 = pneg %p307
      %p314 = scmp.eq.s32.totalorder %s32, 3
      %p315 = por %p313, %p314
      %p316 = scmp.ne.s32.totalorder %s308, %s311
      %p317 = scmp.eq.s32.totalorder %s32, 0
      %p318 = por %p316, %p317
      %p319 = scmp.ne.s32.totalorder %s308, %s311
      %p320 = scmp.eq.s32.totalorder %s37, 3
      %p321 = por %p319, %p320
      %p322 = scmp.ne.s32.totalorder %s311, %s312
      %p323 = scmp.eq.s32.totalorder %s37, 0
      %p324 = por %p322, %p323
      %p325 = scmp.ne.s32.totalorder %s311, %s312
      %p326 = scmp.eq.s32.totalorder %s38, 3
      %p327 = por %p325, %p326
      %p329 = scmp.ne.s32.totalorder %s312, %s328
      %p330 = scmp.eq.s32.totalorder %s38, 0
      %p331 = por %p329, %p330
      %s332 = ssub.s32 %s39, %s51
      %s333 = ssub.s32 %s40, %s47
      %s334 = sor.u32 %s332, %s333
      %p335 = scmp.eq.s32.totalorder %s334, 0
      %s337 = sadd.s32 %s336, 1
      %s338 = scalar_select %p335, %s336, %s337
      %p341 = pneg %p335
      %p342 = scmp.eq.s32.totalorder %s32, 3
      %p343 = por %p341, %p342
      %p344 = scmp.ne.s32.totalorder %s336, %s339
      %p345 = scmp.eq.s32.totalorder %s32, 0
      %p346 = por %p344, %p345
      %p347 = scmp.ne.s32.totalorder %s336, %s339
      %p348 = scmp.eq.s32.totalorder %s37, 3
      %p349 = por %p347, %p348
      %p350 = scmp.ne.s32.totalorder %s339, %s340
      %p351 = scmp.eq.s32.totalorder %s37, 0
      %p352 = por %p350, %p351
      %p353 = scmp.ne.s32.totalorder %s339, %s340
      %p354 = scmp.eq.s32.totalorder %s38, 3
      %p355 = por %p353, %p354
      %p357 = scmp.ne.s32.totalorder %s340, %s356
      %p358 = scmp.eq.s32.totalorder %s38, 0
      %p359 = por %p357, %p358
      %p360 = scmp.le.s32.totalorder 1, %s32
      %p361 = scmp.lt.s32.totalorder %s32, 5
      %p362 = pnand %p360, %p361
      %p363 = pneg %p362
      // Predicated region
      $region9: #{tpu_custom_call.1} parent=5 // pred_check
        _
      $region10: #{tpu_custom_call.1} parent=5 // pred_check_branch
        %365 = sbr.rel (%p362) target = $region12
      $region11: #{tpu_custom_call.1} parent=5 // pred_region
        %s366 = ssub.s32 %s32, 1
        // Predicated region
        $region13: #{tpu_custom_call.1} parent=11 // pred_check
          %p367 = pneg %p93
        $region14: #{tpu_custom_call.1} parent=11 // pred_check_branch
          %369 = sbr.rel (%p367) target = $region16
        $region15: #{tpu_custom_call.1} parent=11 // pred_region
          _
        $region16: #{tpu_custom_call.1} parent=11 // pred_fallthru
          _
        // Predicated region
        $region17: #{tpu_custom_call.1} parent=11 // pred_check
          %p370 = pneg %p114
        $region18: #{tpu_custom_call.1} parent=11 // pred_check_branch
          %372 = sbr.rel (%p370) target = $region20
        $region19: #{tpu_custom_call.1} parent=11 // pred_region
          _
        $region20: #{tpu_custom_call.1} parent=11 // pred_fallthru
          _
        // Predicated region
        $region21: #{tpu_custom_call.1} parent=11 // pred_check
          %p373 = pneg %p135
        $region22: #{tpu_custom_call.1} parent=11 // pred_check_branch
          %375 = sbr.rel (%p373) target = $region24
        $region23: #{tpu_custom_call.1} parent=11 // pred_region
          %s377 = ssub.s32 16384, 16384
          %378 = vsyncadd [#allocation6], %s377
          %s379 = sshll.u32 [#allocation5], 4
          %s380 = int_to_ptr.vmem [resolvable:$true] %s379
          %385 = dma.hbm_to_vmem [thread:$0]  %s3, 16384, %s380, [#allocation6], 512, 512, 32
        $region24: #{tpu_custom_call.1} parent=11 // pred_fallthru
          _
        // Predicated region
        $region25: #{tpu_custom_call.1} parent=11 // pred_check
          %p386 = pneg %p156
        $region26: #{tpu_custom_call.1} parent=11 // pred_check_branch
          %388 = sbr.rel (%p386) target = $region28
        $region27: #{tpu_custom_call.1} parent=11 // pred_region
          _
        $region28: #{tpu_custom_call.1} parent=11 // pred_fallthru
          _
        // Predicated region
        $region29: #{tpu_custom_call.1} parent=11 // pred_check
          %p389 = pneg %p177
        $region30: #{tpu_custom_call.1} parent=11 // pred_check_branch
          %391 = sbr.rel (%p389) target = $region32
        $region31: #{tpu_custom_call.1} parent=11 // pred_region
          %s393 = ssub.s32 2048, 2048
          %394 = vsyncadd [#allocation6], %s393
          %s395 = sshll.u32 [#allocation7], 4
          %s396 = int_to_ptr.vmem [resolvable:$true] %s395
          %401 = dma.hbm_to_vmem [thread:$0]  %s5, 2048, %s396, [#allocation6], 64, 64, 4
        $region32: #{tpu_custom_call.1} parent=11 // pred_fallthru
          _
        // Predicated region
        $region33: #{tpu_custom_call.1} parent=11 // pred_check
          %p402 = pneg %p198
        $region34: #{tpu_custom_call.1} parent=11 // pred_check_branch
          %404 = sbr.rel (%p402) target = $region36
        $region35: #{tpu_custom_call.1} parent=11 // pred_region
          _
        $region36: #{tpu_custom_call.1} parent=11 // pred_fallthru
          _
        // Predicated region
        $region37: #{tpu_custom_call.1} parent=11 // pred_check
          %p405 = pneg %p219
        $region38: #{tpu_custom_call.1} parent=11 // pred_check_branch
          %407 = sbr.rel (%p405) target = $region40
        $region39: #{tpu_custom_call.1} parent=11 // pred_region
          _
        $region40: #{tpu_custom_call.1} parent=11 // pred_fallthru
          _
        // Predicated region
        $region41: #{tpu_custom_call.1} parent=11 // pred_check
          %p408 = pneg %p240
        $region42: #{tpu_custom_call.1} parent=11 // pred_check_branch
          %410 = sbr.rel (%p408) target = $region44
        $region43: #{tpu_custom_call.1} parent=11 // pred_region
          _
        $region44: #{tpu_custom_call.1} parent=11 // pred_fallthru
          _
      $region12: #{tpu_custom_call.1} parent=5 // pred_fallthru
        _
      %p411 = scmp.lt.s32.totalorder %s32, 4
      // Predicated region
      $region45: #{tpu_custom_call.1} parent=5 // pred_check
        %p412 = pneg %p411
      $region46: #{tpu_custom_call.1} parent=5 // pred_check_branch
        %414 = sbr.rel (%p412) target = $region48
      $region47: #{tpu_custom_call.1} parent=5 // pred_region
        // Predicated region
        $region49: #{tpu_custom_call.1} parent=47 // pred_check
          %p415 = pneg %p66
        $region50: #{tpu_custom_call.1} parent=47 // pred_check_branch
          %417 = sbr.rel (%p415) target = $region52
        $region51: #{tpu_custom_call.1} parent=47 // pred_region
          %s418 = sand.u32 %s56, 1
          %s419 = scalar_lea.sflag [#allocation3], %s418
          %s420 = sand.u32 %s56, 1
          %s421 = smul.addr %s420, 256
          %s422 = scalar_lea.vmem [#allocation2], %s421
          %s423 = smul.u32 16, %s40
          %s425 = ssub.s32 4096, 4096
          %426 = vsyncadd %s419, %s425
          %s427 = smul.addr %s423, 2
          %s428 = smul.addr %s39, 64
          %s429 = sadd.s32 %s427, %s428
          %s430 = smul.addr %s429, 128
          %s431 = scalar_lea.hbm %s0, %s430
          %s432 = sshll.u32 %s422, 4
          %s433 = int_to_ptr.vmem [resolvable:$true] %s432
          %438 = dma.hbm_to_vmem [thread:$0]  %s431, 4096, %s433, %s419, 256, 256, 16
        $region52: #{tpu_custom_call.1} parent=47 // pred_fallthru
          _
      $region48: #{tpu_custom_call.1} parent=5 // pred_fallthru
        _
      %p439 = scmp.le.s32.totalorder 1, %s32
      %p440 = scmp.lt.s32.totalorder %s32, 5
      %p441 = pnand %p439, %p440
      %p442 = pneg %p441
      // Predicated region
      $region53: #{tpu_custom_call.1} parent=5 // pred_check
        _
      $region54: #{tpu_custom_call.1} parent=5 // pred_check_branch
        %444 = sbr.rel (%p441) target = $region56
      $region55: #{tpu_custom_call.1} parent=5 // pred_region
        %s445 = ssub.s32 %s32, 1
        %s446 = sand.u32 %s59, 1
        %s447 = scalar_lea.sflag [#allocation3], %s446
        %s448 = sand.u32 %s59, 1
        %s449 = smul.addr %s448, 256
        %s450 = scalar_lea.vmem [#allocation2], %s449
        // Predicated region
        $region57: #{tpu_custom_call.1} parent=55 // pred_check
          %p451 = pneg %p72
        $region58: #{tpu_custom_call.1} parent=55 // pred_check_branch
          %453 = sbr.rel (%p451) target = $region60
        $region59: #{tpu_custom_call.1} parent=55 // pred_region
          %454 = dma.done %s447, 4096
        $region60: #{tpu_custom_call.1} parent=55 // pred_fallthru
          _
        // Predicated region
        $region61: #{tpu_custom_call.1} parent=55 // pred_check
          %p455 = pneg %p135
        $region62: #{tpu_custom_call.1} parent=55 // pred_check_branch
          %457 = sbr.rel (%p455) target = $region64
        $region63: #{tpu_custom_call.1} parent=55 // pred_region
          %458 = dma.done [#allocation6], 16384
        $region64: #{tpu_custom_call.1} parent=55 // pred_fallthru
          _
        // Predicated region
        $region65: #{tpu_custom_call.1} parent=55 // pred_check
          %p459 = pneg %p177
        $region66: #{tpu_custom_call.1} parent=55 // pred_check_branch
          %461 = sbr.rel (%p459) target = $region68
        $region67: #{tpu_custom_call.1} parent=55 // pred_region
          %462 = dma.done [#allocation6], 2048
        $region68: #{tpu_custom_call.1} parent=55 // pred_fallthru
          _
        %s463 = sand.u32 %s59, 1
        %s464 = scalar_lea.sflag [#allocation3], %s463
        %s465 = sand.u32 %s59, 1
        %s466 = smul.addr %s465, 256
        %s467 = scalar_lea.vmem [#allocation2], %s466
        %p468 = pneg %p72
        %p469 = pneg %p69
        %p470 = pneg %p93
        %p471 = pneg %p90
        %p472 = pneg %p114
        %p473 = pneg %p111
        %p474 = pneg %p135
        %p475 = pneg %p132
        %p476 = pneg %p156
        %p477 = pneg %p153
        %p478 = pneg %p177
        %p479 = pneg %p174
        %p480 = pneg %p198
        %p481 = pneg %p195
        %p482 = pneg %p219
        %p483 = pneg %p216
        %p484 = pneg %p240
        %p485 = pneg %p237
        %p486 = pneg %p268
        %p487 = pneg %p265
        %s488 = sand.u32 %s255, 1
        %s489 = scalar_lea.sflag [#allocation4], %s488
        %s490 = sand.u32 %s255, 1
        %s491 = smul.addr %s490, 64
        %s492 = scalar_lea.vmem [#allocation8], %s491
        %p493 = pneg %p296
        %p494 = pneg %p293
        %s495 = sand.u32 %s37, 1
        %s496 = scalar_lea.sflag [#allocation10], %s495
        %s497 = sand.u32 %s283, 1
        %s498 = smul.addr %s497, 64
        %s499 = scalar_lea.vmem [#allocation9], %s498
        %p500 = pneg %p324
        %p501 = pneg %p321
        %s502 = sand.u32 %s37, 1
        %s503 = scalar_lea.sflag [#allocation10], %s502
        %s504 = sand.u32 %s311, 1
        %s505 = smul.addr %s504, 256
        %s506 = scalar_lea.vmem [#allocation11], %s505
        %p507 = pneg %p352
        %p508 = pneg %p349
        %s509 = sand.u32 %s339, 1
        %s510 = scalar_lea.sflag [#allocation13], %s509
        %s511 = sand.u32 %s339, 1
        %s512 = smul.addr %s511, 512
        %s513 = scalar_lea.vmem [#allocation12], %s512
        %s514 = smul.u32 16, %s42
        %s515 = smul.u32 16, %s42
        %s516 = smul.u32 16, %s42
        %s517 = smul.u32 16, %s42
        %s518 = smul.u32 16, %s42
        %v520 = vld [vmem:[%s450] sm:$0xff]
        %v521 = vld [vmem:[%s450 + $0x8] sm:$0xff]
        %v522 = vld [vmem:[%s450 + $0x10] sm:$0xff]
        %v523 = vld [vmem:[%s450 + $0x18] sm:$0xff]
        %v524 = vld [vmem:[%s450 + $0x20] sm:$0xff]
        %v525 = vld [vmem:[%s450 + $0x28] sm:$0xff]
        %v526 = vld [vmem:[%s450 + $0x30] sm:$0xff]
        %v527 = vld [vmem:[%s450 + $0x38] sm:$0xff]
        %v528 = vld [vmem:[%s450 + $0x40] sm:$0xff]
        %v529 = vld [vmem:[%s450 + $0x48] sm:$0xff]
        %v530 = vld [vmem:[%s450 + $0x50] sm:$0xff]
        %v531 = vld [vmem:[%s450 + $0x58] sm:$0xff]
        %v532 = vld [vmem:[%s450 + $0x60] sm:$0xff]
        %v533 = vld [vmem:[%s450 + $0x68] sm:$0xff]
        %v534 = vld [vmem:[%s450 + $0x70] sm:$0xff]
        %v535 = vld [vmem:[%s450 + $0x78] sm:$0xff]
        %v536 = vld [vmem:[%s450 + $0x80] sm:$0xff]
        %v537 = vld [vmem:[%s450 + $0x88] sm:$0xff]
        %v538 = vld [vmem:[%s450 + $0x90] sm:$0xff]
        %v539 = vld [vmem:[%s450 + $0x98] sm:$0xff]
        %v540 = vld [vmem:[%s450 + $0xa0] sm:$0xff]
        %v541 = vld [vmem:[%s450 + $0xa8] sm:$0xff]
        %v542 = vld [vmem:[%s450 + $0xb0] sm:$0xff]
        %v543 = vld [vmem:[%s450 + $0xb8] sm:$0xff]
        %v544 = vld [vmem:[%s450 + $0xc0] sm:$0xff]
        %v545 = vld [vmem:[%s450 + $0xc8] sm:$0xff]
        %v546 = vld [vmem:[%s450 + $0xd0] sm:$0xff]
        %v547 = vld [vmem:[%s450 + $0xd8] sm:$0xff]
        %v548 = vld [vmem:[%s450 + $0xe0] sm:$0xff]
        %v549 = vld [vmem:[%s450 + $0xe8] sm:$0xff]
        %v550 = vld [vmem:[%s450 + $0xf0] sm:$0xff]
        %v551 = vld [vmem:[%s450 + $0xf8] sm:$0xff]
        %v552 = vadd.f32 %v520, %v521
        %553 = vadd.xlane.f32.xlu0 %v552
        %v554 = vpop.xlane.xlu0 %553
        %v555 = vadd.f32 %v522, %v523
        %556 = vadd.xlane.f32.xlu0 %v555
        %v557 = vpop.xlane.xlu0 %556
        %v558 = vadd.f32 %v524, %v525
        %559 = vadd.xlane.f32.xlu0 %v558
        %v560 = vpop.xlane.xlu0 %559
        %v561 = vadd.f32 %v526, %v527
        %562 = vadd.xlane.f32.xlu0 %v561
        %v563 = vpop.xlane.xlu0 %562
        %v564 = vadd.f32 %v528, %v529
        %565 = vadd.xlane.f32.xlu0 %v564
        %v566 = vpop.xlane.xlu0 %565
        %v567 = vadd.f32 %v530, %v531
        %568 = vadd.xlane.f32.xlu0 %v567
        %v569 = vpop.xlane.xlu0 %568
        %v570 = vadd.f32 %v532, %v533
        %571 = vadd.xlane.f32.xlu0 %v570
        %v572 = vpop.xlane.xlu0 %571
        %v573 = vadd.f32 %v534, %v535
        %574 = vadd.xlane.f32.xlu0 %v573
        %v575 = vpop.xlane.xlu0 %574
        %v576 = vadd.f32 %v536, %v537
        %577 = vadd.xlane.f32.xlu0 %v576
        %v578 = vpop.xlane.xlu0 %577
        %v579 = vadd.f32 %v538, %v539
        %580 = vadd.xlane.f32.xlu0 %v579
        %v581 = vpop.xlane.xlu0 %580
        %v582 = vadd.f32 %v540, %v541
        %583 = vadd.xlane.f32.xlu0 %v582
        %v584 = vpop.xlane.xlu0 %583
        %v585 = vadd.f32 %v542, %v543
        %586 = vadd.xlane.f32.xlu0 %v585
        %v587 = vpop.xlane.xlu0 %586
        %v588 = vadd.f32 %v544, %v545
        %589 = vadd.xlane.f32.xlu0 %v588
        %v590 = vpop.xlane.xlu0 %589
        %v591 = vadd.f32 %v546, %v547
        %592 = vadd.xlane.f32.xlu0 %v591
        %v593 = vpop.xlane.xlu0 %592
        %v594 = vadd.f32 %v548, %v549
        %595 = vadd.xlane.f32.xlu0 %v594
        %v596 = vpop.xlane.xlu0 %595
        %v597 = vadd.f32 %v550, %v551
        %598 = vadd.xlane.f32.xlu0 %v597
        %v599 = vpop.xlane.xlu0 %598
        %v600 = vrcp.pop 256.0
        %v601 = vmul.f32 %v554, %v600
        %v602 = vmul.f32 %v557, %v600
        %v603 = vmul.f32 %v560, %v600
        %v604 = vmul.f32 %v563, %v600
        %v605 = vmul.f32 %v566, %v600
        %v606 = vmul.f32 %v569, %v600
        %v607 = vmul.f32 %v572, %v600
        %v608 = vmul.f32 %v575, %v600
        %v609 = vmul.f32 %v578, %v600
        %v610 = vmul.f32 %v581, %v600
        %v611 = vmul.f32 %v584, %v600
        %v612 = vmul.f32 %v587, %v600
        %v613 = vmul.f32 %v590, %v600
        %v614 = vmul.f32 %v593, %v600
        %v615 = vmul.f32 %v596, %v600
        %v616 = vmul.f32 %v599, %v600
        %v617 = vsub.f32 %v520, %v601
        %v618 = vsub.f32 %v521, %v601
        %v619 = vsub.f32 %v522, %v602
        %v620 = vsub.f32 %v523, %v602
        %v621 = vsub.f32 %v524, %v603
        %v622 = vsub.f32 %v525, %v603
        %v623 = vsub.f32 %v526, %v604
        %v624 = vsub.f32 %v527, %v604
        %v625 = vsub.f32 %v528, %v605
        %v626 = vsub.f32 %v529, %v605
        %v627 = vsub.f32 %v530, %v606
        %v628 = vsub.f32 %v531, %v606
        %v629 = vsub.f32 %v532, %v607
        %v630 = vsub.f32 %v533, %v607
        %v631 = vsub.f32 %v534, %v608
        %v632 = vsub.f32 %v535, %v608
        %v633 = vsub.f32 %v536, %v609
        %v634 = vsub.f32 %v537, %v609
        %v635 = vsub.f32 %v538, %v610
        %v636 = vsub.f32 %v539, %v610
        %v637 = vsub.f32 %v540, %v611
        %v638 = vsub.f32 %v541, %v611
        %v639 = vsub.f32 %v542, %v612
        %v640 = vsub.f32 %v543, %v612
        %v641 = vsub.f32 %v544, %v613
        %v642 = vsub.f32 %v545, %v613
        %v643 = vsub.f32 %v546, %v614
        %v644 = vsub.f32 %v547, %v614
        %v645 = vsub.f32 %v548, %v615
        %v646 = vsub.f32 %v549, %v615
        %v647 = vsub.f32 %v550, %v616
        %v648 = vsub.f32 %v551, %v616
        %v649 = vmul.f32 %v617, %v617
        %v650 = vmul.f32 %v618, %v618
        %v651 = vmul.f32 %v619, %v619
        %v652 = vmul.f32 %v620, %v620
        %v653 = vmul.f32 %v621, %v621
        %v654 = vmul.f32 %v622, %v622
        %v655 = vmul.f32 %v623, %v623
        %v656 = vmul.f32 %v624, %v624
        %v657 = vmul.f32 %v625, %v625
        %v658 = vmul.f32 %v626, %v626
        %v659 = vmul.f32 %v627, %v627
        %v660 = vmul.f32 %v628, %v628
        %v661 = vmul.f32 %v629, %v629
        %v662 = vmul.f32 %v630, %v630
        %v663 = vmul.f32 %v631, %v631
        %v664 = vmul.f32 %v632, %v632
        %v665 = vmul.f32 %v633, %v633
        %v666 = vmul.f32 %v634, %v634
        %v667 = vmul.f32 %v635, %v635
        %v668 = vmul.f32 %v636, %v636
        %v669 = vmul.f32 %v637, %v637
        %v670 = vmul.f32 %v638, %v638
        %v671 = vmul.f32 %v639, %v639
        %v672 = vmul.f32 %v640, %v640
        %v673 = vmul.f32 %v641, %v641
        %v674 = vmul.f32 %v642, %v642
        %v675 = vmul.f32 %v643, %v643
        %v676 = vmul.f32 %v644, %v644
        %v677 = vmul.f32 %v645, %v645
        %v678 = vmul.f32 %v646, %v646
        %v679 = vmul.f32 %v647, %v647
        %v680 = vmul.f32 %v648, %v648
        %v681 = vadd.f32 %v649, %v650
        %682 = vadd.xlane.f32.xlu0 %v681
        %v683 = vpop.xlane.xlu0 %682
        %v684 = vadd.f32 %v651, %v652
        %685 = vadd.xlane.f32.xlu0 %v684
        %v686 = vpop.xlane.xlu0 %685
        %v687 = vadd.f32 %v653, %v654
        %688 = vadd.xlane.f32.xlu0 %v687
        %v689 = vpop.xlane.xlu0 %688
        %v690 = vadd.f32 %v655, %v656
        %691 = vadd.xlane.f32.xlu0 %v690
        %v692 = vpop.xlane.xlu0 %691
        %v693 = vadd.f32 %v657, %v658
        %694 = vadd.xlane.f32.xlu0 %v693
        %v695 = vpop.xlane.xlu0 %694
        %v696 = vadd.f32 %v659, %v660
        %697 = vadd.xlane.f32.xlu0 %v696
        %v698 = vpop.xlane.xlu0 %697
        %v699 = vadd.f32 %v661, %v662
        %700 = vadd.xlane.f32.xlu0 %v699
        %v701 = vpop.xlane.xlu0 %700
        %v702 = vadd.f32 %v663, %v664
        %703 = vadd.xlane.f32.xlu0 %v702
        %v704 = vpop.xlane.xlu0 %703
        %v705 = vadd.f32 %v665, %v666
        %706 = vadd.xlane.f32.xlu0 %v705
        %v707 = vpop.xlane.xlu0 %706
        %v708 = vadd.f32 %v667, %v668
        %709 = vadd.xlane.f32.xlu0 %v708
        %v710 = vpop.xlane.xlu0 %709
        %v711 = vadd.f32 %v669, %v670
        %712 = vadd.xlane.f32.xlu0 %v711
        %v713 = vpop.xlane.xlu0 %712
        %v714 = vadd.f32 %v671, %v672
        %715 = vadd.xlane.f32.xlu0 %v714
        %v716 = vpop.xlane.xlu0 %715
        %v717 = vadd.f32 %v673, %v674
        %718 = vadd.xlane.f32.xlu0 %v717
        %v719 = vpop.xlane.xlu0 %718
        %v720 = vadd.f32 %v675, %v676
        %721 = vadd.xlane.f32.xlu0 %v720
        %v722 = vpop.xlane.xlu0 %721
        %v723 = vadd.f32 %v677, %v678
        %724 = vadd.xlane.f32.xlu0 %v723
        %v725 = vpop.xlane.xlu0 %724
        %v726 = vadd.f32 %v679, %v680
        %727 = vadd.xlane.f32.xlu0 %v726
        %v728 = vpop.xlane.xlu0 %727
        %v729 = vmul.f32 %v683, %v600
        %v730 = vmul.f32 %v686, %v600
        %v731 = vmul.f32 %v689, %v600
        %v732 = vmul.f32 %v692, %v600
        %v733 = vmul.f32 %v695, %v600
        %v734 = vmul.f32 %v698, %v600
        %v735 = vmul.f32 %v701, %v600
        %v736 = vmul.f32 %v704, %v600
        %v737 = vmul.f32 %v707, %v600
        %v738 = vmul.f32 %v710, %v600
        %v739 = vmul.f32 %v713, %v600
        %v740 = vmul.f32 %v716, %v600
        %v741 = vmul.f32 %v719, %v600
        %v742 = vmul.f32 %v722, %v600
        %v743 = vmul.f32 %v725, %v600
        %v744 = vmul.f32 %v728, %v600
        %v745 = vadd.f32 %v729, 1e-05
        %v746 = vadd.f32 %v730, 1e-05
        %v747 = vadd.f32 %v731, 1e-05
        %v748 = vadd.f32 %v732, 1e-05
        %v749 = vadd.f32 %v733, 1e-05
        %v750 = vadd.f32 %v734, 1e-05
        %v751 = vadd.f32 %v735, 1e-05
        %v752 = vadd.f32 %v736, 1e-05
        %v753 = vadd.f32 %v737, 1e-05
        %v754 = vadd.f32 %v738, 1e-05
        %v755 = vadd.f32 %v739, 1e-05
        %v756 = vadd.f32 %v740, 1e-05
        %v757 = vadd.f32 %v741, 1e-05
        %v758 = vadd.f32 %v742, 1e-05
        %v759 = vadd.f32 %v743, 1e-05
        %v760 = vadd.f32 %v744, 1e-05
        %v761 = vrsqrt.pop %v745
        %v762 = vrsqrt.pop %v746
        %v763 = vrsqrt.pop %v747
        %v764 = vrsqrt.pop %v748
        %v765 = vrsqrt.pop %v749
        %v766 = vrsqrt.pop %v750
        %v767 = vrsqrt.pop %v751
        %v768 = vrsqrt.pop %v752
        %v769 = vrsqrt.pop %v753
        %v770 = vrsqrt.pop %v754
        %v771 = vrsqrt.pop %v755
        %v772 = vrsqrt.pop %v756
        %v773 = vrsqrt.pop %v757
        %v774 = vrsqrt.pop %v758
        %v775 = vrsqrt.pop %v759
        %v776 = vrsqrt.pop %v760
        %v777 = vmul.f32 %v617, %v761
        %v778 = vmul.f32 %v618, %v761
        %v779 = vmul.f32 %v619, %v762
        %v780 = vmul.f32 %v620, %v762
        %v781 = vmul.f32 %v621, %v763
        %v782 = vmul.f32 %v622, %v763
        %v783 = vmul.f32 %v623, %v764
        %v784 = vmul.f32 %v624, %v764
        %v785 = vmul.f32 %v625, %v765
        %v786 = vmul.f32 %v626, %v765
        %v787 = vmul.f32 %v627, %v766
        %v788 = vmul.f32 %v628, %v766
        %v789 = vmul.f32 %v629, %v767
        %v790 = vmul.f32 %v630, %v767
        %v791 = vmul.f32 %v631, %v768
        %v792 = vmul.f32 %v632, %v768
        %v793 = vmul.f32 %v633, %v769
        %v794 = vmul.f32 %v634, %v769
        %v795 = vmul.f32 %v635, %v770
        %v796 = vmul.f32 %v636, %v770
        %v797 = vmul.f32 %v637, %v771
        %v798 = vmul.f32 %v638, %v771
        %v799 = vmul.f32 %v639, %v772
        %v800 = vmul.f32 %v640, %v772
        %v801 = vmul.f32 %v641, %v773
        %v802 = vmul.f32 %v642, %v773
        %v803 = vmul.f32 %v643, %v774
        %v804 = vmul.f32 %v644, %v774
        %v805 = vmul.f32 %v645, %v775
        %v806 = vmul.f32 %v646, %v775
        %v807 = vmul.f32 %v647, %v776
        %v808 = vmul.f32 %v648, %v776
        %v809 = vld [vmem:[%s1] sm:$0x3]
        %v811 = vlaneseq
        %v812 = vshrl.u32 %v811, 7
        %v813 = vsub.s32 0, %v812
        %v814 = vrot.slane %v809, %v813
        %v815 = vlaneseq
        %v816 = vshrl.u32 %v815, 7
        %v817 = vsub.s32 1, %v816
        %v818 = vrot.slane %v809, %v817
        %v821 = vmul.f32 %v777, %v814
        %v822 = vmul.f32 %v778, %v818
        %v823 = vmul.f32 %v779, %v814
        %v824 = vmul.f32 %v780, %v818
        %v825 = vmul.f32 %v781, %v814
        %v826 = vmul.f32 %v782, %v818
        %v827 = vmul.f32 %v783, %v814
        %v828 = vmul.f32 %v784, %v818
        %v829 = vmul.f32 %v785, %v814
        %v830 = vmul.f32 %v786, %v818
        %v831 = vmul.f32 %v787, %v814
        %v832 = vmul.f32 %v788, %v818
        %v833 = vmul.f32 %v789, %v814
        %v834 = vmul.f32 %v790, %v818
        %v835 = vmul.f32 %v791, %v814
        %v836 = vmul.f32 %v792, %v818
        %v837 = vmul.f32 %v793, %v814
        %v838 = vmul.f32 %v794, %v818
        %v839 = vmul.f32 %v795, %v814
        %v840 = vmul.f32 %v796, %v818
        %v841 = vmul.f32 %v797, %v814
        %v842 = vmul.f32 %v798, %v818
        %v843 = vmul.f32 %v799, %v814
        %v844 = vmul.f32 %v800, %v818
        %v845 = vmul.f32 %v801, %v814
        %v846 = vmul.f32 %v802, %v818
        %v847 = vmul.f32 %v803, %v814
        %v848 = vmul.f32 %v804, %v818
        %v849 = vmul.f32 %v805, %v814
        %v850 = vmul.f32 %v806, %v818
        %v851 = vmul.f32 %v807, %v814
        %v852 = vmul.f32 %v808, %v818
        %v853 = vld [vmem:[%s2] sm:$0x3]
        %v855 = vlaneseq
        %v856 = vshrl.u32 %v855, 7
        %v857 = vsub.s32 0, %v856
        %v858 = vrot.slane %v853, %v857
        %v859 = vlaneseq
        %v860 = vshrl.u32 %v859, 7
        %v861 = vsub.s32 1, %v860
        %v862 = vrot.slane %v853, %v861
        %v865 = vadd.f32 %v821, %v858
        %v866 = vadd.f32 %v822, %v862
        %v867 = vadd.f32 %v823, %v858
        %v868 = vadd.f32 %v824, %v862
        %v869 = vadd.f32 %v825, %v858
        %v870 = vadd.f32 %v826, %v862
        %v871 = vadd.f32 %v827, %v858
        %v872 = vadd.f32 %v828, %v862
        %v873 = vadd.f32 %v829, %v858
        %v874 = vadd.f32 %v830, %v862
        %v875 = vadd.f32 %v831, %v858
        %v876 = vadd.f32 %v832, %v862
        %v877 = vadd.f32 %v833, %v858
        %v878 = vadd.f32 %v834, %v862
        %v879 = vadd.f32 %v835, %v858
        %v880 = vadd.f32 %v836, %v862
        %v881 = vadd.f32 %v837, %v858
        %v882 = vadd.f32 %v838, %v862
        %v883 = vadd.f32 %v839, %v858
        %v884 = vadd.f32 %v840, %v862
        %v885 = vadd.f32 %v841, %v858
        %v886 = vadd.f32 %v842, %v862
        %v887 = vadd.f32 %v843, %v858
        %v888 = vadd.f32 %v844, %v862
        %v889 = vadd.f32 %v845, %v858
        %v890 = vadd.f32 %v846, %v862
        %v891 = vadd.f32 %v847, %v858
        %v892 = vadd.f32 %v848, %v862
        %v893 = vadd.f32 %v849, %v858
        %v894 = vadd.f32 %v850, %v862
        %v895 = vadd.f32 %v851, %v858
        %v896 = vadd.f32 %v852, %v862
        %v897 = vpack.c.bf16 %v867, %v865
        %v898 = vpack.c.bf16 %v868, %v866
        %v899 = vpack.c.bf16 %v871, %v869
        %v900 = vpack.c.bf16 %v872, %v870
        %v901 = vpack.c.bf16 %v875, %v873
        %v902 = vpack.c.bf16 %v876, %v874
        %v903 = vpack.c.bf16 %v879, %v877
        %v904 = vpack.c.bf16 %v880, %v878
        %v905 = vpack.c.bf16 %v883, %v881
        %v906 = vpack.c.bf16 %v884, %v882
        %v907 = vpack.c.bf16 %v887, %v885
        %v908 = vpack.c.bf16 %v888, %v886
        %v909 = vpack.c.bf16 %v891, %v889
        %v910 = vpack.c.bf16 %v892, %v890
        %v911 = vpack.c.bf16 %v895, %v893
        %v912 = vpack.c.bf16 %v896, %v894
        %v913 = vld [vmem:[#allocation5] sm:$0xff]
        %v914 = vld [vmem:[#allocation5 + $0x8] sm:$0xff]
        %v915 = vld [vmem:[#allocation5 + $0x10] sm:$0xff]
        %v916 = vld [vmem:[#allocation5 + $0x18] sm:$0xff]
        %v917 = vld [vmem:[#allocation5 + $0x20] sm:$0xff]
        %v918 = vld [vmem:[#allocation5 + $0x28] sm:$0xff]
        %v919 = vld [vmem:[#allocation5 + $0x30] sm:$0xff]
        %v920 = vld [vmem:[#allocation5 + $0x38] sm:$0xff]
        %v921 = vld [vmem:[#allocation5 + $0x40] sm:$0xff]
        %v922 = vld [vmem:[#allocation5 + $0x48] sm:$0xff]
        %v923 = vld [vmem:[#allocation5 + $0x50] sm:$0xff]
        %v924 = vld [vmem:[#allocation5 + $0x58] sm:$0xff]
        %v925 = vld [vmem:[#allocation5 + $0x60] sm:$0xff]
        %v926 = vld [vmem:[#allocation5 + $0x68] sm:$0xff]
        %v927 = vld [vmem:[#allocation5 + $0x70] sm:$0xff]
        %v928 = vld [vmem:[#allocation5 + $0x78] sm:$0xff]
        %v929 = vld [vmem:[#allocation5 + $0x80] sm:$0xff]
        %v930 = vld [vmem:[#allocation5 + $0x88] sm:$0xff]
        %v931 = vld [vmem:[#allocation5 + $0x90] sm:$0xff]
        %v932 = vld [vmem:[#allocation5 + $0x98] sm:$0xff]
        %v933 = vld [vmem:[#allocation5 + $0xa0] sm:$0xff]
        %v934 = vld [vmem:[#allocation5 + $0xa8] sm:$0xff]
        %v935 = vld [vmem:[#allocation5 + $0xb0] sm:$0xff]
        %v936 = vld [vmem:[#allocation5 + $0xb8] sm:$0xff]
        %v937 = vld [vmem:[#allocation5 + $0xc0] sm:$0xff]
        %v938 = vld [vmem:[#allocation5 + $0xc8] sm:$0xff]
        %v939 = vld [vmem:[#allocation5 + $0xd0] sm:$0xff]
        %v940 = vld [vmem:[#allocation5 + $0xd8] sm:$0xff]
        %v941 = vld [vmem:[#allocation5 + $0xe0] sm:$0xff]
        %v942 = vld [vmem:[#allocation5 + $0xe8] sm:$0xff]
        %v943 = vld [vmem:[#allocation5 + $0xf0] sm:$0xff]
        %v944 = vld [vmem:[#allocation5 + $0xf8] sm:$0xff]
        %v945 = vld [vmem:[#allocation5 + $0x100] sm:$0xff]
        %v946 = vld [vmem:[#allocation5 + $0x108] sm:$0xff]
        %v947 = vld [vmem:[#allocation5 + $0x110] sm:$0xff]
        %v948 = vld [vmem:[#allocation5 + $0x118] sm:$0xff]
        %v949 = vld [vmem:[#allocation5 + $0x120] sm:$0xff]
        %v950 = vld [vmem:[#allocation5 + $0x128] sm:$0xff]
        %v951 = vld [vmem:[#allocation5 + $0x130] sm:$0xff]
        %v952 = vld [vmem:[#allocation5 + $0x138] sm:$0xff]
        %v953 = vld [vmem:[#allocation5 + $0x140] sm:$0xff]
        %v954 = vld [vmem:[#allocation5 + $0x148] sm:$0xff]
        %v955 = vld [vmem:[#allocation5 + $0x150] sm:$0xff]
        %v956 = vld [vmem:[#allocation5 + $0x158] sm:$0xff]
        %v957 = vld [vmem:[#allocation5 + $0x160] sm:$0xff]
        %v958 = vld [vmem:[#allocation5 + $0x168] sm:$0xff]
        %v959 = vld [vmem:[#allocation5 + $0x170] sm:$0xff]
        %v960 = vld [vmem:[#allocation5 + $0x178] sm:$0xff]
        %v961 = vld [vmem:[#allocation5 + $0x180] sm:$0xff]
        %v962 = vld [vmem:[#allocation5 + $0x188] sm:$0xff]
        %v963 = vld [vmem:[#allocation5 + $0x190] sm:$0xff]
        %v964 = vld [vmem:[#allocation5 + $0x198] sm:$0xff]
        %v965 = vld [vmem:[#allocation5 + $0x1a0] sm:$0xff]
        %v966 = vld [vmem:[#allocation5 + $0x1a8] sm:$0xff]
        %v967 = vld [vmem:[#allocation5 + $0x1b0] sm:$0xff]
        %v968 = vld [vmem:[#allocation5 + $0x1b8] sm:$0xff]
        %v969 = vld [vmem:[#allocation5 + $0x1c0] sm:$0xff]
        %v970 = vld [vmem:[#allocation5 + $0x1c8] sm:$0xff]
        %v971 = vld [vmem:[#allocation5 + $0x1d0] sm:$0xff]
        %v972 = vld [vmem:[#allocation5 + $0x1d8] sm:$0xff]
        %v973 = vld [vmem:[#allocation5 + $0x1e0] sm:$0xff]
        %v974 = vld [vmem:[#allocation5 + $0x1e8] sm:$0xff]
        %v975 = vld [vmem:[#allocation5 + $0x1f0] sm:$0xff]
        %v976 = vld [vmem:[#allocation5 + $0x1f8] sm:$0xff]
        %v977 = vld [vmem:[#allocation5 + $0x200] sm:$0xff]
        %v978 = vld [vmem:[#allocation5 + $0x208] sm:$0xff]
        %v979 = vld [vmem:[#allocation5 + $0x210] sm:$0xff]
        %v980 = vld [vmem:[#allocation5 + $0x218] sm:$0xff]
        %v981 = vld [vmem:[#allocation5 + $0x220] sm:$0xff]
        %v982 = vld [vmem:[#allocation5 + $0x228] sm:$0xff]
        %v983 = vld [vmem:[#allocation5 + $0x230] sm:$0xff]
        %v984 = vld [vmem:[#allocation5 + $0x238] sm:$0xff]
        %v985 = vld [vmem:[#allocation5 + $0x240] sm:$0xff]
        %v986 = vld [vmem:[#allocation5 + $0x248] sm:$0xff]
        %v987 = vld [vmem:[#allocation5 + $0x250] sm:$0xff]
        %v988 = vld [vmem:[#allocation5 + $0x258] sm:$0xff]
        %v989 = vld [vmem:[#allocation5 + $0x260] sm:$0xff]
        %v990 = vld [vmem:[#allocation5 + $0x268] sm:$0xff]
        %v991 = vld [vmem:[#allocation5 + $0x270] sm:$0xff]
        %v992 = vld [vmem:[#allocation5 + $0x278] sm:$0xff]
        %v993 = vld [vmem:[#allocation5 + $0x280] sm:$0xff]
        %v994 = vld [vmem:[#allocation5 + $0x288] sm:$0xff]
        %v995 = vld [vmem:[#allocation5 + $0x290] sm:$0xff]
        %v996 = vld [vmem:[#allocation5 + $0x298] sm:$0xff]
        %v997 = vld [vmem:[#allocation5 + $0x2a0] sm:$0xff]
        %v998 = vld [vmem:[#allocation5 + $0x2a8] sm:$0xff]
        %v999 = vld [vmem:[#allocation5 + $0x2b0] sm:$0xff]
        %v1000 = vld [vmem:[#allocation5 + $0x2b8] sm:$0xff]
        %v1001 = vld [vmem:[#allocation5 + $0x2c0] sm:$0xff]
        %v1002 = vld [vmem:[#allocation5 + $0x2c8] sm:$0xff]
        %v1003 = vld [vmem:[#allocation5 + $0x2d0] sm:$0xff]
        %v1004 = vld [vmem:[#allocation5 + $0x2d8] sm:$0xff]
        %v1005 = vld [vmem:[#allocation5 + $0x2e0] sm:$0xff]
        %v1006 = vld [vmem:[#allocation5 + $0x2e8] sm:$0xff]
        %v1007 = vld [vmem:[#allocation5 + $0x2f0] sm:$0xff]
        %v1008 = vld [vmem:[#allocation5 + $0x2f8] sm:$0xff]
        %v1009 = vld [vmem:[#allocation5 + $0x300] sm:$0xff]
        %v1010 = vld [vmem:[#allocation5 + $0x308] sm:$0xff]
        %v1011 = vld [vmem:[#allocation5 + $0x310] sm:$0xff]
        %v1012 = vld [vmem:[#allocation5 + $0x318] sm:$0xff]
        %v1013 = vld [vmem:[#allocation5 + $0x320] sm:$0xff]
        %v1014 = vld [vmem:[#allocation5 + $0x328] sm:$0xff]
        %v1015 = vld [vmem:[#allocation5 + $0x330] sm:$0xff]
        %v1016 = vld [vmem:[#allocation5 + $0x338] sm:$0xff]
        %v1017 = vld [vmem:[#allocation5 + $0x340] sm:$0xff]
        %v1018 = vld [vmem:[#allocation5 + $0x348] sm:$0xff]
        %v1019 = vld [vmem:[#allocation5 + $0x350] sm:$0xff]
        %v1020 = vld [vmem:[#allocation5 + $0x358] sm:$0xff]
        %v1021 = vld [vmem:[#allocation5 + $0x360] sm:$0xff]
        %v1022 = vld [vmem:[#allocation5 + $0x368] sm:$0xff]
        %v1023 = vld [vmem:[#allocation5 + $0x370] sm:$0xff]
        %v1024 = vld [vmem:[#allocation5 + $0x378] sm:$0xff]
        %v1025 = vld [vmem:[#allocation5 + $0x380] sm:$0xff]
        %v1026 = vld [vmem:[#allocation5 + $0x388] sm:$0xff]
        %v1027 = vld [vmem:[#allocation5 + $0x390] sm:$0xff]
        %v1028 = vld [vmem:[#allocation5 + $0x398] sm:$0xff]
        %v1029 = vld [vmem:[#allocation5 + $0x3a0] sm:$0xff]
        %v1030 = vld [vmem:[#allocation5 + $0x3a8] sm:$0xff]
        %v1031 = vld [vmem:[#allocation5 + $0x3b0] sm:$0xff]
        %v1032 = vld [vmem:[#allocation5 + $0x3b8] sm:$0xff]
        %v1033 = vld [vmem:[#allocation5 + $0x3c0] sm:$0xff]
        %v1034 = vld [vmem:[#allocation5 + $0x3c8] sm:$0xff]
        %v1035 = vld [vmem:[#allocation5 + $0x3d0] sm:$0xff]
        %v1036 = vld [vmem:[#allocation5 + $0x3d8] sm:$0xff]
        %v1037 = vld [vmem:[#allocation5 + $0x3e0] sm:$0xff]
        %v1038 = vld [vmem:[#allocation5 + $0x3e8] sm:$0xff]
        %v1039 = vld [vmem:[#allocation5 + $0x3f0] sm:$0xff]
        %v1040 = vld [vmem:[#allocation5 + $0x3f8] sm:$0xff]
        %v1041 = vld [vmem:[%s4] sm:$0xff]
        %v1043 = vlaneseq
        %v1044 = vshrl.u32 %v1043, 7
        %v1045 = vsub.s32 0, %v1044
        %v1046 = vrot.slane %v1041, %v1045
        %v1047 = vlaneseq
        %v1048 = vshrl.u32 %v1047, 7
        %v1049 = vsub.s32 1, %v1048
        %v1050 = vrot.slane %v1041, %v1049
        %v1051 = vlaneseq
        %v1052 = vshrl.u32 %v1051, 7
        %v1053 = vsub.s32 2, %v1052
        %v1054 = vrot.slane %v1041, %v1053
        %v1055 = vlaneseq
        %v1056 = vshrl.u32 %v1055, 7
        %v1057 = vsub.s32 3, %v1056
        %v1058 = vrot.slane %v1041, %v1057
        %v1059 = vlaneseq
        %v1060 = vshrl.u32 %v1059, 7
        %v1061 = vsub.s32 4, %v1060
        %v1062 = vrot.slane %v1041, %v1061
        %v1063 = vlaneseq
        %v1064 = vshrl.u32 %v1063, 7
        %v1065 = vsub.s32 5, %v1064
        %v1066 = vrot.slane %v1041, %v1065
        %v1067 = vlaneseq
        %v1068 = vshrl.u32 %v1067, 7
        %v1069 = vsub.s32 6, %v1068
        %v1070 = vrot.slane %v1041, %v1069
        %v1071 = vlaneseq
        %v1072 = vshrl.u32 %v1071, 7
        %v1073 = vsub.s32 7, %v1072
        %v1074 = vrot.slane %v1041, %v1073
        %v1211 = vunpack.c.l.b16 %v913
        %v1212 = vunpack.c.h.b16 %v913
        %v1213 = vunpack.c.l.b16 %v914
        %v1214 = vunpack.c.h.b16 %v914
        %v1215 = vunpack.c.l.b16 %v915
        %v1216 = vunpack.c.h.b16 %v915
        %v1217 = vunpack.c.l.b16 %v916
        %v1218 = vunpack.c.h.b16 %v916
        %v1219 = vunpack.c.l.b16 %v917
        %v1220 = vunpack.c.h.b16 %v917
        %v1221 = vunpack.c.l.b16 %v918
        %v1222 = vunpack.c.h.b16 %v918
        %v1223 = vunpack.c.l.b16 %v919
        %v1224 = vunpack.c.h.b16 %v919
        %v1225 = vunpack.c.l.b16 %v920
        %v1226 = vunpack.c.h.b16 %v920
        %v1227 = vunpack.c.l.b16 %v921
        %v1228 = vunpack.c.h.b16 %v921
        %v1229 = vunpack.c.l.b16 %v922
        %v1230 = vunpack.c.h.b16 %v922
        %v1231 = vunpack.c.l.b16 %v923
        %v1232 = vunpack.c.h.b16 %v923
        %v1233 = vunpack.c.l.b16 %v924
        %v1234 = vunpack.c.h.b16 %v924
        %v1235 = vunpack.c.l.b16 %v925
        %v1236 = vunpack.c.h.b16 %v925
        %v1237 = vunpack.c.l.b16 %v926
        %v1238 = vunpack.c.h.b16 %v926
        %v1239 = vunpack.c.l.b16 %v927
        %v1240 = vunpack.c.h.b16 %v927
        %v1241 = vunpack.c.l.b16 %v928
        %v1242 = vunpack.c.h.b16 %v928
        %v1243 = vunpack.c.l.b16 %v929
        %v1244 = vunpack.c.h.b16 %v929
        %v1245 = vunpack.c.l.b16 %v930
        %v1246 = vunpack.c.h.b16 %v930
        %v1247 = vunpack.c.l.b16 %v931
        %v1248 = vunpack.c.h.b16 %v931
        %v1249 = vunpack.c.l.b16 %v932
        %v1250 = vunpack.c.h.b16 %v932
        %v1251 = vunpack.c.l.b16 %v933
        %v1252 = vunpack.c.h.b16 %v933
        %v1253 = vunpack.c.l.b16 %v934
        %v1254 = vunpack.c.h.b16 %v934
        %v1255 = vunpack.c.l.b16 %v935
        %v1256 = vunpack.c.h.b16 %v935
        %v1257 = vunpack.c.l.b16 %v936
        %v1258 = vunpack.c.h.b16 %v936
        %v1259 = vunpack.c.l.b16 %v937
        %v1260 = vunpack.c.h.b16 %v937
        %v1261 = vunpack.c.l.b16 %v938
        %v1262 = vunpack.c.h.b16 %v938
        %v1263 = vunpack.c.l.b16 %v939
        %v1264 = vunpack.c.h.b16 %v939
        %v1265 = vunpack.c.l.b16 %v940
        %v1266 = vunpack.c.h.b16 %v940
        %v1267 = vunpack.c.l.b16 %v941
        %v1268 = vunpack.c.h.b16 %v941
        %v1269 = vunpack.c.l.b16 %v942
        %v1270 = vunpack.c.h.b16 %v942
        %v1271 = vunpack.c.l.b16 %v943
        %v1272 = vunpack.c.h.b16 %v943
        %v1273 = vunpack.c.l.b16 %v944
        %v1274 = vunpack.c.h.b16 %v944
        %v1275 = vunpack.c.l.b16 %v945
        %v1276 = vunpack.c.h.b16 %v945
        %v1277 = vunpack.c.l.b16 %v946
        %v1278 = vunpack.c.h.b16 %v946
        %v1279 = vunpack.c.l.b16 %v947
        %v1280 = vunpack.c.h.b16 %v947
        %v1281 = vunpack.c.l.b16 %v948
        %v1282 = vunpack.c.h.b16 %v948
        %v1283 = vunpack.c.l.b16 %v949
        %v1284 = vunpack.c.h.b16 %v949
        %v1285 = vunpack.c.l.b16 %v950
        %v1286 = vunpack.c.h.b16 %v950
        %v1287 = vunpack.c.l.b16 %v951
        %v1288 = vunpack.c.h.b16 %v951
        %v1289 = vunpack.c.l.b16 %v952
        %v1290 = vunpack.c.h.b16 %v952
        %v1291 = vunpack.c.l.b16 %v953
        %v1292 = vunpack.c.h.b16 %v953
        %v1293 = vunpack.c.l.b16 %v954
        %v1294 = vunpack.c.h.b16 %v954
        %v1295 = vunpack.c.l.b16 %v955
        %v1296 = vunpack.c.h.b16 %v955
        %v1297 = vunpack.c.l.b16 %v956
        %v1298 = vunpack.c.h.b16 %v956
        %v1299 = vunpack.c.l.b16 %v957
        %v1300 = vunpack.c.h.b16 %v957
        %v1301 = vunpack.c.l.b16 %v958
        %v1302 = vunpack.c.h.b16 %v958
        %v1303 = vunpack.c.l.b16 %v959
        %v1304 = vunpack.c.h.b16 %v959
        %v1305 = vunpack.c.l.b16 %v960
        %v1306 = vunpack.c.h.b16 %v960
        %v1307 = vunpack.c.l.b16 %v961
        %v1308 = vunpack.c.h.b16 %v961
        %v1309 = vunpack.c.l.b16 %v962
        %v1310 = vunpack.c.h.b16 %v962
        %v1311 = vunpack.c.l.b16 %v963
        %v1312 = vunpack.c.h.b16 %v963
        %v1313 = vunpack.c.l.b16 %v964
        %v1314 = vunpack.c.h.b16 %v964
        %v1315 = vunpack.c.l.b16 %v965
        %v1316 = vunpack.c.h.b16 %v965
        %v1317 = vunpack.c.l.b16 %v966
        %v1318 = vunpack.c.h.b16 %v966
        %v1319 = vunpack.c.l.b16 %v967
        %v1320 = vunpack.c.h.b16 %v967
        %v1321 = vunpack.c.l.b16 %v968
        %v1322 = vunpack.c.h.b16 %v968
        %v1323 = vunpack.c.l.b16 %v969
        %v1324 = vunpack.c.h.b16 %v969
        %v1325 = vunpack.c.l.b16 %v970
        %v1326 = vunpack.c.h.b16 %v970
        %v1327 = vunpack.c.l.b16 %v971
        %v1328 = vunpack.c.h.b16 %v971
        %v1329 = vunpack.c.l.b16 %v972
        %v1330 = vunpack.c.h.b16 %v972
        %v1331 = vunpack.c.l.b16 %v973
        %v1332 = vunpack.c.h.b16 %v973
        %v1333 = vunpack.c.l.b16 %v974
        %v1334 = vunpack.c.h.b16 %v974
        %v1335 = vunpack.c.l.b16 %v975
        %v1336 = vunpack.c.h.b16 %v975
        %v1337 = vunpack.c.l.b16 %v976
        %v1338 = vunpack.c.h.b16 %v976
        %v1339 = vunpack.c.l.b16 %v977
        %v1340 = vunpack.c.h.b16 %v977
        %v1341 = vunpack.c.l.b16 %v978
        %v1342 = vunpack.c.h.b16 %v978
        %v1343 = vunpack.c.l.b16 %v979
        %v1344 = vunpack.c.h.b16 %v979
        %v1345 = vunpack.c.l.b16 %v980
        %v1346 = vunpack.c.h.b16 %v980
        %v1347 = vunpack.c.l.b16 %v981
        %v1348 = vunpack.c.h.b16 %v981
        %v1349 = vunpack.c.l.b16 %v982
        %v1350 = vunpack.c.h.b16 %v982
        %v1351 = vunpack.c.l.b16 %v983
        %v1352 = vunpack.c.h.b16 %v983
        %v1353 = vunpack.c.l.b16 %v984
        %v1354 = vunpack.c.h.b16 %v984
        %v1355 = vunpack.c.l.b16 %v985
        %v1356 = vunpack.c.h.b16 %v985
        %v1357 = vunpack.c.l.b16 %v986
        %v1358 = vunpack.c.h.b16 %v986
        %v1359 = vunpack.c.l.b16 %v987
        %v1360 = vunpack.c.h.b16 %v987
        %v1361 = vunpack.c.l.b16 %v988
        %v1362 = vunpack.c.h.b16 %v988
        %v1363 = vunpack.c.l.b16 %v989
        %v1364 = vunpack.c.h.b16 %v989
        %v1365 = vunpack.c.l.b16 %v990
        %v1366 = vunpack.c.h.b16 %v990
        %v1367 = vunpack.c.l.b16 %v991
        %v1368 = vunpack.c.h.b16 %v991
        %v1369 = vunpack.c.l.b16 %v992
        %v1370 = vunpack.c.h.b16 %v992
        %v1371 = vunpack.c.l.b16 %v993
        %v1372 = vunpack.c.h.b16 %v993
        %v1373 = vunpack.c.l.b16 %v994
        %v1374 = vunpack.c.h.b16 %v994
        %v1375 = vunpack.c.l.b16 %v995
        %v1376 = vunpack.c.h.b16 %v995
        %v1377 = vunpack.c.l.b16 %v996
        %v1378 = vunpack.c.h.b16 %v996
        %v1379 = vunpack.c.l.b16 %v997
        %v1380 = vunpack.c.h.b16 %v997
        %v1381 = vunpack.c.l.b16 %v998
        %v1382 = vunpack.c.h.b16 %v998
        %v1383 = vunpack.c.l.b16 %v999
        %v1384 = vunpack.c.h.b16 %v999
        %v1385 = vunpack.c.l.b16 %v1000
        %v1386 = vunpack.c.h.b16 %v1000
        %v1387 = vunpack.c.l.b16 %v1001
        %v1388 = vunpack.c.h.b16 %v1001
        %v1389 = vunpack.c.l.b16 %v1002
        %v1390 = vunpack.c.h.b16 %v1002
        %v1391 = vunpack.c.l.b16 %v1003
        %v1392 = vunpack.c.h.b16 %v1003
        %v1393 = vunpack.c.l.b16 %v1004
        %v1394 = vunpack.c.h.b16 %v1004
        %v1395 = vunpack.c.l.b16 %v1005
        %v1396 = vunpack.c.h.b16 %v1005
        %v1397 = vunpack.c.l.b16 %v1006
        %v1398 = vunpack.c.h.b16 %v1006
        %v1399 = vunpack.c.l.b16 %v1007
        %v1400 = vunpack.c.h.b16 %v1007
        %v1401 = vunpack.c.l.b16 %v1008
        %v1402 = vunpack.c.h.b16 %v1008
        %v1403 = vunpack.c.l.b16 %v1009
        %v1404 = vunpack.c.h.b16 %v1009
        %v1405 = vunpack.c.l.b16 %v1010
        %v1406 = vunpack.c.h.b16 %v1010
        %v1407 = vunpack.c.l.b16 %v1011
        %v1408 = vunpack.c.h.b16 %v1011
        %v1409 = vunpack.c.l.b16 %v1012
        %v1410 = vunpack.c.h.b16 %v1012
        %v1411 = vunpack.c.l.b16 %v1013
        %v1412 = vunpack.c.h.b16 %v1013
        %v1413 = vunpack.c.l.b16 %v1014
        %v1414 = vunpack.c.h.b16 %v1014
        %v1415 = vunpack.c.l.b16 %v1015
        %v1416 = vunpack.c.h.b16 %v1015
        %v1417 = vunpack.c.l.b16 %v1016
        %v1418 = vunpack.c.h.b16 %v1016
        %v1419 = vunpack.c.l.b16 %v1017
        %v1420 = vunpack.c.h.b16 %v1017
        %v1421 = vunpack.c.l.b16 %v1018
        %v1422 = vunpack.c.h.b16 %v1018
        %v1423 = vunpack.c.l.b16 %v1019
        %v1424 = vunpack.c.h.b16 %v1019
        %v1425 = vunpack.c.l.b16 %v1020
        %v1426 = vunpack.c.h.b16 %v1020
        %v1427 = vunpack.c.l.b16 %v1021
        %v1428 = vunpack.c.h.b16 %v1021
        %v1429 = vunpack.c.l.b16 %v1022
        %v1430 = vunpack.c.h.b16 %v1022
        %v1431 = vunpack.c.l.b16 %v1023
        %v1432 = vunpack.c.h.b16 %v1023
        %v1433 = vunpack.c.l.b16 %v1024
        %v1434 = vunpack.c.h.b16 %v1024
        %v1435 = vunpack.c.l.b16 %v1025
        %v1436 = vunpack.c.h.b16 %v1025
        %v1437 = vunpack.c.l.b16 %v1026
        %v1438 = vunpack.c.h.b16 %v1026
        %v1439 = vunpack.c.l.b16 %v1027
        %v1440 = vunpack.c.h.b16 %v1027
        %v1441 = vunpack.c.l.b16 %v1028
        %v1442 = vunpack.c.h.b16 %v1028
        %v1443 = vunpack.c.l.b16 %v1029
        %v1444 = vunpack.c.h.b16 %v1029
        %v1445 = vunpack.c.l.b16 %v1030
        %v1446 = vunpack.c.h.b16 %v1030
        %v1447 = vunpack.c.l.b16 %v1031
        %v1448 = vunpack.c.h.b16 %v1031
        %v1449 = vunpack.c.l.b16 %v1032
        %v1450 = vunpack.c.h.b16 %v1032
        %v1451 = vunpack.c.l.b16 %v1033
        %v1452 = vunpack.c.h.b16 %v1033
        %v1453 = vunpack.c.l.b16 %v1034
        %v1454 = vunpack.c.h.b16 %v1034
        %v1455 = vunpack.c.l.b16 %v1035
        %v1456 = vunpack.c.h.b16 %v1035
        %v1457 = vunpack.c.l.b16 %v1036
        %v1458 = vunpack.c.h.b16 %v1036
        %v1459 = vunpack.c.l.b16 %v1037
        %v1460 = vunpack.c.h.b16 %v1037
        %v1461 = vunpack.c.l.b16 %v1038
        %v1462 = vunpack.c.h.b16 %v1038
        %v1463 = vunpack.c.l.b16 %v1039
        %v1464 = vunpack.c.h.b16 %v1039
        %v1465 = vunpack.c.l.b16 %v1040
        %v1466 = vunpack.c.h.b16 %v1040
        %v1467 = vpack.c.b16 %v1219, %v1211
        %v1468 = vpack.c.b16 %v1220, %v1212
        %v1469 = vpack.c.b16 %v1221, %v1213
        %v1470 = vpack.c.b16 %v1222, %v1214
        %v1471 = vpack.c.b16 %v1223, %v1215
        %v1472 = vpack.c.b16 %v1224, %v1216
        %v1473 = vpack.c.b16 %v1225, %v1217
        %v1474 = vpack.c.b16 %v1226, %v1218
        %v1475 = vpack.c.b16 %v1235, %v1227
        %v1476 = vpack.c.b16 %v1236, %v1228
        %v1477 = vpack.c.b16 %v1237, %v1229
        %v1478 = vpack.c.b16 %v1238, %v1230
        %v1479 = vpack.c.b16 %v1239, %v1231
        %v1480 = vpack.c.b16 %v1240, %v1232
        %v1481 = vpack.c.b16 %v1241, %v1233
        %v1482 = vpack.c.b16 %v1242, %v1234
        %v1483 = vpack.c.b16 %v1251, %v1243
        %v1484 = vpack.c.b16 %v1252, %v1244
        %v1485 = vpack.c.b16 %v1253, %v1245
        %v1486 = vpack.c.b16 %v1254, %v1246
        %v1487 = vpack.c.b16 %v1255, %v1247
        %v1488 = vpack.c.b16 %v1256, %v1248
        %v1489 = vpack.c.b16 %v1257, %v1249
        %v1490 = vpack.c.b16 %v1258, %v1250
        %v1491 = vpack.c.b16 %v1267, %v1259
        %v1492 = vpack.c.b16 %v1268, %v1260
        %v1493 = vpack.c.b16 %v1269, %v1261
        %v1494 = vpack.c.b16 %v1270, %v1262
        %v1495 = vpack.c.b16 %v1271, %v1263
        %v1496 = vpack.c.b16 %v1272, %v1264
        %v1497 = vpack.c.b16 %v1273, %v1265
        %v1498 = vpack.c.b16 %v1274, %v1266
        %v1499 = vpack.c.b16 %v1283, %v1275
        %v1500 = vpack.c.b16 %v1284, %v1276
        %v1501 = vpack.c.b16 %v1285, %v1277
        %v1502 = vpack.c.b16 %v1286, %v1278
        %v1503 = vpack.c.b16 %v1287, %v1279
        %v1504 = vpack.c.b16 %v1288, %v1280
        %v1505 = vpack.c.b16 %v1289, %v1281
        %v1506 = vpack.c.b16 %v1290, %v1282
        %v1507 = vpack.c.b16 %v1299, %v1291
        %v1508 = vpack.c.b16 %v1300, %v1292
        %v1509 = vpack.c.b16 %v1301, %v1293
        %v1510 = vpack.c.b16 %v1302, %v1294
        %v1511 = vpack.c.b16 %v1303, %v1295
        %v1512 = vpack.c.b16 %v1304, %v1296
        %v1513 = vpack.c.b16 %v1305, %v1297
        %v1514 = vpack.c.b16 %v1306, %v1298
        %v1515 = vpack.c.b16 %v1315, %v1307
        %v1516 = vpack.c.b16 %v1316, %v1308
        %v1517 = vpack.c.b16 %v1317, %v1309
        %v1518 = vpack.c.b16 %v1318, %v1310
        %v1519 = vpack.c.b16 %v1319, %v1311
        %v1520 = vpack.c.b16 %v1320, %v1312
        %v1521 = vpack.c.b16 %v1321, %v1313
        %v1522 = vpack.c.b16 %v1322, %v1314
        %v1523 = vpack.c.b16 %v1331, %v1323
        %v1524 = vpack.c.b16 %v1332, %v1324
        %v1525 = vpack.c.b16 %v1333, %v1325
        %v1526 = vpack.c.b16 %v1334, %v1326
        %v1527 = vpack.c.b16 %v1335, %v1327
        %v1528 = vpack.c.b16 %v1336, %v1328
        %v1529 = vpack.c.b16 %v1337, %v1329
        %v1530 = vpack.c.b16 %v1338, %v1330
        %v1531 = vpack.c.b16 %v1347, %v1339
        %v1532 = vpack.c.b16 %v1348, %v1340
        %v1533 = vpack.c.b16 %v1349, %v1341
        %v1534 = vpack.c.b16 %v1350, %v1342
        %v1535 = vpack.c.b16 %v1351, %v1343
        %v1536 = vpack.c.b16 %v1352, %v1344
        %v1537 = vpack.c.b16 %v1353, %v1345
        %v1538 = vpack.c.b16 %v1354, %v1346
        %v1539 = vpack.c.b16 %v1363, %v1355
        %v1540 = vpack.c.b16 %v1364, %v1356
        %v1541 = vpack.c.b16 %v1365, %v1357
        %v1542 = vpack.c.b16 %v1366, %v1358
        %v1543 = vpack.c.b16 %v1367, %v1359
        %v1544 = vpack.c.b16 %v1368, %v1360
        %v1545 = vpack.c.b16 %v1369, %v1361
        %v1546 = vpack.c.b16 %v1370, %v1362
        %v1547 = vpack.c.b16 %v1379, %v1371
        %v1548 = vpack.c.b16 %v1380, %v1372
        %v1549 = vpack.c.b16 %v1381, %v1373
        %v1550 = vpack.c.b16 %v1382, %v1374
        %v1551 = vpack.c.b16 %v1383, %v1375
        %v1552 = vpack.c.b16 %v1384, %v1376
        %v1553 = vpack.c.b16 %v1385, %v1377
        %v1554 = vpack.c.b16 %v1386, %v1378
        %v1555 = vpack.c.b16 %v1395, %v1387
        %v1556 = vpack.c.b16 %v1396, %v1388
        %v1557 = vpack.c.b16 %v1397, %v1389
        %v1558 = vpack.c.b16 %v1398, %v1390
        %v1559 = vpack.c.b16 %v1399, %v1391
        %v1560 = vpack.c.b16 %v1400, %v1392
        %v1561 = vpack.c.b16 %v1401, %v1393
        %v1562 = vpack.c.b16 %v1402, %v1394
        %v1563 = vpack.c.b16 %v1411, %v1403
        %v1564 = vpack.c.b16 %v1412, %v1404
        %v1565 = vpack.c.b16 %v1413, %v1405
        %v1566 = vpack.c.b16 %v1414, %v1406
        %v1567 = vpack.c.b16 %v1415, %v1407
        %v1568 = vpack.c.b16 %v1416, %v1408
        %v1569 = vpack.c.b16 %v1417, %v1409
        %v1570 = vpack.c.b16 %v1418, %v1410
        %v1571 = vpack.c.b16 %v1427, %v1419
        %v1572 = vpack.c.b16 %v1428, %v1420
        %v1573 = vpack.c.b16 %v1429, %v1421
        %v1574 = vpack.c.b16 %v1430, %v1422
        %v1575 = vpack.c.b16 %v1431, %v1423
        %v1576 = vpack.c.b16 %v1432, %v1424
        %v1577 = vpack.c.b16 %v1433, %v1425
        %v1578 = vpack.c.b16 %v1434, %v1426
        %v1579 = vpack.c.b16 %v1443, %v1435
        %v1580 = vpack.c.b16 %v1444, %v1436
        %v1581 = vpack.c.b16 %v1445, %v1437
        %v1582 = vpack.c.b16 %v1446, %v1438
        %v1583 = vpack.c.b16 %v1447, %v1439
        %v1584 = vpack.c.b16 %v1448, %v1440
        %v1585 = vpack.c.b16 %v1449, %v1441
        %v1586 = vpack.c.b16 %v1450, %v1442
        %v1587 = vpack.c.b16 %v1459, %v1451
        %v1588 = vpack.c.b16 %v1460, %v1452
        %v1589 = vpack.c.b16 %v1461, %v1453
        %v1590 = vpack.c.b16 %v1462, %v1454
        %v1591 = vpack.c.b16 %v1463, %v1455
        %v1592 = vpack.c.b16 %v1464, %v1456
        %v1593 = vpack.c.b16 %v1465, %v1457
        %v1594 = vpack.c.b16 %v1466, %v1458
        %1723 = vmatprep.subr.bf16.mxu0 %v1468
        %1724 = vmatpush1.bf16.msra.mxu0 %v1467
        %1725 = vmatprep.subr.bf16.mxu0 %v1476
        %1726 = vmatpush1.bf16.msra.mxu0 %v1475
        %1727 = vmatprep.subr.bf16.mxu0 %v1484
        %1728 = vmatpush1.bf16.msra.mxu0 %v1483
        %1729 = vmatprep.subr.bf16.mxu0 %v1492
        %1730 = vmatpush1.bf16.msra.mxu0 %v1491
        %1731 = vmatprep.subr.bf16.mxu0 %v1500
        %1732 = vmatpush1.bf16.msra.mxu0 %v1499
        %1733 = vmatprep.subr.bf16.mxu0 %v1508
        %1734 = vmatpush1.bf16.msra.mxu0 %v1507
        %1735 = vmatprep.subr.bf16.mxu0 %v1516
        %1736 = vmatpush1.bf16.msra.mxu0 %v1515
        %1737 = vmatprep.subr.bf16.mxu0 %v1524
        %1738 = vmatpush1.bf16.msra.mxu0 %v1523
        %1739 = vmatprep.subr.bf16.mxu0 %v1532
        %1740 = vmatpush1.bf16.msra.mxu0 %v1531
        %1741 = vmatprep.subr.bf16.mxu0 %v1540
        %1742 = vmatpush1.bf16.msra.mxu0 %v1539
        %1743 = vmatprep.subr.bf16.mxu0 %v1548
        %1744 = vmatpush1.bf16.msra.mxu0 %v1547
        %1745 = vmatprep.subr.bf16.mxu0 %v1556
        %1746 = vmatpush1.bf16.msra.mxu0 %v1555
        %1747 = vmatprep.subr.bf16.mxu0 %v1564
        %1748 = vmatpush1.bf16.msra.mxu0 %v1563
        %1749 = vmatprep.subr.bf16.mxu0 %v1572
        %1750 = vmatpush1.bf16.msra.mxu0 %v1571
        %1751 = vmatprep.subr.bf16.mxu0 %v1580
        %1752 = vmatpush1.bf16.msra.mxu0 %v1579
        %1753 = vmatprep.subr.bf16.mxu0 %v1588
        %1754 = vmatpush1.bf16.msra.mxu0 %v1587
        %1755 = vmatprep.mubr.bf16.mxu0 %v898
        %1756 = vmatmul.mubr.bf16.gmra.mrb[0].mxu0 %v897
        %v1757 = vpop.f32.mrb[0].mxu0
        %v1758 = vadd.f32 %v1046, %v1757
        %v1759 = vpop.f32.mrb[0].mxu0
        %v1760 = vadd.f32 %v1050, %v1759
        %v1761 = vpop.f32.mrb[0].mxu0
        %v1762 = vadd.f32 %v1046, %v1761
        %v1763 = vpop.f32.mrb[0].mxu0
        %v1764 = vadd.f32 %v1050, %v1763
        %1765 = vmatprep.mubr.bf16.mxu0 %v900
        %1766 = vmatmul.mubr.bf16.gmra.mrb[0].mxu0 %v899
        %v1767 = vpop.f32.mrb[0].mxu0
        %v1768 = vadd.f32 %v1046, %v1767
        %v1769 = vpop.f32.mrb[0].mxu0
        %v1770 = vadd.f32 %v1050, %v1769
        %v1771 = vpop.f32.mrb[0].mxu0
        %v1772 = vadd.f32 %v1046, %v1771
        %v1773 = vpop.f32.mrb[0].mxu0
        %v1774 = vadd.f32 %v1050, %v1773
        %1775 = vmatprep.mubr.bf16.mxu0 %v902
        %1776 = vmatmul.mubr.bf16.gmra.mrb[0].mxu0 %v901
        %v1777 = vpop.f32.mrb[0].mxu0
        %v1778 = vadd.f32 %v1046, %v1777
        %v1779 = vpop.f32.mrb[0].mxu0
        %v1780 = vadd.f32 %v1050, %v1779
        %v1781 = vpop.f32.mrb[0].mxu0
        %v1782 = vadd.f32 %v1046, %v1781
        %v1783 = vpop.f32.mrb[0].mxu0
        %v1784 = vadd.f32 %v1050, %v1783
        %1785 = vmatprep.mubr.bf16.mxu0 %v904
        %1786 = vmatmul.mubr.bf16.gmra.mrb[0].mxu0 %v903
        %v1787 = vpop.f32.mrb[0].mxu0
        %v1788 = vadd.f32 %v1046, %v1787
        %v1789 = vpop.f32.mrb[0].mxu0
        %v1790 = vadd.f32 %v1050, %v1789
        %v1791 = vpop.f32.mrb[0].mxu0
        %v1792 = vadd.f32 %v1046, %v1791
        %v1793 = vpop.f32.mrb[0].mxu0
        %v1794 = vadd.f32 %v1050, %v1793
        %1795 = vmatprep.mubr.bf16.mxu0 %v906
        %1796 = vmatmul.mubr.bf16.gmra.mrb[0].mxu0 %v905
        %v1797 = vpop.f32.mrb[0].mxu0
        %v1798 = vadd.f32 %v1046, %v1797
        %v1799 = vpop.f32.mrb[0].mxu0
        %v1800 = vadd.f32 %v1050, %v1799
        %v1801 = vpop.f32.mrb[0].mxu0
        %v1802 = vadd.f32 %v1046, %v1801
        %v1803 = vpop.f32.mrb[0].mxu0
        %v1804 = vadd.f32 %v1050, %v1803
        %1805 = vmatprep.mubr.bf16.mxu0 %v908
        %1806 = vmatmul.mubr.bf16.gmra.mrb[0].mxu0 %v907
        %v1807 = vpop.f32.mrb[0].mxu0
        %v1808 = vadd.f32 %v1046, %v1807
        %v1809 = vpop.f32.mrb[0].mxu0
        %v1810 = vadd.f32 %v1050, %v1809
        %v1811 = vpop.f32.mrb[0].mxu0
        %v1812 = vadd.f32 %v1046, %v1811
        %v1813 = vpop.f32.mrb[0].mxu0
        %v1814 = vadd.f32 %v1050, %v1813
        %1815 = vmatprep.mubr.bf16.mxu0 %v910
        %1816 = vmatmul.mubr.bf16.gmra.mrb[0].mxu0 %v909
        %v1817 = vpop.f32.mrb[0].mxu0
        %v1818 = vadd.f32 %v1046, %v1817
        %v1819 = vpop.f32.mrb[0].mxu0
        %v1820 = vadd.f32 %v1050, %v1819
        %v1821 = vpop.f32.mrb[0].mxu0
        %v1822 = vadd.f32 %v1046, %v1821
        %v1823 = vpop.f32.mrb[0].mxu0
        %v1824 = vadd.f32 %v1050, %v1823
        %1825 = vmatprep.mubr.bf16.mxu0 %v912
        %1826 = vmatmul.mubr.bf16.gmra.mrb[0].mxu0 %v911
        %v1827 = vpop.f32.mrb[0].mxu0
        %v1828 = vadd.f32 %v1046, %v1827
        %v1829 = vpop.f32.mrb[0].mxu0
        %v1830 = vadd.f32 %v1050, %v1829
        %v1831 = vpop.f32.mrb[0].mxu0
        %v1832 = vadd.f32 %v1046, %v1831
        %v1833 = vpop.f32.mrb[0].mxu0
        %v1834 = vadd.f32 %v1050, %v1833
        %1835 = vdwg.mxu0
        %1836 = vmatprep.subr.bf16.mxu0 %v1470
        %1837 = vmatpush1.bf16.msra.mxu0 %v1469
        %1838 = vmatprep.subr.bf16.mxu0 %v1478
        %1839 = vmatpush1.bf16.msra.mxu0 %v1477
        %1840 = vmatprep.subr.bf16.mxu0 %v1486
        %1841 = vmatpush1.bf16.msra.mxu0 %v1485
        %1842 = vmatprep.subr.bf16.mxu0 %v1494
        %1843 = vmatpush1.bf16.msra.mxu0 %v1493
        %1844 = vmatprep.subr.bf16.mxu0 %v1502
        %1845 = vmatpush1.bf16.msra.mxu0 %v1501
        %1846 = vmatprep.subr.bf16.mxu0 %v1510
        %1847 = vmatpush1.bf16.msra.mxu0 %v1509
        %1848 = vmatprep.subr.bf16.mxu0 %v1518
        %1849 = vmatpush1.bf16.msra.mxu0 %v1517
        %1850 = vmatprep.subr.bf16.mxu0 %v1526
        %1851 = vmatpush1.bf16.msra.mxu0 %v1525
        %1852 = vmatprep.subr.bf16.mxu0 %v1534
        %1853 = vmatpush1.bf16.msra.mxu0 %v1533
        %1854 = vmatprep.subr.bf16.mxu0 %v1542
        %1855 = vmatpush1.bf16.msra.mxu0 %v1541
        %1856 = vmatprep.subr.bf16.mxu0 %v1550
        %1857 = vmatpush1.bf16.msra.mxu0 %v1549
        %1858 = vmatprep.subr.bf16.mxu0 %v1558
        %1859 = vmatpush1.bf16.msra.mxu0 %v1557
        %1860 = vmatprep.subr.bf16.mxu0 %v1566
        %1861 = vmatpush1.bf16.msra.mxu0 %v1565
        %1862 = vmatprep.subr.bf16.mxu0 %v1574
        %1863 = vmatpush1.bf16.msra.mxu0 %v1573
        %1864 = vmatprep.subr.bf16.mxu0 %v1582
        %1865 = vmatpush1.bf16.msra.mxu0 %v1581
        %1866 = vmatprep.subr.bf16.mxu0 %v1590
        %1867 = vmatpush1.bf16.msra.mxu0 %v1589
        %1868 = vmatprep.mubr.bf16.mxu0 %v898
        %1869 = vmatmul.mubr.bf16.gmra.mrb[0].mxu0 %v897
        %v1870 = vpop.f32.mrb[0].mxu0
        %v1871 = vadd.f32 %v1054, %v1870
        %v1872 = vpop.f32.mrb[0].mxu0
        %v1873 = vadd.f32 %v1058, %v1872
        %v1874 = vpop.f32.mrb[0].mxu0
        %v1875 = vadd.f32 %v1054, %v1874
        %v1876 = vpop.f32.mrb[0].mxu0
        %v1877 = vadd.f32 %v1058, %v1876
        %1878 = vmatprep.mubr.bf16.mxu0 %v900
        %1879 = vmatmul.mubr.bf16.gmra.mrb[0].mxu0 %v899
        %v1880 = vpop.f32.mrb[0].mxu0
        %v1881 = vadd.f32 %v1054, %v1880
        %v1882 = vpop.f32.mrb[0].mxu0
        %v1883 = vadd.f32 %v1058, %v1882
        %v1884 = vpop.f32.mrb[0].mxu0
        %v1885 = vadd.f32 %v1054, %v1884
        %v1886 = vpop.f32.mrb[0].mxu0
        %v1887 = vadd.f32 %v1058, %v1886
        %1888 = vmatprep.mubr.bf16.mxu0 %v902
        %1889 = vmatmul.mubr.bf16.gmra.mrb[0].mxu0 %v901
        %v1890 = vpop.f32.mrb[0].mxu0
        %v1891 = vadd.f32 %v1054, %v1890
        %v1892 = vpop.f32.mrb[0].mxu0
        %v1893 = vadd.f32 %v1058, %v1892
        %v1894 = vpop.f32.mrb[0].mxu0
        %v1895 = vadd.f32 %v1054, %v1894
        %v1896 = vpop.f32.mrb[0].mxu0
        %v1897 = vadd.f32 %v1058, %v1896
        %1898 = vmatprep.mubr.bf16.mxu0 %v904
        %1899 = vmatmul.mubr.bf16.gmra.mrb[0].mxu0 %v903
        %v1900 = vpop.f32.mrb[0].mxu0
        %v1901 = vadd.f32 %v1054, %v1900
        %v1902 = vpop.f32.mrb[0].mxu0
        %v1903 = vadd.f32 %v1058, %v1902
        %v1904 = vpop.f32.mrb[0].mxu0
        %v1905 = vadd.f32 %v1054, %v1904
        %v1906 = vpop.f32.mrb[0].mxu0
        %v1907 = vadd.f32 %v1058, %v1906
        %1908 = vmatprep.mubr.bf16.mxu0 %v906
        %1909 = vmatmul.mubr.bf16.gmra.mrb[0].mxu0 %v905
        %v1910 = vpop.f32.mrb[0].mxu0
        %v1911 = vadd.f32 %v1054, %v1910
        %v1912 = vpop.f32.mrb[0].mxu0
        %v1913 = vadd.f32 %v1058, %v1912
        %v1914 = vpop.f32.mrb[0].mxu0
        %v1915 = vadd.f32 %v1054, %v1914
        %v1916 = vpop.f32.mrb[0].mxu0
        %v1917 = vadd.f32 %v1058, %v1916
        %1918 = vmatprep.mubr.bf16.mxu0 %v908
        %1919 = vmatmul.mubr.bf16.gmra.mrb[0].mxu0 %v907
        %v1920 = vpop.f32.mrb[0].mxu0
        %v1921 = vadd.f32 %v1054, %v1920
        %v1922 = vpop.f32.mrb[0].mxu0
        %v1923 = vadd.f32 %v1058, %v1922
        %v1924 = vpop.f32.mrb[0].mxu0
        %v1925 = vadd.f32 %v1054, %v1924
        %v1926 = vpop.f32.mrb[0].mxu0
        %v1927 = vadd.f32 %v1058, %v1926
        %1928 = vmatprep.mubr.bf16.mxu0 %v910
        %1929 = vmatmul.mubr.bf16.gmra.mrb[0].mxu0 %v909
        %v1930 = vpop.f32.mrb[0].mxu0
        %v1931 = vadd.f32 %v1054, %v1930
        %v1932 = vpop.f32.mrb[0].mxu0
        %v1933 = vadd.f32 %v1058, %v1932
        %v1934 = vpop.f32.mrb[0].mxu0
        %v1935 = vadd.f32 %v1054, %v1934
        %v1936 = vpop.f32.mrb[0].mxu0
        %v1937 = vadd.f32 %v1058, %v1936
        %1938 = vmatprep.mubr.bf16.mxu0 %v912
        %1939 = vmatmul.mubr.bf16.gmra.mrb[0].mxu0 %v911
        %v1940 = vpop.f32.mrb[0].mxu0
        %v1941 = vadd.f32 %v1054, %v1940
        %v1942 = vpop.f32.mrb[0].mxu0
        %v1943 = vadd.f32 %v1058, %v1942
        %v1944 = vpop.f32.mrb[0].mxu0
        %v1945 = vadd.f32 %v1054, %v1944
        %v1946 = vpop.f32.mrb[0].mxu0
        %v1947 = vadd.f32 %v1058, %v1946
        %1948 = vdwg.mxu0
        %1949 = vmatprep.subr.bf16.mxu0 %v1472
        %1950 = vmatpush1.bf16.msra.mxu0 %v1471
        %1951 = vmatprep.subr.bf16.mxu0 %v1480
        %1952 = vmatpush1.bf16.msra.mxu0 %v1479
        %1953 = vmatprep.subr.bf16.mxu0 %v1488
        %1954 = vmatpush1.bf16.msra.mxu0 %v1487
        %1955 = vmatprep.subr.bf16.mxu0 %v1496
        %1956 = vmatpush1.bf16.msra.mxu0 %v1495
        %1957 = vmatprep.subr.bf16.mxu0 %v1504
        %1958 = vmatpush1.bf16.msra.mxu0 %v1503
        %1959 = vmatprep.subr.bf16.mxu0 %v1512
        %1960 = vmatpush1.bf16.msra.mxu0 %v1511
        %1961 = vmatprep.subr.bf16.mxu0 %v1520
        %1962 = vmatpush1.bf16.msra.mxu0 %v1519
        %1963 = vmatprep.subr.bf16.mxu0 %v1528
        %1964 = vmatpush1.bf16.msra.mxu0 %v1527
        %1965 = vmatprep.subr.bf16.mxu0 %v1536
        %1966 = vmatpush1.bf16.msra.mxu0 %v1535
        %1967 = vmatprep.subr.bf16.mxu0 %v1544
        %1968 = vmatpush1.bf16.msra.mxu0 %v1543
        %1969 = vmatprep.subr.bf16.mxu0 %v1552
        %1970 = vmatpush1.bf16.msra.mxu0 %v1551
        %1971 = vmatprep.subr.bf16.mxu0 %v1560
        %1972 = vmatpush1.bf16.msra.mxu0 %v1559
        %1973 = vmatprep.subr.bf16.mxu0 %v1568
        %1974 = vmatpush1.bf16.msra.mxu0 %v1567
        %1975 = vmatprep.subr.bf16.mxu0 %v1576
        %1976 = vmatpush1.bf16.msra.mxu0 %v1575
        %1977 = vmatprep.subr.bf16.mxu0 %v1584
        %1978 = vmatpush1.bf16.msra.mxu0 %v1583
        %1979 = vmatprep.subr.bf16.mxu0 %v1592
        %1980 = vmatpush1.bf16.msra.mxu0 %v1591
        %1981 = vmatprep.mubr.bf16.mxu0 %v898
        %1982 = vmatmul.mubr.bf16.gmra.mrb[0].mxu0 %v897
        %v1983 = vpop.f32.mrb[0].mxu0
        %v1984 = vadd.f32 %v1062, %v1983
        %v1985 = vpop.f32.mrb[0].mxu0
        %v1986 = vadd.f32 %v1066, %v1985
        %v1987 = vpop.f32.mrb[0].mxu0
        %v1988 = vadd.f32 %v1062, %v1987
        %v1989 = vpop.f32.mrb[0].mxu0
        %v1990 = vadd.f32 %v1066, %v1989
        %1991 = vmatprep.mubr.bf16.mxu0 %v900
        %1992 = vmatmul.mubr.bf16.gmra.mrb[0].mxu0 %v899
        %v1993 = vpop.f32.mrb[0].mxu0
        %v1994 = vadd.f32 %v1062, %v1993
        %v1995 = vpop.f32.mrb[0].mxu0
        %v1996 = vadd.f32 %v1066, %v1995
        %v1997 = vpop.f32.mrb[0].mxu0
        %v1998 = vadd.f32 %v1062, %v1997
        %v1999 = vpop.f32.mrb[0].mxu0
        %v2000 = vadd.f32 %v1066, %v1999
        %2001 = vmatprep.mubr.bf16.mxu0 %v902
        %2002 = vmatmul.mubr.bf16.gmra.mrb[0].mxu0 %v901
        %v2003 = vpop.f32.mrb[0].mxu0
        %v2004 = vadd.f32 %v1062, %v2003
        %v2005 = vpop.f32.mrb[0].mxu0
        %v2006 = vadd.f32 %v1066, %v2005
        %v2007 = vpop.f32.mrb[0].mxu0
        %v2008 = vadd.f32 %v1062, %v2007
        %v2009 = vpop.f32.mrb[0].mxu0
        %v2010 = vadd.f32 %v1066, %v2009
        %2011 = vmatprep.mubr.bf16.mxu0 %v904
        %2012 = vmatmul.mubr.bf16.gmra.mrb[0].mxu0 %v903
        %v2013 = vpop.f32.mrb[0].mxu0
        %v2014 = vadd.f32 %v1062, %v2013
        %v2015 = vpop.f32.mrb[0].mxu0
        %v2016 = vadd.f32 %v1066, %v2015
        %v2017 = vpop.f32.mrb[0].mxu0
        %v2018 = vadd.f32 %v1062, %v2017
        %v2019 = vpop.f32.mrb[0].mxu0
        %v2020 = vadd.f32 %v1066, %v2019
        %2021 = vmatprep.mubr.bf16.mxu0 %v906
        %2022 = vmatmul.mubr.bf16.gmra.mrb[0].mxu0 %v905
        %v2023 = vpop.f32.mrb[0].mxu0
        %v2024 = vadd.f32 %v1062, %v2023
        %v2025 = vpop.f32.mrb[0].mxu0
        %v2026 = vadd.f32 %v1066, %v2025
        %v2027 = vpop.f32.mrb[0].mxu0
        %v2028 = vadd.f32 %v1062, %v2027
        %v2029 = vpop.f32.mrb[0].mxu0
        %v2030 = vadd.f32 %v1066, %v2029
        %2031 = vmatprep.mubr.bf16.mxu0 %v908
        %2032 = vmatmul.mubr.bf16.gmra.mrb[0].mxu0 %v907
        %v2033 = vpop.f32.mrb[0].mxu0
        %v2034 = vadd.f32 %v1062, %v2033
        %v2035 = vpop.f32.mrb[0].mxu0
        %v2036 = vadd.f32 %v1066, %v2035
        %v2037 = vpop.f32.mrb[0].mxu0
        %v2038 = vadd.f32 %v1062, %v2037
        %v2039 = vpop.f32.mrb[0].mxu0
        %v2040 = vadd.f32 %v1066, %v2039
        %2041 = vmatprep.mubr.bf16.mxu0 %v910
        %2042 = vmatmul.mubr.bf16.gmra.mrb[0].mxu0 %v909
        %v2043 = vpop.f32.mrb[0].mxu0
        %v2044 = vadd.f32 %v1062, %v2043
        %v2045 = vpop.f32.mrb[0].mxu0
        %v2046 = vadd.f32 %v1066, %v2045
        %v2047 = vpop.f32.mrb[0].mxu0
        %v2048 = vadd.f32 %v1062, %v2047
        %v2049 = vpop.f32.mrb[0].mxu0
        %v2050 = vadd.f32 %v1066, %v2049
        %2051 = vmatprep.mubr.bf16.mxu0 %v912
        %2052 = vmatmul.mubr.bf16.gmra.mrb[0].mxu0 %v911
        %v2053 = vpop.f32.mrb[0].mxu0
        %v2054 = vadd.f32 %v1062, %v2053
        %v2055 = vpop.f32.mrb[0].mxu0
        %v2056 = vadd.f32 %v1066, %v2055
        %v2057 = vpop.f32.mrb[0].mxu0
        %v2058 = vadd.f32 %v1062, %v2057
        %v2059 = vpop.f32.mrb[0].mxu0
        %v2060 = vadd.f32 %v1066, %v2059
        %2061 = vdwg.mxu0
        %2062 = vmatprep.subr.bf16.mxu0 %v1474
        %2063 = vmatpush1.bf16.msra.mxu0 %v1473
        %2064 = vmatprep.subr.bf16.mxu0 %v1482
        %2065 = vmatpush1.bf16.msra.mxu0 %v1481
        %2066 = vmatprep.subr.bf16.mxu0 %v1490
        %2067 = vmatpush1.bf16.msra.mxu0 %v1489
        %2068 = vmatprep.subr.bf16.mxu0 %v1498
        %2069 = vmatpush1.bf16.msra.mxu0 %v1497
        %2070 = vmatprep.subr.bf16.mxu0 %v1506
        %2071 = vmatpush1.bf16.msra.mxu0 %v1505
        %2072 = vmatprep.subr.bf16.mxu0 %v1514
        %2073 = vmatpush1.bf16.msra.mxu0 %v1513
        %2074 = vmatprep.subr.bf16.mxu0 %v1522
        %2075 = vmatpush1.bf16.msra.mxu0 %v1521
        %2076 = vmatprep.subr.bf16.mxu0 %v1530
        %2077 = vmatpush1.bf16.msra.mxu0 %v1529
        %2078 = vmatprep.subr.bf16.mxu0 %v1538
        %2079 = vmatpush1.bf16.msra.mxu0 %v1537
        %2080 = vmatprep.subr.bf16.mxu0 %v1546
        %2081 = vmatpush1.bf16.msra.mxu0 %v1545
        %2082 = vmatprep.subr.bf16.mxu0 %v1554
        %2083 = vmatpush1.bf16.msra.mxu0 %v1553
        %2084 = vmatprep.subr.bf16.mxu0 %v1562
        %2085 = vmatpush1.bf16.msra.mxu0 %v1561
        %2086 = vmatprep.subr.bf16.mxu0 %v1570
        %2087 = vmatpush1.bf16.msra.mxu0 %v1569
        %2088 = vmatprep.subr.bf16.mxu0 %v1578
        %2089 = vmatpush1.bf16.msra.mxu0 %v1577
        %2090 = vmatprep.subr.bf16.mxu0 %v1586
        %2091 = vmatpush1.bf16.msra.mxu0 %v1585
        %2092 = vmatprep.subr.bf16.mxu0 %v1594
        %2093 = vmatpush1.bf16.msra.mxu0 %v1593
        %2094 = vmatprep.mubr.bf16.mxu0 %v898
        %2095 = vmatmul.mubr.bf16.gmra.mrb[0].mxu0 %v897
        %v2096 = vpop.f32.mrb[0].mxu0
        %v2097 = vadd.f32 %v1070, %v2096
        %v2098 = vpop.f32.mrb[0].mxu0
        %v2099 = vadd.f32 %v1074, %v2098
        %v2100 = vpop.f32.mrb[0].mxu0
        %v2101 = vadd.f32 %v1070, %v2100
        %v2102 = vpop.f32.mrb[0].mxu0
        %v2103 = vadd.f32 %v1074, %v2102
        %2104 = vmatprep.mubr.bf16.mxu0 %v900
        %2105 = vmatmul.mubr.bf16.gmra.mrb[0].mxu0 %v899
        %v2106 = vpop.f32.mrb[0].mxu0
        %v2107 = vadd.f32 %v1070, %v2106
        %v2108 = vpop.f32.mrb[0].mxu0
        %v2109 = vadd.f32 %v1074, %v2108
        %v2110 = vpop.f32.mrb[0].mxu0
        %v2111 = vadd.f32 %v1070, %v2110
        %v2112 = vpop.f32.mrb[0].mxu0
        %v2113 = vadd.f32 %v1074, %v2112
        %2114 = vmatprep.mubr.bf16.mxu0 %v902
        %2115 = vmatmul.mubr.bf16.gmra.mrb[0].mxu0 %v901
        %v2116 = vpop.f32.mrb[0].mxu0
        %v2117 = vadd.f32 %v1070, %v2116
        %v2118 = vpop.f32.mrb[0].mxu0
        %v2119 = vadd.f32 %v1074, %v2118
        %v2120 = vpop.f32.mrb[0].mxu0
        %v2121 = vadd.f32 %v1070, %v2120
        %v2122 = vpop.f32.mrb[0].mxu0
        %v2123 = vadd.f32 %v1074, %v2122
        %2124 = vmatprep.mubr.bf16.mxu0 %v904
        %2125 = vmatmul.mubr.bf16.gmra.mrb[0].mxu0 %v903
        %v2126 = vpop.f32.mrb[0].mxu0
        %v2127 = vadd.f32 %v1070, %v2126
        %v2128 = vpop.f32.mrb[0].mxu0
        %v2129 = vadd.f32 %v1074, %v2128
        %v2130 = vpop.f32.mrb[0].mxu0
        %v2131 = vadd.f32 %v1070, %v2130
        %v2132 = vpop.f32.mrb[0].mxu0
        %v2133 = vadd.f32 %v1074, %v2132
        %2134 = vmatprep.mubr.bf16.mxu0 %v906
        %2135 = vmatmul.mubr.bf16.gmra.mrb[0].mxu0 %v905
        %v2136 = vpop.f32.mrb[0].mxu0
        %v2137 = vadd.f32 %v1070, %v2136
        %v2138 = vpop.f32.mrb[0].mxu0
        %v2139 = vadd.f32 %v1074, %v2138
        %v2140 = vpop.f32.mrb[0].mxu0
        %v2141 = vadd.f32 %v1070, %v2140
        %v2142 = vpop.f32.mrb[0].mxu0
        %v2143 = vadd.f32 %v1074, %v2142
        %2144 = vmatprep.mubr.bf16.mxu0 %v908
        %2145 = vmatmul.mubr.bf16.gmra.mrb[0].mxu0 %v907
        %v2146 = vpop.f32.mrb[0].mxu0
        %v2147 = vadd.f32 %v1070, %v2146
        %v2148 = vpop.f32.mrb[0].mxu0
        %v2149 = vadd.f32 %v1074, %v2148
        %v2150 = vpop.f32.mrb[0].mxu0
        %v2151 = vadd.f32 %v1070, %v2150
        %v2152 = vpop.f32.mrb[0].mxu0
        %v2153 = vadd.f32 %v1074, %v2152
        %2154 = vmatprep.mubr.bf16.mxu0 %v910
        %2155 = vmatmul.mubr.bf16.gmra.mrb[0].mxu0 %v909
        %v2156 = vpop.f32.mrb[0].mxu0
        %v2157 = vadd.f32 %v1070, %v2156
        %v2158 = vpop.f32.mrb[0].mxu0
        %v2159 = vadd.f32 %v1074, %v2158
        %v2160 = vpop.f32.mrb[0].mxu0
        %v2161 = vadd.f32 %v1070, %v2160
        %v2162 = vpop.f32.mrb[0].mxu0
        %v2163 = vadd.f32 %v1074, %v2162
        %2164 = vmatprep.mubr.bf16.mxu0 %v912
        %2165 = vmatmul.mubr.bf16.gmra.mrb[0].mxu0 %v911
        %v2166 = vpop.f32.mrb[0].mxu0
        %v2167 = vadd.f32 %v1070, %v2166
        %v2168 = vpop.f32.mrb[0].mxu0
        %v2169 = vadd.f32 %v1074, %v2168
        %v2170 = vpop.f32.mrb[0].mxu0
        %v2171 = vadd.f32 %v1070, %v2170
        %v2172 = vpop.f32.mrb[0].mxu0
        %v2173 = vadd.f32 %v1074, %v2172
        %2174 = vdwg.mxu0
        %v2175 = vxor.u32 %v1758, 2147483648
        %v2176 = vxor.u32 %v1760, 2147483648
        %v2177 = vxor.u32 %v1871, 2147483648
        %v2178 = vxor.u32 %v1873, 2147483648
        %v2179 = vxor.u32 %v1984, 2147483648
        %v2180 = vxor.u32 %v1986, 2147483648
        %v2181 = vxor.u32 %v2097, 2147483648
        %v2182 = vxor.u32 %v2099, 2147483648
        %v2183 = vxor.u32 %v1762, 2147483648
        %v2184 = vxor.u32 %v1764, 2147483648
        %v2185 = vxor.u32 %v1875, 2147483648
        %v2186 = vxor.u32 %v1877, 2147483648
        %v2187 = vxor.u32 %v1988, 2147483648
        %v2188 = vxor.u32 %v1990, 2147483648
        %v2189 = vxor.u32 %v2101, 2147483648
        %v2190 = vxor.u32 %v2103, 2147483648
        %v2191 = vxor.u32 %v1768, 2147483648
        %v2192 = vxor.u32 %v1770, 2147483648
        %v2193 = vxor.u32 %v1881, 2147483648
        %v2194 = vxor.u32 %v1883, 2147483648
        %v2195 = vxor.u32 %v1994, 2147483648
        %v2196 = vxor.u32 %v1996, 2147483648
        %v2197 = vxor.u32 %v2107, 2147483648
        %v2198 = vxor.u32 %v2109, 2147483648
        %v2199 = vxor.u32 %v1772, 2147483648
        %v2200 = vxor.u32 %v1774, 2147483648
        %v2201 = vxor.u32 %v1885, 2147483648
        %v2202 = vxor.u32 %v1887, 2147483648
        %v2203 = vxor.u32 %v1998, 2147483648
        %v2204 = vxor.u32 %v2000, 2147483648
        %v2205 = vxor.u32 %v2111, 2147483648
        %v2206 = vxor.u32 %v2113, 2147483648
        %v2207 = vxor.u32 %v1778, 2147483648
        %v2208 = vxor.u32 %v1780, 2147483648
        %v2209 = vxor.u32 %v1891, 2147483648
        %v2210 = vxor.u32 %v1893, 2147483648
        %v2211 = vxor.u32 %v2004, 2147483648
        %v2212 = vxor.u32 %v2006, 2147483648
        %v2213 = vxor.u32 %v2117, 2147483648
        %v2214 = vxor.u32 %v2119, 2147483648
        %v2215 = vxor.u32 %v1782, 2147483648
        %v2216 = vxor.u32 %v1784, 2147483648
        %v2217 = vxor.u32 %v1895, 2147483648
        %v2218 = vxor.u32 %v1897, 2147483648
        %v2219 = vxor.u32 %v2008, 2147483648
        %v2220 = vxor.u32 %v2010, 2147483648
        %v2221 = vxor.u32 %v2121, 2147483648
        %v2222 = vxor.u32 %v2123, 2147483648
        %v2223 = vxor.u32 %v1788, 2147483648
        %v2224 = vxor.u32 %v1790, 2147483648
        %v2225 = vxor.u32 %v1901, 2147483648
        %v2226 = vxor.u32 %v1903, 2147483648
        %v2227 = vxor.u32 %v2014, 2147483648
        %v2228 = vxor.u32 %v2016, 2147483648
        %v2229 = vxor.u32 %v2127, 2147483648
        %v2230 = vxor.u32 %v2129, 2147483648
        %v2231 = vxor.u32 %v1792, 2147483648
        %v2232 = vxor.u32 %v1794, 2147483648
        %v2233 = vxor.u32 %v1905, 2147483648
        %v2234 = vxor.u32 %v1907, 2147483648
        %v2235 = vxor.u32 %v2018, 2147483648
        %v2236 = vxor.u32 %v2020, 2147483648
        %v2237 = vxor.u32 %v2131, 2147483648
        %v2238 = vxor.u32 %v2133, 2147483648
        %v2239 = vxor.u32 %v1798, 2147483648
        %v2240 = vxor.u32 %v1800, 2147483648
        %v2241 = vxor.u32 %v1911, 2147483648
        %v2242 = vxor.u32 %v1913, 2147483648
        %v2243 = vxor.u32 %v2024, 2147483648
        %v2244 = vxor.u32 %v2026, 2147483648
        %v2245 = vxor.u32 %v2137, 2147483648
        %v2246 = vxor.u32 %v2139, 2147483648
        %v2247 = vxor.u32 %v1802, 2147483648
        %v2248 = vxor.u32 %v1804, 2147483648
        %v2249 = vxor.u32 %v1915, 2147483648
        %v2250 = vxor.u32 %v1917, 2147483648
        %v2251 = vxor.u32 %v2028, 2147483648
        %v2252 = vxor.u32 %v2030, 2147483648
        %v2253 = vxor.u32 %v2141, 2147483648
        %v2254 = vxor.u32 %v2143, 2147483648
        %v2255 = vxor.u32 %v1808, 2147483648
        %v2256 = vxor.u32 %v1810, 2147483648
        %v2257 = vxor.u32 %v1921, 2147483648
        %v2258 = vxor.u32 %v1923, 2147483648
        %v2259 = vxor.u32 %v2034, 2147483648
        %v2260 = vxor.u32 %v2036, 2147483648
        %v2261 = vxor.u32 %v2147, 2147483648
        %v2262 = vxor.u32 %v2149, 2147483648
        %v2263 = vxor.u32 %v1812, 2147483648
        %v2264 = vxor.u32 %v1814, 2147483648
        %v2265 = vxor.u32 %v1925, 2147483648
        %v2266 = vxor.u32 %v1927, 2147483648
        %v2267 = vxor.u32 %v2038, 2147483648
        %v2268 = vxor.u32 %v2040, 2147483648
        %v2269 = vxor.u32 %v2151, 2147483648
        %v2270 = vxor.u32 %v2153, 2147483648
        %v2271 = vxor.u32 %v1818, 2147483648
        %v2272 = vxor.u32 %v1820, 2147483648
        %v2273 = vxor.u32 %v1931, 2147483648
        %v2274 = vxor.u32 %v1933, 2147483648
        %v2275 = vxor.u32 %v2044, 2147483648
        %v2276 = vxor.u32 %v2046, 2147483648
        %v2277 = vxor.u32 %v2157, 2147483648
        %v2278 = vxor.u32 %v2159, 2147483648
        %v2279 = vxor.u32 %v1822, 2147483648
        %v2280 = vxor.u32 %v1824, 2147483648
        %v2281 = vxor.u32 %v1935, 2147483648
        %v2282 = vxor.u32 %v1937, 2147483648
        %v2283 = vxor.u32 %v2048, 2147483648
        %v2284 = vxor.u32 %v2050, 2147483648
        %v2285 = vxor.u32 %v2161, 2147483648
        %v2286 = vxor.u32 %v2163, 2147483648
        %v2287 = vxor.u32 %v1828, 2147483648
        %v2288 = vxor.u32 %v1830, 2147483648
        %v2289 = vxor.u32 %v1941, 2147483648
        %v2290 = vxor.u32 %v1943, 2147483648
        %v2291 = vxor.u32 %v2054, 2147483648
        %v2292 = vxor.u32 %v2056, 2147483648
        %v2293 = vxor.u32 %v2167, 2147483648
        %v2294 = vxor.u32 %v2169, 2147483648
        %v2295 = vxor.u32 %v1832, 2147483648
        %v2296 = vxor.u32 %v1834, 2147483648
        %v2297 = vxor.u32 %v1945, 2147483648
        %v2298 = vxor.u32 %v1947, 2147483648
        %v2299 = vxor.u32 %v2058, 2147483648
        %v2300 = vxor.u32 %v2060, 2147483648
        %v2301 = vxor.u32 %v2171, 2147483648
        %v2302 = vxor.u32 %v2173, 2147483648
        %v2303 = vmul.f32 %v2175, 1.442695
        %v2304 = vpow.pop %v2303
        %v2305 = vmul.f32 %v2176, 1.442695
        %v2306 = vpow.pop %v2305
        %v2307 = vmul.f32 %v2177, 1.442695
        %v2308 = vpow.pop %v2307
        %v2309 = vmul.f32 %v2178, 1.442695
        %v2310 = vpow.pop %v2309
        %v2311 = vmul.f32 %v2179, 1.442695
        %v2312 = vpow.pop %v2311
        %v2313 = vmul.f32 %v2180, 1.442695
        %v2314 = vpow.pop %v2313
        %v2315 = vmul.f32 %v2181, 1.442695
        %v2316 = vpow.pop %v2315
        %v2317 = vmul.f32 %v2182, 1.442695
        %v2318 = vpow.pop %v2317
        %v2319 = vmul.f32 %v2183, 1.442695
        %v2320 = vpow.pop %v2319
        %v2321 = vmul.f32 %v2184, 1.442695
        %v2322 = vpow.pop %v2321
        %v2323 = vmul.f32 %v2185, 1.442695
        %v2324 = vpow.pop %v2323
        %v2325 = vmul.f32 %v2186, 1.442695
        %v2326 = vpow.pop %v2325
        %v2327 = vmul.f32 %v2187, 1.442695
        %v2328 = vpow.pop %v2327
        %v2329 = vmul.f32 %v2188, 1.442695
        %v2330 = vpow.pop %v2329
        %v2331 = vmul.f32 %v2189, 1.442695
        %v2332 = vpow.pop %v2331
        %v2333 = vmul.f32 %v2190, 1.442695
        %v2334 = vpow.pop %v2333
        %v2335 = vmul.f32 %v2191, 1.442695
        %v2336 = vpow.pop %v2335
        %v2337 = vmul.f32 %v2192, 1.442695
        %v2338 = vpow.pop %v2337
        %v2339 = vmul.f32 %v2193, 1.442695
        %v2340 = vpow.pop %v2339
        %v2341 = vmul.f32 %v2194, 1.442695
        %v2342 = vpow.pop %v2341
        %v2343 = vmul.f32 %v2195, 1.442695
        %v2344 = vpow.pop %v2343
        %v2345 = vmul.f32 %v2196, 1.442695
        %v2346 = vpow.pop %v2345
        %v2347 = vmul.f32 %v2197, 1.442695
        %v2348 = vpow.pop %v2347
        %v2349 = vmul.f32 %v2198, 1.442695
        %v2350 = vpow.pop %v2349
        %v2351 = vmul.f32 %v2199, 1.442695
        %v2352 = vpow.pop %v2351
        %v2353 = vmul.f32 %v2200, 1.442695
        %v2354 = vpow.pop %v2353
        %v2355 = vmul.f32 %v2201, 1.442695
        %v2356 = vpow.pop %v2355
        %v2357 = vmul.f32 %v2202, 1.442695
        %v2358 = vpow.pop %v2357
        %v2359 = vmul.f32 %v2203, 1.442695
        %v2360 = vpow.pop %v2359
        %v2361 = vmul.f32 %v2204, 1.442695
        %v2362 = vpow.pop %v2361
        %v2363 = vmul.f32 %v2205, 1.442695
        %v2364 = vpow.pop %v2363
        %v2365 = vmul.f32 %v2206, 1.442695
        %v2366 = vpow.pop %v2365
        %v2367 = vmul.f32 %v2207, 1.442695
        %v2368 = vpow.pop %v2367
        %v2369 = vmul.f32 %v2208, 1.442695
        %v2370 = vpow.pop %v2369
        %v2371 = vmul.f32 %v2209, 1.442695
        %v2372 = vpow.pop %v2371
        %v2373 = vmul.f32 %v2210, 1.442695
        %v2374 = vpow.pop %v2373
        %v2375 = vmul.f32 %v2211, 1.442695
        %v2376 = vpow.pop %v2375
        %v2377 = vmul.f32 %v2212, 1.442695
        %v2378 = vpow.pop %v2377
        %v2379 = vmul.f32 %v2213, 1.442695
        %v2380 = vpow.pop %v2379
        %v2381 = vmul.f32 %v2214, 1.442695
        %v2382 = vpow.pop %v2381
        %v2383 = vmul.f32 %v2215, 1.442695
        %v2384 = vpow.pop %v2383
        %v2385 = vmul.f32 %v2216, 1.442695
        %v2386 = vpow.pop %v2385
        %v2387 = vmul.f32 %v2217, 1.442695
        %v2388 = vpow.pop %v2387
        %v2389 = vmul.f32 %v2218, 1.442695
        %v2390 = vpow.pop %v2389
        %v2391 = vmul.f32 %v2219, 1.442695
        %v2392 = vpow.pop %v2391
        %v2393 = vmul.f32 %v2220, 1.442695
        %v2394 = vpow.pop %v2393
        %v2395 = vmul.f32 %v2221, 1.442695
        %v2396 = vpow.pop %v2395
        %v2397 = vmul.f32 %v2222, 1.442695
        %v2398 = vpow.pop %v2397
        %v2399 = vmul.f32 %v2223, 1.442695
        %v2400 = vpow.pop %v2399
        %v2401 = vmul.f32 %v2224, 1.442695
        %v2402 = vpow.pop %v2401
        %v2403 = vmul.f32 %v2225, 1.442695
        %v2404 = vpow.pop %v2403
        %v2405 = vmul.f32 %v2226, 1.442695
        %v2406 = vpow.pop %v2405
        %v2407 = vmul.f32 %v2227, 1.442695
        %v2408 = vpow.pop %v2407
        %v2409 = vmul.f32 %v2228, 1.442695
        %v2410 = vpow.pop %v2409
        %v2411 = vmul.f32 %v2229, 1.442695
        %v2412 = vpow.pop %v2411
        %v2413 = vmul.f32 %v2230, 1.442695
        %v2414 = vpow.pop %v2413
        %v2415 = vmul.f32 %v2231, 1.442695
        %v2416 = vpow.pop %v2415
        %v2417 = vmul.f32 %v2232, 1.442695
        %v2418 = vpow.pop %v2417
        %v2419 = vmul.f32 %v2233, 1.442695
        %v2420 = vpow.pop %v2419
        %v2421 = vmul.f32 %v2234, 1.442695
        %v2422 = vpow.pop %v2421
        %v2423 = vmul.f32 %v2235, 1.442695
        %v2424 = vpow.pop %v2423
        %v2425 = vmul.f32 %v2236, 1.442695
        %v2426 = vpow.pop %v2425
        %v2427 = vmul.f32 %v2237, 1.442695
        %v2428 = vpow.pop %v2427
        %v2429 = vmul.f32 %v2238, 1.442695
        %v2430 = vpow.pop %v2429
        %v2431 = vmul.f32 %v2239, 1.442695
        %v2432 = vpow.pop %v2431
        %v2433 = vmul.f32 %v2240, 1.442695
        %v2434 = vpow.pop %v2433
        %v2435 = vmul.f32 %v2241, 1.442695
        %v2436 = vpow.pop %v2435
        %v2437 = vmul.f32 %v2242, 1.442695
        %v2438 = vpow.pop %v2437
        %v2439 = vmul.f32 %v2243, 1.442695
        %v2440 = vpow.pop %v2439
        %v2441 = vmul.f32 %v2244, 1.442695
        %v2442 = vpow.pop %v2441
        %v2443 = vmul.f32 %v2245, 1.442695
        %v2444 = vpow.pop %v2443
        %v2445 = vmul.f32 %v2246, 1.442695
        %v2446 = vpow.pop %v2445
        %v2447 = vmul.f32 %v2247, 1.442695
        %v2448 = vpow.pop %v2447
        %v2449 = vmul.f32 %v2248, 1.442695
        %v2450 = vpow.pop %v2449
        %v2451 = vmul.f32 %v2249, 1.442695
        %v2452 = vpow.pop %v2451
        %v2453 = vmul.f32 %v2250, 1.442695
        %v2454 = vpow.pop %v2453
        %v2455 = vmul.f32 %v2251, 1.442695
        %v2456 = vpow.pop %v2455
        %v2457 = vmul.f32 %v2252, 1.442695
        %v2458 = vpow.pop %v2457
        %v2459 = vmul.f32 %v2253, 1.442695
        %v2460 = vpow.pop %v2459
        %v2461 = vmul.f32 %v2254, 1.442695
        %v2462 = vpow.pop %v2461
        %v2463 = vmul.f32 %v2255, 1.442695
        %v2464 = vpow.pop %v2463
        %v2465 = vmul.f32 %v2256, 1.442695
        %v2466 = vpow.pop %v2465
        %v2467 = vmul.f32 %v2257, 1.442695
        %v2468 = vpow.pop %v2467
        %v2469 = vmul.f32 %v2258, 1.442695
        %v2470 = vpow.pop %v2469
        %v2471 = vmul.f32 %v2259, 1.442695
        %v2472 = vpow.pop %v2471
        %v2473 = vmul.f32 %v2260, 1.442695
        %v2474 = vpow.pop %v2473
        %v2475 = vmul.f32 %v2261, 1.442695
        %v2476 = vpow.pop %v2475
        %v2477 = vmul.f32 %v2262, 1.442695
        %v2478 = vpow.pop %v2477
        %v2479 = vmul.f32 %v2263, 1.442695
        %v2480 = vpow.pop %v2479
        %v2481 = vmul.f32 %v2264, 1.442695
        %v2482 = vpow.pop %v2481
        %v2483 = vmul.f32 %v2265, 1.442695
        %v2484 = vpow.pop %v2483
        %v2485 = vmul.f32 %v2266, 1.442695
        %v2486 = vpow.pop %v2485
        %v2487 = vmul.f32 %v2267, 1.442695
        %v2488 = vpow.pop %v2487
        %v2489 = vmul.f32 %v2268, 1.442695
        %v2490 = vpow.pop %v2489
        %v2491 = vmul.f32 %v2269, 1.442695
        %v2492 = vpow.pop %v2491
        %v2493 = vmul.f32 %v2270, 1.442695
        %v2494 = vpow.pop %v2493
        %v2495 = vmul.f32 %v2271, 1.442695
        %v2496 = vpow.pop %v2495
        %v2497 = vmul.f32 %v2272, 1.442695
        %v2498 = vpow.pop %v2497
        %v2499 = vmul.f32 %v2273, 1.442695
        %v2500 = vpow.pop %v2499
        %v2501 = vmul.f32 %v2274, 1.442695
        %v2502 = vpow.pop %v2501
        %v2503 = vmul.f32 %v2275, 1.442695
        %v2504 = vpow.pop %v2503
        %v2505 = vmul.f32 %v2276, 1.442695
        %v2506 = vpow.pop %v2505
        %v2507 = vmul.f32 %v2277, 1.442695
        %v2508 = vpow.pop %v2507
        %v2509 = vmul.f32 %v2278, 1.442695
        %v2510 = vpow.pop %v2509
        %v2511 = vmul.f32 %v2279, 1.442695
        %v2512 = vpow.pop %v2511
        %v2513 = vmul.f32 %v2280, 1.442695
        %v2514 = vpow.pop %v2513
        %v2515 = vmul.f32 %v2281, 1.442695
        %v2516 = vpow.pop %v2515
        %v2517 = vmul.f32 %v2282, 1.442695
        %v2518 = vpow.pop %v2517
        %v2519 = vmul.f32 %v2283, 1.442695
        %v2520 = vpow.pop %v2519
        %v2521 = vmul.f32 %v2284, 1.442695
        %v2522 = vpow.pop %v2521
        %v2523 = vmul.f32 %v2285, 1.442695
        %v2524 = vpow.pop %v2523
        %v2525 = vmul.f32 %v2286, 1.442695
        %v2526 = vpow.pop %v2525
        %v2527 = vmul.f32 %v2287, 1.442695
        %v2528 = vpow.pop %v2527
        %v2529 = vmul.f32 %v2288, 1.442695
        %v2530 = vpow.pop %v2529
        %v2531 = vmul.f32 %v2289, 1.442695
        %v2532 = vpow.pop %v2531
        %v2533 = vmul.f32 %v2290, 1.442695
        %v2534 = vpow.pop %v2533
        %v2535 = vmul.f32 %v2291, 1.442695
        %v2536 = vpow.pop %v2535
        %v2537 = vmul.f32 %v2292, 1.442695
        %v2538 = vpow.pop %v2537
        %v2539 = vmul.f32 %v2293, 1.442695
        %v2540 = vpow.pop %v2539
        %v2541 = vmul.f32 %v2294, 1.442695
        %v2542 = vpow.pop %v2541
        %v2543 = vmul.f32 %v2295, 1.442695
        %v2544 = vpow.pop %v2543
        %v2545 = vmul.f32 %v2296, 1.442695
        %v2546 = vpow.pop %v2545
        %v2547 = vmul.f32 %v2297, 1.442695
        %v2548 = vpow.pop %v2547
        %v2549 = vmul.f32 %v2298, 1.442695
        %v2550 = vpow.pop %v2549
        %v2551 = vmul.f32 %v2299, 1.442695
        %v2552 = vpow.pop %v2551
        %v2553 = vmul.f32 %v2300, 1.442695
        %v2554 = vpow.pop %v2553
        %v2555 = vmul.f32 %v2301, 1.442695
        %v2556 = vpow.pop %v2555
        %v2557 = vmul.f32 %v2302, 1.442695
        %v2558 = vpow.pop %v2557
        %v2559 = vadd.f32 %v2304, 1.0
        %v2560 = vadd.f32 %v2306, 1.0
        %v2561 = vadd.f32 %v2308, 1.0
        %v2562 = vadd.f32 %v2310, 1.0
        %v2563 = vadd.f32 %v2312, 1.0
        %v2564 = vadd.f32 %v2314, 1.0
        %v2565 = vadd.f32 %v2316, 1.0
        %v2566 = vadd.f32 %v2318, 1.0
        %v2567 = vadd.f32 %v2320, 1.0
        %v2568 = vadd.f32 %v2322, 1.0
        %v2569 = vadd.f32 %v2324, 1.0
        %v2570 = vadd.f32 %v2326, 1.0
        %v2571 = vadd.f32 %v2328, 1.0
        %v2572 = vadd.f32 %v2330, 1.0
        %v2573 = vadd.f32 %v2332, 1.0
        %v2574 = vadd.f32 %v2334, 1.0
        %v2575 = vadd.f32 %v2336, 1.0
        %v2576 = vadd.f32 %v2338, 1.0
        %v2577 = vadd.f32 %v2340, 1.0
        %v2578 = vadd.f32 %v2342, 1.0
        %v2579 = vadd.f32 %v2344, 1.0
        %v2580 = vadd.f32 %v2346, 1.0
        %v2581 = vadd.f32 %v2348, 1.0
        %v2582 = vadd.f32 %v2350, 1.0
        %v2583 = vadd.f32 %v2352, 1.0
        %v2584 = vadd.f32 %v2354, 1.0
        %v2585 = vadd.f32 %v2356, 1.0
        %v2586 = vadd.f32 %v2358, 1.0
        %v2587 = vadd.f32 %v2360, 1.0
        %v2588 = vadd.f32 %v2362, 1.0
        %v2589 = vadd.f32 %v2364, 1.0
        %v2590 = vadd.f32 %v2366, 1.0
        %v2591 = vadd.f32 %v2368, 1.0
        %v2592 = vadd.f32 %v2370, 1.0
        %v2593 = vadd.f32 %v2372, 1.0
        %v2594 = vadd.f32 %v2374, 1.0
        %v2595 = vadd.f32 %v2376, 1.0
        %v2596 = vadd.f32 %v2378, 1.0
        %v2597 = vadd.f32 %v2380, 1.0
        %v2598 = vadd.f32 %v2382, 1.0
        %v2599 = vadd.f32 %v2384, 1.0
        %v2600 = vadd.f32 %v2386, 1.0
        %v2601 = vadd.f32 %v2388, 1.0
        %v2602 = vadd.f32 %v2390, 1.0
        %v2603 = vadd.f32 %v2392, 1.0
        %v2604 = vadd.f32 %v2394, 1.0
        %v2605 = vadd.f32 %v2396, 1.0
        %v2606 = vadd.f32 %v2398, 1.0
        %v2607 = vadd.f32 %v2400, 1.0
        %v2608 = vadd.f32 %v2402, 1.0
        %v2609 = vadd.f32 %v2404, 1.0
        %v2610 = vadd.f32 %v2406, 1.0
        %v2611 = vadd.f32 %v2408, 1.0
        %v2612 = vadd.f32 %v2410, 1.0
        %v2613 = vadd.f32 %v2412, 1.0
        %v2614 = vadd.f32 %v2414, 1.0
        %v2615 = vadd.f32 %v2416, 1.0
        %v2616 = vadd.f32 %v2418, 1.0
        %v2617 = vadd.f32 %v2420, 1.0
        %v2618 = vadd.f32 %v2422, 1.0
        %v2619 = vadd.f32 %v2424, 1.0
        %v2620 = vadd.f32 %v2426, 1.0
        %v2621 = vadd.f32 %v2428, 1.0
        %v2622 = vadd.f32 %v2430, 1.0
        %v2623 = vadd.f32 %v2432, 1.0
        %v2624 = vadd.f32 %v2434, 1.0
        %v2625 = vadd.f32 %v2436, 1.0
        %v2626 = vadd.f32 %v2438, 1.0
        %v2627 = vadd.f32 %v2440, 1.0
        %v2628 = vadd.f32 %v2442, 1.0
        %v2629 = vadd.f32 %v2444, 1.0
        %v2630 = vadd.f32 %v2446, 1.0
        %v2631 = vadd.f32 %v2448, 1.0
        %v2632 = vadd.f32 %v2450, 1.0
        %v2633 = vadd.f32 %v2452, 1.0
        %v2634 = vadd.f32 %v2454, 1.0
        %v2635 = vadd.f32 %v2456, 1.0
        %v2636 = vadd.f32 %v2458, 1.0
        %v2637 = vadd.f32 %v2460, 1.0
        %v2638 = vadd.f32 %v2462, 1.0
        %v2639 = vadd.f32 %v2464, 1.0
        %v2640 = vadd.f32 %v2466, 1.0
        %v2641 = vadd.f32 %v2468, 1.0
        %v2642 = vadd.f32 %v2470, 1.0
        %v2643 = vadd.f32 %v2472, 1.0
        %v2644 = vadd.f32 %v2474, 1.0
        %v2645 = vadd.f32 %v2476, 1.0
        %v2646 = vadd.f32 %v2478, 1.0
        %v2647 = vadd.f32 %v2480, 1.0
        %v2648 = vadd.f32 %v2482, 1.0
        %v2649 = vadd.f32 %v2484, 1.0
        %v2650 = vadd.f32 %v2486, 1.0
        %v2651 = vadd.f32 %v2488, 1.0
        %v2652 = vadd.f32 %v2490, 1.0
        %v2653 = vadd.f32 %v2492, 1.0
        %v2654 = vadd.f32 %v2494, 1.0
        %v2655 = vadd.f32 %v2496, 1.0
        %v2656 = vadd.f32 %v2498, 1.0
        %v2657 = vadd.f32 %v2500, 1.0
        %v2658 = vadd.f32 %v2502, 1.0
        %v2659 = vadd.f32 %v2504, 1.0
        %v2660 = vadd.f32 %v2506, 1.0
        %v2661 = vadd.f32 %v2508, 1.0
        %v2662 = vadd.f32 %v2510, 1.0
        %v2663 = vadd.f32 %v2512, 1.0
        %v2664 = vadd.f32 %v2514, 1.0
        %v2665 = vadd.f32 %v2516, 1.0
        %v2666 = vadd.f32 %v2518, 1.0
        %v2667 = vadd.f32 %v2520, 1.0
        %v2668 = vadd.f32 %v2522, 1.0
        %v2669 = vadd.f32 %v2524, 1.0
        %v2670 = vadd.f32 %v2526, 1.0
        %v2671 = vadd.f32 %v2528, 1.0
        %v2672 = vadd.f32 %v2530, 1.0
        %v2673 = vadd.f32 %v2532, 1.0
        %v2674 = vadd.f32 %v2534, 1.0
        %v2675 = vadd.f32 %v2536, 1.0
        %v2676 = vadd.f32 %v2538, 1.0
        %v2677 = vadd.f32 %v2540, 1.0
        %v2678 = vadd.f32 %v2542, 1.0
        %v2679 = vadd.f32 %v2544, 1.0
        %v2680 = vadd.f32 %v2546, 1.0
        %v2681 = vadd.f32 %v2548, 1.0
        %v2682 = vadd.f32 %v2550, 1.0
        %v2683 = vadd.f32 %v2552, 1.0
        %v2684 = vadd.f32 %v2554, 1.0
        %v2685 = vadd.f32 %v2556, 1.0
        %v2686 = vadd.f32 %v2558, 1.0
        %v2687 = vrcp.pop %v2559
        %v2688 = vmul.f32 1.0, %v2687
        %v2689 = vrcp.pop %v2560
        %v2690 = vmul.f32 1.0, %v2689
        %v2691 = vrcp.pop %v2561
        %v2692 = vmul.f32 1.0, %v2691
        %v2693 = vrcp.pop %v2562
        %v2694 = vmul.f32 1.0, %v2693
        %v2695 = vrcp.pop %v2563
        %v2696 = vmul.f32 1.0, %v2695
        %v2697 = vrcp.pop %v2564
        %v2698 = vmul.f32 1.0, %v2697
        %v2699 = vrcp.pop %v2565
        %v2700 = vmul.f32 1.0, %v2699
        %v2701 = vrcp.pop %v2566
        %v2702 = vmul.f32 1.0, %v2701
        %v2703 = vrcp.pop %v2567
        %v2704 = vmul.f32 1.0, %v2703
        %v2705 = vrcp.pop %v2568
        %v2706 = vmul.f32 1.0, %v2705
        %v2707 = vrcp.pop %v2569
        %v2708 = vmul.f32 1.0, %v2707
        %v2709 = vrcp.pop %v2570
        %v2710 = vmul.f32 1.0, %v2709
        %v2711 = vrcp.pop %v2571
        %v2712 = vmul.f32 1.0, %v2711
        %v2713 = vrcp.pop %v2572
        %v2714 = vmul.f32 1.0, %v2713
        %v2715 = vrcp.pop %v2573
        %v2716 = vmul.f32 1.0, %v2715
        %v2717 = vrcp.pop %v2574
        %v2718 = vmul.f32 1.0, %v2717
        %v2719 = vrcp.pop %v2575
        %v2720 = vmul.f32 1.0, %v2719
        %v2721 = vrcp.pop %v2576
        %v2722 = vmul.f32 1.0, %v2721
        %v2723 = vrcp.pop %v2577
        %v2724 = vmul.f32 1.0, %v2723
        %v2725 = vrcp.pop %v2578
        %v2726 = vmul.f32 1.0, %v2725
        %v2727 = vrcp.pop %v2579
        %v2728 = vmul.f32 1.0, %v2727
        %v2729 = vrcp.pop %v2580
        %v2730 = vmul.f32 1.0, %v2729
        %v2731 = vrcp.pop %v2581
        %v2732 = vmul.f32 1.0, %v2731
        %v2733 = vrcp.pop %v2582
        %v2734 = vmul.f32 1.0, %v2733
        %v2735 = vrcp.pop %v2583
        %v2736 = vmul.f32 1.0, %v2735
        %v2737 = vrcp.pop %v2584
        %v2738 = vmul.f32 1.0, %v2737
        %v2739 = vrcp.pop %v2585
        %v2740 = vmul.f32 1.0, %v2739
        %v2741 = vrcp.pop %v2586
        %v2742 = vmul.f32 1.0, %v2741
        %v2743 = vrcp.pop %v2587
        %v2744 = vmul.f32 1.0, %v2743
        %v2745 = vrcp.pop %v2588
        %v2746 = vmul.f32 1.0, %v2745
        %v2747 = vrcp.pop %v2589
        %v2748 = vmul.f32 1.0, %v2747
        %v2749 = vrcp.pop %v2590
        %v2750 = vmul.f32 1.0, %v2749
        %v2751 = vrcp.pop %v2591
        %v2752 = vmul.f32 1.0, %v2751
        %v2753 = vrcp.pop %v2592
        %v2754 = vmul.f32 1.0, %v2753
        %v2755 = vrcp.pop %v2593
        %v2756 = vmul.f32 1.0, %v2755
        %v2757 = vrcp.pop %v2594
        %v2758 = vmul.f32 1.0, %v2757
        %v2759 = vrcp.pop %v2595
        %v2760 = vmul.f32 1.0, %v2759
        %v2761 = vrcp.pop %v2596
        %v2762 = vmul.f32 1.0, %v2761
        %v2763 = vrcp.pop %v2597
        %v2764 = vmul.f32 1.0, %v2763
        %v2765 = vrcp.pop %v2598
        %v2766 = vmul.f32 1.0, %v2765
        %v2767 = vrcp.pop %v2599
        %v2768 = vmul.f32 1.0, %v2767
        %v2769 = vrcp.pop %v2600
        %v2770 = vmul.f32 1.0, %v2769
        %v2771 = vrcp.pop %v2601
        %v2772 = vmul.f32 1.0, %v2771
        %v2773 = vrcp.pop %v2602
        %v2774 = vmul.f32 1.0, %v2773
        %v2775 = vrcp.pop %v2603
        %v2776 = vmul.f32 1.0, %v2775
        %v2777 = vrcp.pop %v2604
        %v2778 = vmul.f32 1.0, %v2777
        %v2779 = vrcp.pop %v2605
        %v2780 = vmul.f32 1.0, %v2779
        %v2781 = vrcp.pop %v2606
        %v2782 = vmul.f32 1.0, %v2781
        %v2783 = vrcp.pop %v2607
        %v2784 = vmul.f32 1.0, %v2783
        %v2785 = vrcp.pop %v2608
        %v2786 = vmul.f32 1.0, %v2785
        %v2787 = vrcp.pop %v2609
        %v2788 = vmul.f32 1.0, %v2787
        %v2789 = vrcp.pop %v2610
        %v2790 = vmul.f32 1.0, %v2789
        %v2791 = vrcp.pop %v2611
        %v2792 = vmul.f32 1.0, %v2791
        %v2793 = vrcp.pop %v2612
        %v2794 = vmul.f32 1.0, %v2793
        %v2795 = vrcp.pop %v2613
        %v2796 = vmul.f32 1.0, %v2795
        %v2797 = vrcp.pop %v2614
        %v2798 = vmul.f32 1.0, %v2797
        %v2799 = vrcp.pop %v2615
        %v2800 = vmul.f32 1.0, %v2799
        %v2801 = vrcp.pop %v2616
        %v2802 = vmul.f32 1.0, %v2801
        %v2803 = vrcp.pop %v2617
        %v2804 = vmul.f32 1.0, %v2803
        %v2805 = vrcp.pop %v2618
        %v2806 = vmul.f32 1.0, %v2805
        %v2807 = vrcp.pop %v2619
        %v2808 = vmul.f32 1.0, %v2807
        %v2809 = vrcp.pop %v2620
        %v2810 = vmul.f32 1.0, %v2809
        %v2811 = vrcp.pop %v2621
        %v2812 = vmul.f32 1.0, %v2811
        %v2813 = vrcp.pop %v2622
        %v2814 = vmul.f32 1.0, %v2813
        %v2815 = vrcp.pop %v2623
        %v2816 = vmul.f32 1.0, %v2815
        %v2817 = vrcp.pop %v2624
        %v2818 = vmul.f32 1.0, %v2817
        %v2819 = vrcp.pop %v2625
        %v2820 = vmul.f32 1.0, %v2819
        %v2821 = vrcp.pop %v2626
        %v2822 = vmul.f32 1.0, %v2821
        %v2823 = vrcp.pop %v2627
        %v2824 = vmul.f32 1.0, %v2823
        %v2825 = vrcp.pop %v2628
        %v2826 = vmul.f32 1.0, %v2825
        %v2827 = vrcp.pop %v2629
        %v2828 = vmul.f32 1.0, %v2827
        %v2829 = vrcp.pop %v2630
        %v2830 = vmul.f32 1.0, %v2829
        %v2831 = vrcp.pop %v2631
        %v2832 = vmul.f32 1.0, %v2831
        %v2833 = vrcp.pop %v2632
        %v2834 = vmul.f32 1.0, %v2833
        %v2835 = vrcp.pop %v2633
        %v2836 = vmul.f32 1.0, %v2835
        %v2837 = vrcp.pop %v2634
        %v2838 = vmul.f32 1.0, %v2837
        %v2839 = vrcp.pop %v2635
        %v2840 = vmul.f32 1.0, %v2839
        %v2841 = vrcp.pop %v2636
        %v2842 = vmul.f32 1.0, %v2841
        %v2843 = vrcp.pop %v2637
        %v2844 = vmul.f32 1.0, %v2843
        %v2845 = vrcp.pop %v2638
        %v2846 = vmul.f32 1.0, %v2845
        %v2847 = vrcp.pop %v2639
        %v2848 = vmul.f32 1.0, %v2847
        %v2849 = vrcp.pop %v2640
        %v2850 = vmul.f32 1.0, %v2849
        %v2851 = vrcp.pop %v2641
        %v2852 = vmul.f32 1.0, %v2851
        %v2853 = vrcp.pop %v2642
        %v2854 = vmul.f32 1.0, %v2853
        %v2855 = vrcp.pop %v2643
        %v2856 = vmul.f32 1.0, %v2855
        %v2857 = vrcp.pop %v2644
        %v2858 = vmul.f32 1.0, %v2857
        %v2859 = vrcp.pop %v2645
        %v2860 = vmul.f32 1.0, %v2859
        %v2861 = vrcp.pop %v2646
        %v2862 = vmul.f32 1.0, %v2861
        %v2863 = vrcp.pop %v2647
        %v2864 = vmul.f32 1.0, %v2863
        %v2865 = vrcp.pop %v2648
        %v2866 = vmul.f32 1.0, %v2865
        %v2867 = vrcp.pop %v2649
        %v2868 = vmul.f32 1.0, %v2867
        %v2869 = vrcp.pop %v2650
        %v2870 = vmul.f32 1.0, %v2869
        %v2871 = vrcp.pop %v2651
        %v2872 = vmul.f32 1.0, %v2871
        %v2873 = vrcp.pop %v2652
        %v2874 = vmul.f32 1.0, %v2873
        %v2875 = vrcp.pop %v2653
        %v2876 = vmul.f32 1.0, %v2875
        %v2877 = vrcp.pop %v2654
        %v2878 = vmul.f32 1.0, %v2877
        %v2879 = vrcp.pop %v2655
        %v2880 = vmul.f32 1.0, %v2879
        %v2881 = vrcp.pop %v2656
        %v2882 = vmul.f32 1.0, %v2881
        %v2883 = vrcp.pop %v2657
        %v2884 = vmul.f32 1.0, %v2883
        %v2885 = vrcp.pop %v2658
        %v2886 = vmul.f32 1.0, %v2885
        %v2887 = vrcp.pop %v2659
        %v2888 = vmul.f32 1.0, %v2887
        %v2889 = vrcp.pop %v2660
        %v2890 = vmul.f32 1.0, %v2889
        %v2891 = vrcp.pop %v2661
        %v2892 = vmul.f32 1.0, %v2891
        %v2893 = vrcp.pop %v2662
        %v2894 = vmul.f32 1.0, %v2893
        %v2895 = vrcp.pop %v2663
        %v2896 = vmul.f32 1.0, %v2895
        %v2897 = vrcp.pop %v2664
        %v2898 = vmul.f32 1.0, %v2897
        %v2899 = vrcp.pop %v2665
        %v2900 = vmul.f32 1.0, %v2899
        %v2901 = vrcp.pop %v2666
        %v2902 = vmul.f32 1.0, %v2901
        %v2903 = vrcp.pop %v2667
        %v2904 = vmul.f32 1.0, %v2903
        %v2905 = vrcp.pop %v2668
        %v2906 = vmul.f32 1.0, %v2905
        %v2907 = vrcp.pop %v2669
        %v2908 = vmul.f32 1.0, %v2907
        %v2909 = vrcp.pop %v2670
        %v2910 = vmul.f32 1.0, %v2909
        %v2911 = vrcp.pop %v2671
        %v2912 = vmul.f32 1.0, %v2911
        %v2913 = vrcp.pop %v2672
        %v2914 = vmul.f32 1.0, %v2913
        %v2915 = vrcp.pop %v2673
        %v2916 = vmul.f32 1.0, %v2915
        %v2917 = vrcp.pop %v2674
        %v2918 = vmul.f32 1.0, %v2917
        %v2919 = vrcp.pop %v2675
        %v2920 = vmul.f32 1.0, %v2919
        %v2921 = vrcp.pop %v2676
        %v2922 = vmul.f32 1.0, %v2921
        %v2923 = vrcp.pop %v2677
        %v2924 = vmul.f32 1.0, %v2923
        %v2925 = vrcp.pop %v2678
        %v2926 = vmul.f32 1.0, %v2925
        %v2927 = vrcp.pop %v2679
        %v2928 = vmul.f32 1.0, %v2927
        %v2929 = vrcp.pop %v2680
        %v2930 = vmul.f32 1.0, %v2929
        %v2931 = vrcp.pop %v2681
        %v2932 = vmul.f32 1.0, %v2931
        %v2933 = vrcp.pop %v2682
        %v2934 = vmul.f32 1.0, %v2933
        %v2935 = vrcp.pop %v2683
        %v2936 = vmul.f32 1.0, %v2935
        %v2937 = vrcp.pop %v2684
        %v2938 = vmul.f32 1.0, %v2937
        %v2939 = vrcp.pop %v2685
        %v2940 = vmul.f32 1.0, %v2939
        %v2941 = vrcp.pop %v2686
        %v2942 = vmul.f32 1.0, %v2941
        %v2943 = vmul.f32 %v1758, %v2688
        %v2944 = vmul.f32 %v1760, %v2690
        %v2945 = vmul.f32 %v1871, %v2692
        %v2946 = vmul.f32 %v1873, %v2694
        %v2947 = vmul.f32 %v1984, %v2696
        %v2948 = vmul.f32 %v1986, %v2698
        %v2949 = vmul.f32 %v2097, %v2700
        %v2950 = vmul.f32 %v2099, %v2702
        %v2951 = vmul.f32 %v1762, %v2704
        %v2952 = vmul.f32 %v1764, %v2706
        %v2953 = vmul.f32 %v1875, %v2708
        %v2954 = vmul.f32 %v1877, %v2710
        %v2955 = vmul.f32 %v1988, %v2712
        %v2956 = vmul.f32 %v1990, %v2714
        %v2957 = vmul.f32 %v2101, %v2716
        %v2958 = vmul.f32 %v2103, %v2718
        %v2959 = vmul.f32 %v1768, %v2720
        %v2960 = vmul.f32 %v1770, %v2722
        %v2961 = vmul.f32 %v1881, %v2724
        %v2962 = vmul.f32 %v1883, %v2726
        %v2963 = vmul.f32 %v1994, %v2728
        %v2964 = vmul.f32 %v1996, %v2730
        %v2965 = vmul.f32 %v2107, %v2732
        %v2966 = vmul.f32 %v2109, %v2734
        %v2967 = vmul.f32 %v1772, %v2736
        %v2968 = vmul.f32 %v1774, %v2738
        %v2969 = vmul.f32 %v1885, %v2740
        %v2970 = vmul.f32 %v1887, %v2742
        %v2971 = vmul.f32 %v1998, %v2744
        %v2972 = vmul.f32 %v2000, %v2746
        %v2973 = vmul.f32 %v2111, %v2748
        %v2974 = vmul.f32 %v2113, %v2750
        %v2975 = vmul.f32 %v1778, %v2752
        %v2976 = vmul.f32 %v1780, %v2754
        %v2977 = vmul.f32 %v1891, %v2756
        %v2978 = vmul.f32 %v1893, %v2758
        %v2979 = vmul.f32 %v2004, %v2760
        %v2980 = vmul.f32 %v2006, %v2762
        %v2981 = vmul.f32 %v2117, %v2764
        %v2982 = vmul.f32 %v2119, %v2766
        %v2983 = vmul.f32 %v1782, %v2768
        %v2984 = vmul.f32 %v1784, %v2770
        %v2985 = vmul.f32 %v1895, %v2772
        %v2986 = vmul.f32 %v1897, %v2774
        %v2987 = vmul.f32 %v2008, %v2776
        %v2988 = vmul.f32 %v2010, %v2778
        %v2989 = vmul.f32 %v2121, %v2780
        %v2990 = vmul.f32 %v2123, %v2782
        %v2991 = vmul.f32 %v1788, %v2784
        %v2992 = vmul.f32 %v1790, %v2786
        %v2993 = vmul.f32 %v1901, %v2788
        %v2994 = vmul.f32 %v1903, %v2790
        %v2995 = vmul.f32 %v2014, %v2792
        %v2996 = vmul.f32 %v2016, %v2794
        %v2997 = vmul.f32 %v2127, %v2796
        %v2998 = vmul.f32 %v2129, %v2798
        %v2999 = vmul.f32 %v1792, %v2800
        %v3000 = vmul.f32 %v1794, %v2802
        %v3001 = vmul.f32 %v1905, %v2804
        %v3002 = vmul.f32 %v1907, %v2806
        %v3003 = vmul.f32 %v2018, %v2808
        %v3004 = vmul.f32 %v2020, %v2810
        %v3005 = vmul.f32 %v2131, %v2812
        %v3006 = vmul.f32 %v2133, %v2814
        %v3007 = vmul.f32 %v1798, %v2816
        %v3008 = vmul.f32 %v1800, %v2818
        %v3009 = vmul.f32 %v1911, %v2820
        %v3010 = vmul.f32 %v1913, %v2822
        %v3011 = vmul.f32 %v2024, %v2824
        %v3012 = vmul.f32 %v2026, %v2826
        %v3013 = vmul.f32 %v2137, %v2828
        %v3014 = vmul.f32 %v2139, %v2830
        %v3015 = vmul.f32 %v1802, %v2832
        %v3016 = vmul.f32 %v1804, %v2834
        %v3017 = vmul.f32 %v1915, %v2836
        %v3018 = vmul.f32 %v1917, %v2838
        %v3019 = vmul.f32 %v2028, %v2840
        %v3020 = vmul.f32 %v2030, %v2842
        %v3021 = vmul.f32 %v2141, %v2844
        %v3022 = vmul.f32 %v2143, %v2846
        %v3023 = vmul.f32 %v1808, %v2848
        %v3024 = vmul.f32 %v1810, %v2850
        %v3025 = vmul.f32 %v1921, %v2852
        %v3026 = vmul.f32 %v1923, %v2854
        %v3027 = vmul.f32 %v2034, %v2856
        %v3028 = vmul.f32 %v2036, %v2858
        %v3029 = vmul.f32 %v2147, %v2860
        %v3030 = vmul.f32 %v2149, %v2862
        %v3031 = vmul.f32 %v1812, %v2864
        %v3032 = vmul.f32 %v1814, %v2866
        %v3033 = vmul.f32 %v1925, %v2868
        %v3034 = vmul.f32 %v1927, %v2870
        %v3035 = vmul.f32 %v2038, %v2872
        %v3036 = vmul.f32 %v2040, %v2874
        %v3037 = vmul.f32 %v2151, %v2876
        %v3038 = vmul.f32 %v2153, %v2878
        %v3039 = vmul.f32 %v1818, %v2880
        %v3040 = vmul.f32 %v1820, %v2882
        %v3041 = vmul.f32 %v1931, %v2884
        %v3042 = vmul.f32 %v1933, %v2886
        %v3043 = vmul.f32 %v2044, %v2888
        %v3044 = vmul.f32 %v2046, %v2890
        %v3045 = vmul.f32 %v2157, %v2892
        %v3046 = vmul.f32 %v2159, %v2894
        %v3047 = vmul.f32 %v1822, %v2896
        %v3048 = vmul.f32 %v1824, %v2898
        %v3049 = vmul.f32 %v1935, %v2900
        %v3050 = vmul.f32 %v1937, %v2902
        %v3051 = vmul.f32 %v2048, %v2904
        %v3052 = vmul.f32 %v2050, %v2906
        %v3053 = vmul.f32 %v2161, %v2908
        %v3054 = vmul.f32 %v2163, %v2910
        %v3055 = vmul.f32 %v1828, %v2912
        %v3056 = vmul.f32 %v1830, %v2914
        %v3057 = vmul.f32 %v1941, %v2916
        %v3058 = vmul.f32 %v1943, %v2918
        %v3059 = vmul.f32 %v2054, %v2920
        %v3060 = vmul.f32 %v2056, %v2922
        %v3061 = vmul.f32 %v2167, %v2924
        %v3062 = vmul.f32 %v2169, %v2926
        %v3063 = vmul.f32 %v1832, %v2928
        %v3064 = vmul.f32 %v1834, %v2930
        %v3065 = vmul.f32 %v1945, %v2932
        %v3066 = vmul.f32 %v1947, %v2934
        %v3067 = vmul.f32 %v2058, %v2936
        %v3068 = vmul.f32 %v2060, %v2938
        %v3069 = vmul.f32 %v2171, %v2940
        %v3070 = vmul.f32 %v2173, %v2942
        %v3071 = vld [vmem:[#allocation7] sm:$0xf]
        %v3072 = vld [vmem:[#allocation7 + $0x4] sm:$0xf]
        %v3073 = vld [vmem:[#allocation7 + $0x8] sm:$0xf]
        %v3074 = vld [vmem:[#allocation7 + $0xc] sm:$0xf]
        %v3075 = vld [vmem:[#allocation7 + $0x10] sm:$0xf]
        %v3076 = vld [vmem:[#allocation7 + $0x14] sm:$0xf]
        %v3077 = vld [vmem:[#allocation7 + $0x18] sm:$0xf]
        %v3078 = vld [vmem:[#allocation7 + $0x1c] sm:$0xf]
        %v3079 = vld [vmem:[#allocation7 + $0x20] sm:$0xf]
        %v3080 = vld [vmem:[#allocation7 + $0x24] sm:$0xf]
        %v3081 = vld [vmem:[#allocation7 + $0x28] sm:$0xf]
        %v3082 = vld [vmem:[#allocation7 + $0x2c] sm:$0xf]
        %v3083 = vld [vmem:[#allocation7 + $0x30] sm:$0xf]
        %v3084 = vld [vmem:[#allocation7 + $0x34] sm:$0xf]
        %v3085 = vld [vmem:[#allocation7 + $0x38] sm:$0xf]
        %v3086 = vld [vmem:[#allocation7 + $0x3c] sm:$0xf]
        %v3087 = vld [vmem:[#allocation7 + $0x40] sm:$0xf]
        %v3088 = vld [vmem:[#allocation7 + $0x44] sm:$0xf]
        %v3089 = vld [vmem:[#allocation7 + $0x48] sm:$0xf]
        %v3090 = vld [vmem:[#allocation7 + $0x4c] sm:$0xf]
        %v3091 = vld [vmem:[#allocation7 + $0x50] sm:$0xf]
        %v3092 = vld [vmem:[#allocation7 + $0x54] sm:$0xf]
        %v3093 = vld [vmem:[#allocation7 + $0x58] sm:$0xf]
        %v3094 = vld [vmem:[#allocation7 + $0x5c] sm:$0xf]
        %v3095 = vld [vmem:[#allocation7 + $0x60] sm:$0xf]
        %v3096 = vld [vmem:[#allocation7 + $0x64] sm:$0xf]
        %v3097 = vld [vmem:[#allocation7 + $0x68] sm:$0xf]
        %v3098 = vld [vmem:[#allocation7 + $0x6c] sm:$0xf]
        %v3099 = vld [vmem:[#allocation7 + $0x70] sm:$0xf]
        %v3100 = vld [vmem:[#allocation7 + $0x74] sm:$0xf]
        %v3101 = vld [vmem:[#allocation7 + $0x78] sm:$0xf]
        %v3102 = vld [vmem:[#allocation7 + $0x7c] sm:$0xf]
        %v3103 = vld [vmem:[%s6] sm:$0x1]
        %v3105 = vlaneseq
        %v3106 = vshrl.u32 %v3105, 7
        %v3107 = vsub.s32 0, %v3106
        %v3108 = vrot.slane %v3103, %v3107
        %v3142 = vunpack.c.l.b16 %v3071
        %v3143 = vunpack.c.l.b16 %v3072
        %v3144 = vunpack.c.l.b16 %v3073
        %v3145 = vunpack.c.l.b16 %v3074
        %v3146 = vunpack.c.l.b16 %v3075
        %v3147 = vunpack.c.l.b16 %v3076
        %v3148 = vunpack.c.l.b16 %v3077
        %v3149 = vunpack.c.l.b16 %v3078
        %v3150 = vunpack.c.l.b16 %v3079
        %v3151 = vunpack.c.l.b16 %v3080
        %v3152 = vunpack.c.l.b16 %v3081
        %v3153 = vunpack.c.l.b16 %v3082
        %v3154 = vunpack.c.l.b16 %v3083
        %v3155 = vunpack.c.l.b16 %v3084
        %v3156 = vunpack.c.l.b16 %v3085
        %v3157 = vunpack.c.l.b16 %v3086
        %v3158 = vunpack.c.l.b16 %v3087
        %v3159 = vunpack.c.l.b16 %v3088
        %v3160 = vunpack.c.l.b16 %v3089
        %v3161 = vunpack.c.l.b16 %v3090
        %v3162 = vunpack.c.l.b16 %v3091
        %v3163 = vunpack.c.l.b16 %v3092
        %v3164 = vunpack.c.l.b16 %v3093
        %v3165 = vunpack.c.l.b16 %v3094
        %v3166 = vunpack.c.l.b16 %v3095
        %v3167 = vunpack.c.l.b16 %v3096
        %v3168 = vunpack.c.l.b16 %v3097
        %v3169 = vunpack.c.l.b16 %v3098
        %v3170 = vunpack.c.l.b16 %v3099
        %v3171 = vunpack.c.l.b16 %v3100
        %v3172 = vunpack.c.l.b16 %v3101
        %v3173 = vunpack.c.l.b16 %v3102
        %v3174 = vpack.c.b16 %v3143, %v3142
        %v3175 = vpack.c.b16 %v3145, %v3144
        %v3176 = vpack.c.b16 %v3147, %v3146
        %v3177 = vpack.c.b16 %v3149, %v3148
        %v3178 = vpack.c.b16 %v3151, %v3150
        %v3179 = vpack.c.b16 %v3153, %v3152
        %v3180 = vpack.c.b16 %v3155, %v3154
        %v3181 = vpack.c.b16 %v3157, %v3156
        %v3182 = vpack.c.b16 %v3159, %v3158
        %v3183 = vpack.c.b16 %v3161, %v3160
        %v3184 = vpack.c.b16 %v3163, %v3162
        %v3185 = vpack.c.b16 %v3165, %v3164
        %v3186 = vpack.c.b16 %v3167, %v3166
        %v3187 = vpack.c.b16 %v3169, %v3168
        %v3188 = vpack.c.b16 %v3171, %v3170
        %v3189 = vpack.c.b16 %v3173, %v3172
        %3206 = vmatprep.subr.bf16.mxu0 0
        %3207 = vmatpush1.bf16.msra.mxu0 %v3174
        %3208 = vmatprep.subr.bf16.mxu0 0
        %3209 = vmatpush1.bf16.msra.mxu0 %v3175
        %3210 = vmatprep.subr.bf16.mxu0 0
        %3211 = vmatpush1.bf16.msra.mxu0 %v3176
        %3212 = vmatprep.subr.bf16.mxu0 0
        %3213 = vmatpush1.bf16.msra.mxu0 %v3177
        %3214 = vmatprep.subr.bf16.mxu0 0
        %3215 = vmatpush1.bf16.msra.mxu0 %v3178
        %3216 = vmatprep.subr.bf16.mxu0 0
        %3217 = vmatpush1.bf16.msra.mxu0 %v3179
        %3218 = vmatprep.subr.bf16.mxu0 0
        %3219 = vmatpush1.bf16.msra.mxu0 %v3180
        %3220 = vmatprep.subr.bf16.mxu0 0
        %3221 = vmatpush1.bf16.msra.mxu0 %v3181
        %3222 = vmatprep.subr.bf16.mxu0 0
        %3223 = vmatpush1.bf16.msra.mxu0 %v3182
        %3224 = vmatprep.subr.bf16.mxu0 0
        %3225 = vmatpush1.bf16.msra.mxu0 %v3183
        %3226 = vmatprep.subr.bf16.mxu0 0
        %3227 = vmatpush1.bf16.msra.mxu0 %v3184
        %3228 = vmatprep.subr.bf16.mxu0 0
        %3229 = vmatpush1.bf16.msra.mxu0 %v3185
        %3230 = vmatprep.subr.bf16.mxu0 0
        %3231 = vmatpush1.bf16.msra.mxu0 %v3186
        %3232 = vmatprep.subr.bf16.mxu0 0
        %3233 = vmatpush1.bf16.msra.mxu0 %v3187
        %3234 = vmatprep.subr.bf16.mxu0 0
        %3235 = vmatpush1.bf16.msra.mxu0 %v3188
        %3236 = vmatprep.subr.bf16.mxu0 0
        %3237 = vmatpush1.bf16.msra.mxu0 %v3189
        %3238 = vmatprep.mubr.bf16.mxu0 %v898
        %3239 = vmatmul.mubr.bf16.gmra.mrb[0].mxu0 %v897
        %v3240 = vpop.f32.mrb[0].mxu0
        %v3241 = vadd.f32 %v3108, %v3240
        %v3242 = vpop.f32.mrb[0].mxu0
        %v3243 = vpop.f32.mrb[0].mxu0
        %v3244 = vadd.f32 %v3108, %v3243
        %v3245 = vpop.f32.mrb[0].mxu0
        %3246 = vmatprep.mubr.bf16.mxu0 %v900
        %3247 = vmatmul.mubr.bf16.gmra.mrb[0].mxu0 %v899
        %v3248 = vpop.f32.mrb[0].mxu0
        %v3249 = vadd.f32 %v3108, %v3248
        %v3250 = vpop.f32.mrb[0].mxu0
        %v3251 = vpop.f32.mrb[0].mxu0
        %v3252 = vadd.f32 %v3108, %v3251
        %v3253 = vpop.f32.mrb[0].mxu0
        %3254 = vmatprep.mubr.bf16.mxu0 %v902
        %3255 = vmatmul.mubr.bf16.gmra.mrb[0].mxu0 %v901
        %v3256 = vpop.f32.mrb[0].mxu0
        %v3257 = vadd.f32 %v3108, %v3256
        %v3258 = vpop.f32.mrb[0].mxu0
        %v3259 = vpop.f32.mrb[0].mxu0
        %v3260 = vadd.f32 %v3108, %v3259
        %v3261 = vpop.f32.mrb[0].mxu0
        %3262 = vmatprep.mubr.bf16.mxu0 %v904
        %3263 = vmatmul.mubr.bf16.gmra.mrb[0].mxu0 %v903
        %v3264 = vpop.f32.mrb[0].mxu0
        %v3265 = vadd.f32 %v3108, %v3264
        %v3266 = vpop.f32.mrb[0].mxu0
        %v3267 = vpop.f32.mrb[0].mxu0
        %v3268 = vadd.f32 %v3108, %v3267
        %v3269 = vpop.f32.mrb[0].mxu0
        %3270 = vmatprep.mubr.bf16.mxu0 %v906
        %3271 = vmatmul.mubr.bf16.gmra.mrb[0].mxu0 %v905
        %v3272 = vpop.f32.mrb[0].mxu0
        %v3273 = vadd.f32 %v3108, %v3272
        %v3274 = vpop.f32.mrb[0].mxu0
        %v3275 = vpop.f32.mrb[0].mxu0
        %v3276 = vadd.f32 %v3108, %v3275
        %v3277 = vpop.f32.mrb[0].mxu0
        %3278 = vmatprep.mubr.bf16.mxu0 %v908
        %3279 = vmatmul.mubr.bf16.gmra.mrb[0].mxu0 %v907
        %v3280 = vpop.f32.mrb[0].mxu0
        %v3281 = vadd.f32 %v3108, %v3280
        %v3282 = vpop.f32.mrb[0].mxu0
        %v3283 = vpop.f32.mrb[0].mxu0
        %v3284 = vadd.f32 %v3108, %v3283
        %v3285 = vpop.f32.mrb[0].mxu0
        %3286 = vmatprep.mubr.bf16.mxu0 %v910
        %3287 = vmatmul.mubr.bf16.gmra.mrb[0].mxu0 %v909
        %v3288 = vpop.f32.mrb[0].mxu0
        %v3289 = vadd.f32 %v3108, %v3288
        %v3290 = vpop.f32.mrb[0].mxu0
        %v3291 = vpop.f32.mrb[0].mxu0
        %v3292 = vadd.f32 %v3108, %v3291
        %v3293 = vpop.f32.mrb[0].mxu0
        %3294 = vmatprep.mubr.bf16.mxu0 %v912
        %3295 = vmatmul.mubr.bf16.gmra.mrb[0].mxu0 %v911
        %v3296 = vpop.f32.mrb[0].mxu0
        %v3297 = vadd.f32 %v3108, %v3296
        %v3298 = vpop.f32.mrb[0].mxu0
        %v3299 = vpop.f32.mrb[0].mxu0
        %v3300 = vadd.f32 %v3108, %v3299
        %v3301 = vpop.f32.mrb[0].mxu0
        %3302 = vdwg.mxu0
        %v3303 = vxor.u32 %v3241, 2147483648
        %v3304 = vxor.u32 %v3244, 2147483648
        %v3305 = vxor.u32 %v3249, 2147483648
        %v3306 = vxor.u32 %v3252, 2147483648
        %v3307 = vxor.u32 %v3257, 2147483648
        %v3308 = vxor.u32 %v3260, 2147483648
        %v3309 = vxor.u32 %v3265, 2147483648
        %v3310 = vxor.u32 %v3268, 2147483648
        %v3311 = vxor.u32 %v3273, 2147483648
        %v3312 = vxor.u32 %v3276, 2147483648
        %v3313 = vxor.u32 %v3281, 2147483648
        %v3314 = vxor.u32 %v3284, 2147483648
        %v3315 = vxor.u32 %v3289, 2147483648
        %v3316 = vxor.u32 %v3292, 2147483648
        %v3317 = vxor.u32 %v3297, 2147483648
        %v3318 = vxor.u32 %v3300, 2147483648
        %v3319 = vmul.f32 %v3303, 1.442695
        %v3320 = vpow.pop %v3319
        %v3321 = vmul.f32 %v3304, 1.442695
        %v3322 = vpow.pop %v3321
        %v3323 = vmul.f32 %v3305, 1.442695
        %v3324 = vpow.pop %v3323
        %v3325 = vmul.f32 %v3306, 1.442695
        %v3326 = vpow.pop %v3325
        %v3327 = vmul.f32 %v3307, 1.442695
        %v3328 = vpow.pop %v3327
        %v3329 = vmul.f32 %v3308, 1.442695
        %v3330 = vpow.pop %v3329
        %v3331 = vmul.f32 %v3309, 1.442695
        %v3332 = vpow.pop %v3331
        %v3333 = vmul.f32 %v3310, 1.442695
        %v3334 = vpow.pop %v3333
        %v3335 = vmul.f32 %v3311, 1.442695
        %v3336 = vpow.pop %v3335
        %v3337 = vmul.f32 %v3312, 1.442695
        %v3338 = vpow.pop %v3337
        %v3339 = vmul.f32 %v3313, 1.442695
        %v3340 = vpow.pop %v3339
        %v3341 = vmul.f32 %v3314, 1.442695
        %v3342 = vpow.pop %v3341
        %v3343 = vmul.f32 %v3315, 1.442695
        %v3344 = vpow.pop %v3343
        %v3345 = vmul.f32 %v3316, 1.442695
        %v3346 = vpow.pop %v3345
        %v3347 = vmul.f32 %v3317, 1.442695
        %v3348 = vpow.pop %v3347
        %v3349 = vmul.f32 %v3318, 1.442695
        %v3350 = vpow.pop %v3349
        %v3351 = vadd.f32 %v3320, 1.0
        %v3352 = vadd.f32 %v3322, 1.0
        %v3353 = vadd.f32 %v3324, 1.0
        %v3354 = vadd.f32 %v3326, 1.0
        %v3355 = vadd.f32 %v3328, 1.0
        %v3356 = vadd.f32 %v3330, 1.0
        %v3357 = vadd.f32 %v3332, 1.0
        %v3358 = vadd.f32 %v3334, 1.0
        %v3359 = vadd.f32 %v3336, 1.0
        %v3360 = vadd.f32 %v3338, 1.0
        %v3361 = vadd.f32 %v3340, 1.0
        %v3362 = vadd.f32 %v3342, 1.0
        %v3363 = vadd.f32 %v3344, 1.0
        %v3364 = vadd.f32 %v3346, 1.0
        %v3365 = vadd.f32 %v3348, 1.0
        %v3366 = vadd.f32 %v3350, 1.0
        %v3367 = vrcp.pop %v3351
        %v3368 = vmul.f32 1.0, %v3367
        %v3369 = vrcp.pop %v3352
        %v3370 = vmul.f32 1.0, %v3369
        %v3371 = vrcp.pop %v3353
        %v3372 = vmul.f32 1.0, %v3371
        %v3373 = vrcp.pop %v3354
        %v3374 = vmul.f32 1.0, %v3373
        %v3375 = vrcp.pop %v3355
        %v3376 = vmul.f32 1.0, %v3375
        %v3377 = vrcp.pop %v3356
        %v3378 = vmul.f32 1.0, %v3377
        %v3379 = vrcp.pop %v3357
        %v3380 = vmul.f32 1.0, %v3379
        %v3381 = vrcp.pop %v3358
        %v3382 = vmul.f32 1.0, %v3381
        %v3383 = vrcp.pop %v3359
        %v3384 = vmul.f32 1.0, %v3383
        %v3385 = vrcp.pop %v3360
        %v3386 = vmul.f32 1.0, %v3385
        %v3387 = vrcp.pop %v3361
        %v3388 = vmul.f32 1.0, %v3387
        %v3389 = vrcp.pop %v3362
        %v3390 = vmul.f32 1.0, %v3389
        %v3391 = vrcp.pop %v3363
        %v3392 = vmul.f32 1.0, %v3391
        %v3393 = vrcp.pop %v3364
        %v3394 = vmul.f32 1.0, %v3393
        %v3395 = vrcp.pop %v3365
        %v3396 = vmul.f32 1.0, %v3395
        %v3397 = vrcp.pop %v3366
        %v3398 = vmul.f32 1.0, %v3397
        %v3399 = vmul.f32 %v3241, %v3368
        %v3400 = vmul.f32 %v3244, %v3370
        %v3401 = vmul.f32 %v3249, %v3372
        %v3402 = vmul.f32 %v3252, %v3374
        %v3403 = vmul.f32 %v3257, %v3376
        %v3404 = vmul.f32 %v3260, %v3378
        %v3405 = vmul.f32 %v3265, %v3380
        %v3406 = vmul.f32 %v3268, %v3382
        %v3407 = vmul.f32 %v3273, %v3384
        %v3408 = vmul.f32 %v3276, %v3386
        %v3409 = vmul.f32 %v3281, %v3388
        %v3410 = vmul.f32 %v3284, %v3390
        %v3411 = vmul.f32 %v3289, %v3392
        %v3412 = vmul.f32 %v3292, %v3394
        %v3413 = vmul.f32 %v3297, %v3396
        %v3414 = vmul.f32 %v3300, %v3398
        %v3415 = vld [vmem:[%s7] sm:$0x1]
        %v3416 = vlaneseq
        %v3417 = vshrl.u32 %v3416, 7
        %v3418 = vsub.s32 0, %v3417
        %v3419 = vrot.slane %v3415, %v3418
        %v3420 = vmul.f32 %v3399, %v3419
        %v3421 = vmul.f32 %v3400, %v3419
        %v3422 = vmul.f32 %v3401, %v3419
        %v3423 = vmul.f32 %v3402, %v3419
        %v3424 = vmul.f32 %v3403, %v3419
        %v3425 = vmul.f32 %v3404, %v3419
        %v3426 = vmul.f32 %v3405, %v3419
        %v3427 = vmul.f32 %v3406, %v3419
        %v3428 = vmul.f32 %v3407, %v3419
        %v3429 = vmul.f32 %v3408, %v3419
        %v3430 = vmul.f32 %v3409, %v3419
        %v3431 = vmul.f32 %v3410, %v3419
        %v3432 = vmul.f32 %v3411, %v3419
        %v3433 = vmul.f32 %v3412, %v3419
        %v3434 = vmul.f32 %v3413, %v3419
        %v3435 = vmul.f32 %v3414, %v3419
        %v3436 = vld [vmem:[%s8] sm:$0x1]
        %v3437 = vlaneseq
        %v3438 = vshrl.u32 %v3437, 7
        %v3439 = vsub.s32 0, %v3438
        %v3440 = vrot.slane %v3436, %v3439
        %v3441 = vadd.f32 %v3420, %v3440
        %v3442 = vadd.f32 %v3421, %v3440
        %v3443 = vadd.f32 %v3422, %v3440
        %v3444 = vadd.f32 %v3423, %v3440
        %v3445 = vadd.f32 %v3424, %v3440
        %v3446 = vadd.f32 %v3425, %v3440
        %v3447 = vadd.f32 %v3426, %v3440
        %v3448 = vadd.f32 %v3427, %v3440
        %v3449 = vadd.f32 %v3428, %v3440
        %v3450 = vadd.f32 %v3429, %v3440
        %v3451 = vadd.f32 %v3430, %v3440
        %v3452 = vadd.f32 %v3431, %v3440
        %v3453 = vadd.f32 %v3432, %v3440
        %v3454 = vadd.f32 %v3433, %v3440
        %v3455 = vadd.f32 %v3434, %v3440
        %v3456 = vadd.f32 %v3435, %v3440
        %v3457 = vmul.f32 %v3441, 0.00390625
        %v3458 = vmul.f32 %v3442, 0.00390625
        %v3459 = vmul.f32 %v3443, 0.00390625
        %v3460 = vmul.f32 %v3444, 0.00390625
        %v3461 = vmul.f32 %v3445, 0.00390625
        %v3462 = vmul.f32 %v3446, 0.00390625
        %v3463 = vmul.f32 %v3447, 0.00390625
        %v3464 = vmul.f32 %v3448, 0.00390625
        %v3465 = vmul.f32 %v3449, 0.00390625
        %v3466 = vmul.f32 %v3450, 0.00390625
        %v3467 = vmul.f32 %v3451, 0.00390625
        %v3468 = vmul.f32 %v3452, 0.00390625
        %v3469 = vmul.f32 %v3453, 0.00390625
        %v3470 = vmul.f32 %v3454, 0.00390625
        %v3471 = vmul.f32 %v3455, 0.00390625
        %v3472 = vmul.f32 %v3456, 0.00390625
        %v3473 = vld [vmem:[%s7 + $0x1] sm:$0x1]
        %v3474 = vlaneseq
        %v3475 = vshrl.u32 %v3474, 7
        %v3476 = vsub.s32 0, %v3475
        %v3477 = vrot.slane %v3473, %v3476
        %v3478 = vmul.f32 %v3399, %v3477
        %v3479 = vmul.f32 %v3400, %v3477
        %v3480 = vmul.f32 %v3401, %v3477
        %v3481 = vmul.f32 %v3402, %v3477
        %v3482 = vmul.f32 %v3403, %v3477
        %v3483 = vmul.f32 %v3404, %v3477
        %v3484 = vmul.f32 %v3405, %v3477
        %v3485 = vmul.f32 %v3406, %v3477
        %v3486 = vmul.f32 %v3407, %v3477
        %v3487 = vmul.f32 %v3408, %v3477
        %v3488 = vmul.f32 %v3409, %v3477
        %v3489 = vmul.f32 %v3410, %v3477
        %v3490 = vmul.f32 %v3411, %v3477
        %v3491 = vmul.f32 %v3412, %v3477
        %v3492 = vmul.f32 %v3413, %v3477
        %v3493 = vmul.f32 %v3414, %v3477
        %v3494 = vld [vmem:[%s8 + $0x1] sm:$0x1]
        %v3495 = vlaneseq
        %v3496 = vshrl.u32 %v3495, 7
        %v3497 = vsub.s32 0, %v3496
        %v3498 = vrot.slane %v3494, %v3497
        %v3499 = vadd.f32 %v3478, %v3498
        %v3500 = vadd.f32 %v3479, %v3498
        %v3501 = vadd.f32 %v3480, %v3498
        %v3502 = vadd.f32 %v3481, %v3498
        %v3503 = vadd.f32 %v3482, %v3498
        %v3504 = vadd.f32 %v3483, %v3498
        %v3505 = vadd.f32 %v3484, %v3498
        %v3506 = vadd.f32 %v3485, %v3498
        %v3507 = vadd.f32 %v3486, %v3498
        %v3508 = vadd.f32 %v3487, %v3498
        %v3509 = vadd.f32 %v3488, %v3498
        %v3510 = vadd.f32 %v3489, %v3498
        %v3511 = vadd.f32 %v3490, %v3498
        %v3512 = vadd.f32 %v3491, %v3498
        %v3513 = vadd.f32 %v3492, %v3498
        %v3514 = vadd.f32 %v3493, %v3498
        %v3515 = vpack.c.bf16 %v3458, %v3457
        %v3516 = vpack.c.bf16 %v3460, %v3459
        %v3517 = vpack.c.bf16 %v3462, %v3461
        %v3518 = vpack.c.bf16 %v3464, %v3463
        %v3519 = vpack.c.bf16 %v3466, %v3465
        %v3520 = vpack.c.bf16 %v3468, %v3467
        %v3521 = vpack.c.bf16 %v3470, %v3469
        %v3522 = vpack.c.bf16 %v3472, %v3471
        %v3531 = vunpack.c.l.b16 %v3515
        %v3532 = vunpack.c.h.b16 %v3515
        %v3533 = vunpack.c.l.b16 %v3516
        %v3534 = vunpack.c.h.b16 %v3516
        %v3535 = vunpack.c.l.b16 %v3517
        %v3536 = vunpack.c.h.b16 %v3517
        %v3537 = vunpack.c.l.b16 %v3518
        %v3538 = vunpack.c.h.b16 %v3518
        %v3539 = vunpack.c.l.b16 %v3519
        %v3540 = vunpack.c.h.b16 %v3519
        %v3541 = vunpack.c.l.b16 %v3520
        %v3542 = vunpack.c.h.b16 %v3520
        %v3543 = vunpack.c.l.b16 %v3521
        %v3544 = vunpack.c.h.b16 %v3521
        %v3545 = vunpack.c.l.b16 %v3522
        %v3546 = vunpack.c.h.b16 %v3522
        %v3547 = vpack.c.b16 %v3531, %v3531
        %v3548 = vpack.c.b16 %v3532, %v3532
        %v3549 = vpack.c.b16 %v3533, %v3533
        %v3550 = vpack.c.b16 %v3534, %v3534
        %v3551 = vpack.c.b16 %v3535, %v3535
        %v3552 = vpack.c.b16 %v3536, %v3536
        %v3553 = vpack.c.b16 %v3537, %v3537
        %v3554 = vpack.c.b16 %v3538, %v3538
        %v3555 = vpack.c.b16 %v3539, %v3539
        %v3556 = vpack.c.b16 %v3540, %v3540
        %v3557 = vpack.c.b16 %v3541, %v3541
        %v3558 = vpack.c.b16 %v3542, %v3542
        %v3559 = vpack.c.b16 %v3543, %v3543
        %v3560 = vpack.c.b16 %v3544, %v3544
        %v3561 = vpack.c.b16 %v3545, %v3545
        %v3562 = vpack.c.b16 %v3546, %v3546
        %3579 = vst [vmem:[%s492] sm:$0xf] %v3547
        %3580 = vst [vmem:[%s492 + $0x4] sm:$0xf] %v3548
        %3581 = vst [vmem:[%s492 + $0x8] sm:$0xf] %v3549
        %3582 = vst [vmem:[%s492 + $0xc] sm:$0xf] %v3550
        %3583 = vst [vmem:[%s492 + $0x10] sm:$0xf] %v3551
        %3584 = vst [vmem:[%s492 + $0x14] sm:$0xf] %v3552
        %3585 = vst [vmem:[%s492 + $0x18] sm:$0xf] %v3553
        %3586 = vst [vmem:[%s492 + $0x1c] sm:$0xf] %v3554
        %3587 = vst [vmem:[%s492 + $0x20] sm:$0xf] %v3555
        %3588 = vst [vmem:[%s492 + $0x24] sm:$0xf] %v3556
        %3589 = vst [vmem:[%s492 + $0x28] sm:$0xf] %v3557
        %3590 = vst [vmem:[%s492 + $0x2c] sm:$0xf] %v3558
        %3591 = vst [vmem:[%s492 + $0x30] sm:$0xf] %v3559
        %3592 = vst [vmem:[%s492 + $0x34] sm:$0xf] %v3560
        %3593 = vst [vmem:[%s492 + $0x38] sm:$0xf] %v3561
        %3594 = vst [vmem:[%s492 + $0x3c] sm:$0xf] %v3562
        %v3595 = vpack.c.bf16 %v3500, %v3499
        %v3596 = vpack.c.bf16 %v3502, %v3501
        %v3597 = vpack.c.bf16 %v3504, %v3503
        %v3598 = vpack.c.bf16 %v3506, %v3505
        %v3599 = vpack.c.bf16 %v3508, %v3507
        %v3600 = vpack.c.bf16 %v3510, %v3509
        %v3601 = vpack.c.bf16 %v3512, %v3511
        %v3602 = vpack.c.bf16 %v3514, %v3513
        %v3611 = vunpack.c.l.b16 %v3595
        %v3612 = vunpack.c.h.b16 %v3595
        %v3613 = vunpack.c.l.b16 %v3596
        %v3614 = vunpack.c.h.b16 %v3596
        %v3615 = vunpack.c.l.b16 %v3597
        %v3616 = vunpack.c.h.b16 %v3597
        %v3617 = vunpack.c.l.b16 %v3598
        %v3618 = vunpack.c.h.b16 %v3598
        %v3619 = vunpack.c.l.b16 %v3599
        %v3620 = vunpack.c.h.b16 %v3599
        %v3621 = vunpack.c.l.b16 %v3600
        %v3622 = vunpack.c.h.b16 %v3600
        %v3623 = vunpack.c.l.b16 %v3601
        %v3624 = vunpack.c.h.b16 %v3601
        %v3625 = vunpack.c.l.b16 %v3602
        %v3626 = vunpack.c.h.b16 %v3602
        %v3627 = vpack.c.b16 %v3611, %v3611
        %v3628 = vpack.c.b16 %v3612, %v3612
        %v3629 = vpack.c.b16 %v3613, %v3613
        %v3630 = vpack.c.b16 %v3614, %v3614
        %v3631 = vpack.c.b16 %v3615, %v3615
        %v3632 = vpack.c.b16 %v3616, %v3616
        %v3633 = vpack.c.b16 %v3617, %v3617
        %v3634 = vpack.c.b16 %v3618, %v3618
        %v3635 = vpack.c.b16 %v3619, %v3619
        %v3636 = vpack.c.b16 %v3620, %v3620
        %v3637 = vpack.c.b16 %v3621, %v3621
        %v3638 = vpack.c.b16 %v3622, %v3622
        %v3639 = vpack.c.b16 %v3623, %v3623
        %v3640 = vpack.c.b16 %v3624, %v3624
        %v3641 = vpack.c.b16 %v3625, %v3625
        %v3642 = vpack.c.b16 %v3626, %v3626
        %3659 = vst [vmem:[%s499] sm:$0xf] %v3627
        %3660 = vst [vmem:[%s499 + $0x4] sm:$0xf] %v3628
        %3661 = vst [vmem:[%s499 + $0x8] sm:$0xf] %v3629
        %3662 = vst [vmem:[%s499 + $0xc] sm:$0xf] %v3630
        %3663 = vst [vmem:[%s499 + $0x10] sm:$0xf] %v3631
        %3664 = vst [vmem:[%s499 + $0x14] sm:$0xf] %v3632
        %3665 = vst [vmem:[%s499 + $0x18] sm:$0xf] %v3633
        %3666 = vst [vmem:[%s499 + $0x1c] sm:$0xf] %v3634
        %3667 = vst [vmem:[%s499 + $0x20] sm:$0xf] %v3635
        %3668 = vst [vmem:[%s499 + $0x24] sm:$0xf] %v3636
        %3669 = vst [vmem:[%s499 + $0x28] sm:$0xf] %v3637
        %3670 = vst [vmem:[%s499 + $0x2c] sm:$0xf] %v3638
        %3671 = vst [vmem:[%s499 + $0x30] sm:$0xf] %v3639
        %3672 = vst [vmem:[%s499 + $0x34] sm:$0xf] %v3640
        %3673 = vst [vmem:[%s499 + $0x38] sm:$0xf] %v3641
        %3674 = vst [vmem:[%s499 + $0x3c] sm:$0xf] %v3642
        %v3675 = vpack.c.bf16 %v2951, %v2943
        %v3676 = vpack.c.bf16 %v2952, %v2944
        %v3677 = vpack.c.bf16 %v2953, %v2945
        %v3678 = vpack.c.bf16 %v2954, %v2946
        %v3679 = vpack.c.bf16 %v2967, %v2959
        %v3680 = vpack.c.bf16 %v2968, %v2960
        %v3681 = vpack.c.bf16 %v2969, %v2961
        %v3682 = vpack.c.bf16 %v2970, %v2962
        %v3683 = vpack.c.bf16 %v2983, %v2975
        %v3684 = vpack.c.bf16 %v2984, %v2976
        %v3685 = vpack.c.bf16 %v2985, %v2977
        %v3686 = vpack.c.bf16 %v2986, %v2978
        %v3687 = vpack.c.bf16 %v2999, %v2991
        %v3688 = vpack.c.bf16 %v3000, %v2992
        %v3689 = vpack.c.bf16 %v3001, %v2993
        %v3690 = vpack.c.bf16 %v3002, %v2994
        %v3691 = vpack.c.bf16 %v3015, %v3007
        %v3692 = vpack.c.bf16 %v3016, %v3008
        %v3693 = vpack.c.bf16 %v3017, %v3009
        %v3694 = vpack.c.bf16 %v3018, %v3010
        %v3695 = vpack.c.bf16 %v3031, %v3023
        %v3696 = vpack.c.bf16 %v3032, %v3024
        %v3697 = vpack.c.bf16 %v3033, %v3025
        %v3698 = vpack.c.bf16 %v3034, %v3026
        %v3699 = vpack.c.bf16 %v3047, %v3039
        %v3700 = vpack.c.bf16 %v3048, %v3040
        %v3701 = vpack.c.bf16 %v3049, %v3041
        %v3702 = vpack.c.bf16 %v3050, %v3042
        %v3703 = vpack.c.bf16 %v3063, %v3055
        %v3704 = vpack.c.bf16 %v3064, %v3056
        %v3705 = vpack.c.bf16 %v3065, %v3057
        %v3706 = vpack.c.bf16 %v3066, %v3058
        %v3739 = vunpack.c.l.b16 %v3675
        %v3740 = vunpack.c.l.b16 %v3676
        %v3741 = vunpack.c.l.b16 %v3677
        %v3742 = vunpack.c.l.b16 %v3678
        %v3743 = vunpack.c.h.b16 %v3675
        %v3744 = vunpack.c.h.b16 %v3676
        %v3745 = vunpack.c.h.b16 %v3677
        %v3746 = vunpack.c.h.b16 %v3678
        %v3747 = vunpack.c.l.b16 %v3679
        %v3748 = vunpack.c.l.b16 %v3680
        %v3749 = vunpack.c.l.b16 %v3681
        %v3750 = vunpack.c.l.b16 %v3682
        %v3751 = vunpack.c.h.b16 %v3679
        %v3752 = vunpack.c.h.b16 %v3680
        %v3753 = vunpack.c.h.b16 %v3681
        %v3754 = vunpack.c.h.b16 %v3682
        %v3755 = vunpack.c.l.b16 %v3683
        %v3756 = vunpack.c.l.b16 %v3684
        %v3757 = vunpack.c.l.b16 %v3685
        %v3758 = vunpack.c.l.b16 %v3686
        %v3759 = vunpack.c.h.b16 %v3683
        %v3760 = vunpack.c.h.b16 %v3684
        %v3761 = vunpack.c.h.b16 %v3685
        %v3762 = vunpack.c.h.b16 %v3686
        %v3763 = vunpack.c.l.b16 %v3687
        %v3764 = vunpack.c.l.b16 %v3688
        %v3765 = vunpack.c.l.b16 %v3689
        %v3766 = vunpack.c.l.b16 %v3690
        %v3767 = vunpack.c.h.b16 %v3687
        %v3768 = vunpack.c.h.b16 %v3688
        %v3769 = vunpack.c.h.b16 %v3689
        %v3770 = vunpack.c.h.b16 %v3690
        %v3771 = vunpack.c.l.b16 %v3691
        %v3772 = vunpack.c.l.b16 %v3692
        %v3773 = vunpack.c.l.b16 %v3693
        %v3774 = vunpack.c.l.b16 %v3694
        %v3775 = vunpack.c.h.b16 %v3691
        %v3776 = vunpack.c.h.b16 %v3692
        %v3777 = vunpack.c.h.b16 %v3693
        %v3778 = vunpack.c.h.b16 %v3694
        %v3779 = vunpack.c.l.b16 %v3695
        %v3780 = vunpack.c.l.b16 %v3696
        %v3781 = vunpack.c.l.b16 %v3697
        %v3782 = vunpack.c.l.b16 %v3698
        %v3783 = vunpack.c.h.b16 %v3695
        %v3784 = vunpack.c.h.b16 %v3696
        %v3785 = vunpack.c.h.b16 %v3697
        %v3786 = vunpack.c.h.b16 %v3698
        %v3787 = vunpack.c.l.b16 %v3699
        %v3788 = vunpack.c.l.b16 %v3700
        %v3789 = vunpack.c.l.b16 %v3701
        %v3790 = vunpack.c.l.b16 %v3702
        %v3791 = vunpack.c.h.b16 %v3699
        %v3792 = vunpack.c.h.b16 %v3700
        %v3793 = vunpack.c.h.b16 %v3701
        %v3794 = vunpack.c.h.b16 %v3702
        %v3795 = vunpack.c.l.b16 %v3703
        %v3796 = vunpack.c.l.b16 %v3704
        %v3797 = vunpack.c.l.b16 %v3705
        %v3798 = vunpack.c.l.b16 %v3706
        %v3799 = vunpack.c.h.b16 %v3703
        %v3800 = vunpack.c.h.b16 %v3704
        %v3801 = vunpack.c.h.b16 %v3705
        %v3802 = vunpack.c.h.b16 %v3706
        %v3803 = vpack.c.b16 %v3740, %v3739
        %v3804 = vpack.c.b16 %v3742, %v3741
        %v3805 = vpack.c.b16 %v3744, %v3743
        %v3806 = vpack.c.b16 %v3746, %v3745
        %v3807 = vpack.c.b16 %v3748, %v3747
        %v3808 = vpack.c.b16 %v3750, %v3749
        %v3809 = vpack.c.b16 %v3752, %v3751
        %v3810 = vpack.c.b16 %v3754, %v3753
        %v3811 = vpack.c.b16 %v3756, %v3755
        %v3812 = vpack.c.b16 %v3758, %v3757
        %v3813 = vpack.c.b16 %v3760, %v3759
        %v3814 = vpack.c.b16 %v3762, %v3761
        %v3815 = vpack.c.b16 %v3764, %v3763
        %v3816 = vpack.c.b16 %v3766, %v3765
        %v3817 = vpack.c.b16 %v3768, %v3767
        %v3818 = vpack.c.b16 %v3770, %v3769
        %v3819 = vpack.c.b16 %v3772, %v3771
        %v3820 = vpack.c.b16 %v3774, %v3773
        %v3821 = vpack.c.b16 %v3776, %v3775
        %v3822 = vpack.c.b16 %v3778, %v3777
        %v3823 = vpack.c.b16 %v3780, %v3779
        %v3824 = vpack.c.b16 %v3782, %v3781
        %v3825 = vpack.c.b16 %v3784, %v3783
        %v3826 = vpack.c.b16 %v3786, %v3785
        %v3827 = vpack.c.b16 %v3788, %v3787
        %v3828 = vpack.c.b16 %v3790, %v3789
        %v3829 = vpack.c.b16 %v3792, %v3791
        %v3830 = vpack.c.b16 %v3794, %v3793
        %v3831 = vpack.c.b16 %v3796, %v3795
        %v3832 = vpack.c.b16 %v3798, %v3797
        %v3833 = vpack.c.b16 %v3800, %v3799
        %v3834 = vpack.c.b16 %v3802, %v3801
        %3867 = vst [vmem:[%s506] sm:$0xff] %v3803
        %3868 = vst [vmem:[%s506 + $0x8] sm:$0xff] %v3804
        %3869 = vst [vmem:[%s506 + $0x10] sm:$0xff] %v3805
        %3870 = vst [vmem:[%s506 + $0x18] sm:$0xff] %v3806
        %3871 = vst [vmem:[%s506 + $0x20] sm:$0xff] %v3807
        %3872 = vst [vmem:[%s506 + $0x28] sm:$0xff] %v3808
        %3873 = vst [vmem:[%s506 + $0x30] sm:$0xff] %v3809
        %3874 = vst [vmem:[%s506 + $0x38] sm:$0xff] %v3810
        %3875 = vst [vmem:[%s506 + $0x40] sm:$0xff] %v3811
        %3876 = vst [vmem:[%s506 + $0x48] sm:$0xff] %v3812
        %3877 = vst [vmem:[%s506 + $0x50] sm:$0xff] %v3813
        %3878 = vst [vmem:[%s506 + $0x58] sm:$0xff] %v3814
        %3879 = vst [vmem:[%s506 + $0x60] sm:$0xff] %v3815
        %3880 = vst [vmem:[%s506 + $0x68] sm:$0xff] %v3816
        %3881 = vst [vmem:[%s506 + $0x70] sm:$0xff] %v3817
        %3882 = vst [vmem:[%s506 + $0x78] sm:$0xff] %v3818
        %3883 = vst [vmem:[%s506 + $0x80] sm:$0xff] %v3819
        %3884 = vst [vmem:[%s506 + $0x88] sm:$0xff] %v3820
        %3885 = vst [vmem:[%s506 + $0x90] sm:$0xff] %v3821
        %3886 = vst [vmem:[%s506 + $0x98] sm:$0xff] %v3822
        %3887 = vst [vmem:[%s506 + $0xa0] sm:$0xff] %v3823
        %3888 = vst [vmem:[%s506 + $0xa8] sm:$0xff] %v3824
        %3889 = vst [vmem:[%s506 + $0xb0] sm:$0xff] %v3825
        %3890 = vst [vmem:[%s506 + $0xb8] sm:$0xff] %v3826
        %3891 = vst [vmem:[%s506 + $0xc0] sm:$0xff] %v3827
        %3892 = vst [vmem:[%s506 + $0xc8] sm:$0xff] %v3828
        %3893 = vst [vmem:[%s506 + $0xd0] sm:$0xff] %v3829
        %3894 = vst [vmem:[%s506 + $0xd8] sm:$0xff] %v3830
        %3895 = vst [vmem:[%s506 + $0xe0] sm:$0xff] %v3831
        %3896 = vst [vmem:[%s506 + $0xe8] sm:$0xff] %v3832
        %3897 = vst [vmem:[%s506 + $0xf0] sm:$0xff] %v3833
        %3898 = vst [vmem:[%s506 + $0xf8] sm:$0xff] %v3834
        %3899 = vst [vmem:[%s513] sm:$0xff] %v2947
        %3900 = vst [vmem:[%s513 + $0x8] sm:$0xff] %v2948
        %3901 = vst [vmem:[%s513 + $0x10] sm:$0xff] %v2949
        %3902 = vst [vmem:[%s513 + $0x18] sm:$0xff] %v2950
        %3903 = vst [vmem:[%s513 + $0x20] sm:$0xff] %v2955
        %3904 = vst [vmem:[%s513 + $0x28] sm:$0xff] %v2956
        %3905 = vst [vmem:[%s513 + $0x30] sm:$0xff] %v2957
        %3906 = vst [vmem:[%s513 + $0x38] sm:$0xff] %v2958
        %3907 = vst [vmem:[%s513 + $0x40] sm:$0xff] %v2963
        %3908 = vst [vmem:[%s513 + $0x48] sm:$0xff] %v2964
        %3909 = vst [vmem:[%s513 + $0x50] sm:$0xff] %v2965
        %3910 = vst [vmem:[%s513 + $0x58] sm:$0xff] %v2966
        %3911 = vst [vmem:[%s513 + $0x60] sm:$0xff] %v2971
        %3912 = vst [vmem:[%s513 + $0x68] sm:$0xff] %v2972
        %3913 = vst [vmem:[%s513 + $0x70] sm:$0xff] %v2973
        %3914 = vst [vmem:[%s513 + $0x78] sm:$0xff] %v2974
        %3915 = vst [vmem:[%s513 + $0x80] sm:$0xff] %v2979
        %3916 = vst [vmem:[%s513 + $0x88] sm:$0xff] %v2980
        %3917 = vst [vmem:[%s513 + $0x90] sm:$0xff] %v2981
        %3918 = vst [vmem:[%s513 + $0x98] sm:$0xff] %v2982
        %3919 = vst [vmem:[%s513 + $0xa0] sm:$0xff] %v2987
        %3920 = vst [vmem:[%s513 + $0xa8] sm:$0xff] %v2988
        %3921 = vst [vmem:[%s513 + $0xb0] sm:$0xff] %v2989
        %3922 = vst [vmem:[%s513 + $0xb8] sm:$0xff] %v2990
        %3923 = vst [vmem:[%s513 + $0xc0] sm:$0xff] %v2995
        %3924 = vst [vmem:[%s513 + $0xc8] sm:$0xff] %v2996
        %3925 = vst [vmem:[%s513 + $0xd0] sm:$0xff] %v2997
        %3926 = vst [vmem:[%s513 + $0xd8] sm:$0xff] %v2998
        %3927 = vst [vmem:[%s513 + $0xe0] sm:$0xff] %v3003
        %3928 = vst [vmem:[%s513 + $0xe8] sm:$0xff] %v3004
        %3929 = vst [vmem:[%s513 + $0xf0] sm:$0xff] %v3005
        %3930 = vst [vmem:[%s513 + $0xf8] sm:$0xff] %v3006
        %3931 = vst [vmem:[%s513 + $0x100] sm:$0xff] %v3011
        %3932 = vst [vmem:[%s513 + $0x108] sm:$0xff] %v3012
        %3933 = vst [vmem:[%s513 + $0x110] sm:$0xff] %v3013
        %3934 = vst [vmem:[%s513 + $0x118] sm:$0xff] %v3014
        %3935 = vst [vmem:[%s513 + $0x120] sm:$0xff] %v3019
        %3936 = vst [vmem:[%s513 + $0x128] sm:$0xff] %v3020
        %3937 = vst [vmem:[%s513 + $0x130] sm:$0xff] %v3021
        %3938 = vst [vmem:[%s513 + $0x138] sm:$0xff] %v3022
        %3939 = vst [vmem:[%s513 + $0x140] sm:$0xff] %v3027
        %3940 = vst [vmem:[%s513 + $0x148] sm:$0xff] %v3028
        %3941 = vst [vmem:[%s513 + $0x150] sm:$0xff] %v3029
        %3942 = vst [vmem:[%s513 + $0x158] sm:$0xff] %v3030
        %3943 = vst [vmem:[%s513 + $0x160] sm:$0xff] %v3035
        %3944 = vst [vmem:[%s513 + $0x168] sm:$0xff] %v3036
        %3945 = vst [vmem:[%s513 + $0x170] sm:$0xff] %v3037
        %3946 = vst [vmem:[%s513 + $0x178] sm:$0xff] %v3038
        %3947 = vst [vmem:[%s513 + $0x180] sm:$0xff] %v3043
        %3948 = vst [vmem:[%s513 + $0x188] sm:$0xff] %v3044
        %3949 = vst [vmem:[%s513 + $0x190] sm:$0xff] %v3045
        %3950 = vst [vmem:[%s513 + $0x198] sm:$0xff] %v3046
        %3951 = vst [vmem:[%s513 + $0x1a0] sm:$0xff] %v3051
        %3952 = vst [vmem:[%s513 + $0x1a8] sm:$0xff] %v3052
        %3953 = vst [vmem:[%s513 + $0x1b0] sm:$0xff] %v3053
        %3954 = vst [vmem:[%s513 + $0x1b8] sm:$0xff] %v3054
        %3955 = vst [vmem:[%s513 + $0x1c0] sm:$0xff] %v3059
        %3956 = vst [vmem:[%s513 + $0x1c8] sm:$0xff] %v3060
        %3957 = vst [vmem:[%s513 + $0x1d0] sm:$0xff] %v3061
        %3958 = vst [vmem:[%s513 + $0x1d8] sm:$0xff] %v3062
        %3959 = vst [vmem:[%s513 + $0x1e0] sm:$0xff] %v3067
        %3960 = vst [vmem:[%s513 + $0x1e8] sm:$0xff] %v3068
        %3961 = vst [vmem:[%s513 + $0x1f0] sm:$0xff] %v3069
        %3962 = vst [vmem:[%s513 + $0x1f8] sm:$0xff] %v3070
        %s3963 = sand.u32 %s255, 1
        %s3964 = scalar_lea.sflag [#allocation4], %s3963
        %s3965 = sand.u32 %s255, 1
        %s3966 = smul.addr %s3965, 64
        %s3967 = scalar_lea.vmem [#allocation8], %s3966
        %s3968 = sand.u32 %s37, 1
        %s3969 = scalar_lea.sflag [#allocation10], %s3968
        %s3970 = sand.u32 %s283, 1
        %s3971 = smul.addr %s3970, 64
        %s3972 = scalar_lea.vmem [#allocation9], %s3971
        %s3973 = sand.u32 %s37, 1
        %s3974 = scalar_lea.sflag [#allocation10], %s3973
        %s3975 = sand.u32 %s311, 1
        %s3976 = smul.addr %s3975, 256
        %s3977 = scalar_lea.vmem [#allocation11], %s3976
        %s3978 = sand.u32 %s339, 1
        %s3979 = scalar_lea.sflag [#allocation13], %s3978
        %s3980 = sand.u32 %s339, 1
        %s3981 = smul.addr %s3980, 512
        %s3982 = scalar_lea.vmem [#allocation12], %s3981
        // Predicated region
        $region69: #{tpu_custom_call.1} parent=55 // pred_check
          %p3983 = pneg %p265
        $region70: #{tpu_custom_call.1} parent=55 // pred_check_branch
          %3985 = sbr.rel (%p3983) target = $region72
        $region71: #{tpu_custom_call.1} parent=55 // pred_region
          %s3986 = smul.u32 16, %s42
          %s3988 = ssub.s32 1024, 1024
          %3989 = vsyncadd %s3964, %s3988
          %s3990 = smul.addr %s41, 32
          %s3991 = sadd.s32 %s3986, %s3990
          %s3992 = smul.addr %s3991, 64
          %s3993 = scalar_lea.hbm %s9, %s3992
          %s3994 = sshll.u32 %s3967, 4
          %s3995 = int_to_ptr.vmem [resolvable:$true] %s3994
          %4000 = dma.vmem_to_hbm [thread:$0]  %s3995, 1024, %s3993, %s3964, 64, 64, 4
        $region72: #{tpu_custom_call.1} parent=55 // pred_fallthru
          _
        // Predicated region
        $region73: #{tpu_custom_call.1} parent=55 // pred_check
          %p4001 = pneg %p293
        $region74: #{tpu_custom_call.1} parent=55 // pred_check_branch
          %4003 = sbr.rel (%p4001) target = $region76
        $region75: #{tpu_custom_call.1} parent=55 // pred_region
          %s4004 = smul.u32 16, %s42
          %s4006 = ssub.s32 1024, 1024
          %4007 = vsyncadd %s3969, %s4006
          %s4008 = smul.addr %s41, 32
          %s4009 = sadd.s32 %s4004, %s4008
          %s4010 = smul.addr %s4009, 64
          %s4011 = scalar_lea.hbm %s10, %s4010
          %s4012 = sshll.u32 %s3972, 4
          %s4013 = int_to_ptr.vmem [resolvable:$true] %s4012
          %4018 = dma.vmem_to_hbm [thread:$0]  %s4013, 1024, %s4011, %s3969, 64, 64, 4
        $region76: #{tpu_custom_call.1} parent=55 // pred_fallthru
          _
        // Predicated region
        $region77: #{tpu_custom_call.1} parent=55 // pred_check
          %p4019 = pneg %p321
        $region78: #{tpu_custom_call.1} parent=55 // pred_check_branch
          %4021 = sbr.rel (%p4019) target = $region80
        $region79: #{tpu_custom_call.1} parent=55 // pred_region
          %s4022 = smul.u32 16, %s42
          %s4024 = ssub.s32 4096, 4096
          %4025 = vsyncadd %s3974, %s4024
          %s4026 = smul.addr %s4022, 4
          %s4027 = smul.addr %s41, 128
          %s4028 = sadd.s32 %s4026, %s4027
          %s4029 = smul.addr %s4028, 64
          %s4030 = scalar_lea.hbm %s11, %s4029
          %s4031 = sshll.u32 %s3977, 4
          %s4032 = int_to_ptr.vmem [resolvable:$true] %s4031
          %4037 = dma.vmem_to_hbm [thread:$0]  %s4032, 4096, %s4030, %s3974, 256, 256, 16
        $region80: #{tpu_custom_call.1} parent=55 // pred_fallthru
          _
        // Predicated region
        $region81: #{tpu_custom_call.1} parent=55 // pred_check
          %p4038 = pneg %p349
        $region82: #{tpu_custom_call.1} parent=55 // pred_check_branch
          %4040 = sbr.rel (%p4038) target = $region84
        $region83: #{tpu_custom_call.1} parent=55 // pred_region
          %s4041 = smul.u32 16, %s42
          %s4043 = ssub.s32 8192, 8192
          %4044 = vsyncadd %s3979, %s4043
          %s4045 = smul.addr %s4041, 4
          %s4046 = smul.addr %s41, 128
          %s4047 = sadd.s32 %s4045, %s4046
          %s4048 = smul.addr %s4047, 128
          %s4049 = scalar_lea.hbm %s12, %s4048
          %s4050 = sshll.u32 %s3982, 4
          %s4051 = int_to_ptr.vmem [resolvable:$true] %s4050
          %4056 = dma.vmem_to_hbm [thread:$0]  %s4051, 8192, %s4049, %s3979, 512, 512, 32
        $region84: #{tpu_custom_call.1} parent=55 // pred_fallthru
          _
      $region56: #{tpu_custom_call.1} parent=5 // pred_fallthru
        _
      %p4057 = scmp.le.s32.totalorder 2, %s32
      // Predicated region
      $region85: #{tpu_custom_call.1} parent=5 // pred_check
        %p4058 = pneg %p4057
      $region86: #{tpu_custom_call.1} parent=5 // pred_check_branch
        %4060 = sbr.rel (%p4058) target = $region88
      $region87: #{tpu_custom_call.1} parent=5 // pred_region
        %s4061 = ssub.s32 %s32, 2
        // Predicated region
        $region89: #{tpu_custom_call.1} parent=87 // pred_check
          %p4062 = pneg %p271
        $region90: #{tpu_custom_call.1} parent=87 // pred_check_branch
          %4064 = sbr.rel (%p4062) target = $region92
        $region91: #{tpu_custom_call.1} parent=87 // pred_region
          %s4065 = sand.u32 %s256, 1
          %s4066 = scalar_lea.sflag [#allocation4], %s4065
          %s4067 = sand.u32 %s256, 1
          %s4068 = smul.addr %s4067, 64
          %s4069 = scalar_lea.vmem [#allocation8], %s4068
          %4070 = dma.done %s4066, 1024
        $region92: #{tpu_custom_call.1} parent=87 // pred_fallthru
          _
        // Predicated region
        $region93: #{tpu_custom_call.1} parent=87 // pred_check
          %p4071 = pneg %p299
        $region94: #{tpu_custom_call.1} parent=87 // pred_check_branch
          %4073 = sbr.rel (%p4071) target = $region96
        $region95: #{tpu_custom_call.1} parent=87 // pred_region
          %s4074 = sand.u32 %s38, 1
          %s4075 = scalar_lea.sflag [#allocation10], %s4074
          %s4076 = sand.u32 %s284, 1
          %s4077 = smul.addr %s4076, 64
          %s4078 = scalar_lea.vmem [#allocation9], %s4077
          %4079 = dma.done %s4075, 1024
        $region96: #{tpu_custom_call.1} parent=87 // pred_fallthru
          _
        // Predicated region
        $region97: #{tpu_custom_call.1} parent=87 // pred_check
          %p4080 = pneg %p327
        $region98: #{tpu_custom_call.1} parent=87 // pred_check_branch
          %4082 = sbr.rel (%p4080) target = $region100
        $region99: #{tpu_custom_call.1} parent=87 // pred_region
          %s4083 = sand.u32 %s38, 1
          %s4084 = scalar_lea.sflag [#allocation10], %s4083
          %s4085 = sand.u32 %s312, 1
          %s4086 = smul.addr %s4085, 256
          %s4087 = scalar_lea.vmem [#allocation11], %s4086
          %4088 = dma.done %s4084, 4096
        $region100: #{tpu_custom_call.1} parent=87 // pred_fallthru
          _
        // Predicated region
        $region101: #{tpu_custom_call.1} parent=87 // pred_check
          %p4089 = pneg %p355
        $region102: #{tpu_custom_call.1} parent=87 // pred_check_branch
          %4091 = sbr.rel (%p4089) target = $region104
        $region103: #{tpu_custom_call.1} parent=87 // pred_region
          %s4092 = sand.u32 %s340, 1
          %s4093 = scalar_lea.sflag [#allocation13], %s4092
          %s4094 = sand.u32 %s340, 1
          %s4095 = smul.addr %s4094, 512
          %s4096 = scalar_lea.vmem [#allocation12], %s4095
          %4097 = dma.done %s4093, 8192
        $region104: #{tpu_custom_call.1} parent=87 // pred_fallthru
          _
      $region88: #{tpu_custom_call.1} parent=5 // pred_fallthru
        _
    $region6: #{tpu_custom_call.1} parent=1 // loop_footer
      %s36 = sadd.s32 1, %s32
    $region7: #{tpu_custom_call.1} parent=1 // loop_footer_branch
      %31 = sbr.rel target = $region3
    $region8: #{tpu_custom_call.1} parent=1 // loop_exit
      _
    %4098 = vsyncpa [#allocation3], 1
    %s4099 = scalar_lea.sflag [#allocation3], 1
    %4100 = vsyncpa %s4099, 1
    %4101 = vsyncpa [#allocation6], 1
    %4102 = vsyncpa [#allocation4], 1
    %s4103 = scalar_lea.sflag [#allocation4], 1
    %4104 = vsyncpa %s4103, 1
    %4105 = vsyncpa [#allocation10], 1
    %s4106 = scalar_lea.sflag [#allocation10], 1
    %4107 = vsyncpa %s4106, 1
    %4108 = vsyncpa [#allocation13], 1
    %s4109 = scalar_lea.sflag [#allocation13], 1
    %4110 = vsyncpa %s4109, 1

</llo_original>
